<compile_context>
chip_gen: v7x
topology: tpu7x:2x2x1
jax: 0.10.0
libtpu: 0.0.40
codegen_flags: <defaults>
</compile_context>

<pallas_src>
import math
import functools
import numpy as np
import jax
import jax.numpy as jnp
from jax import lax
from jax.experimental import pallas as pl
from jax.experimental.pallas import tpu as pltpu

EPS = 1e-6


# ---------------------------------------------------------------------------
# in-kernel helpers
# ---------------------------------------------------------------------------
def _norm(z, alpha, beta, eps):
    # Matches the PyTorch `Norm` module: unbiased std, eps added to the std.
    d = z.shape[-1]
    mean = jnp.mean(z, axis=-1, keepdims=True)
    cz = z - mean
    var = jnp.sum(cz * cz, axis=-1, keepdims=True) * (1.0 / (d - 1))
    std = jnp.sqrt(var)
    return alpha * cz / (std + eps) + beta


def _vtile(a, n):
    # Tile along the sublane (row) axis via concat (no reshapes needed).
    return jnp.concatenate([a] * n, axis=0) if n > 1 else a


# ---------------------------------------------------------------------------
# fused encoder kernel: PE + N layers + final norm
# processes a (local_batch * S, D) slab of rows per grid step
# ---------------------------------------------------------------------------
def encoder_kernel(x_ref, pe_ref, hmask_ref,
                   a1_ref, g1_ref, wqkv_ref, bqkv_ref, wo_ref, bo_ref,
                   a2_ref, g2_ref, w1_ref, c1_ref, w2_ref, c2_ref,
                   af_ref, gf_ref, o_ref,
                   *, n_layers, heads, d_k, seq_len, local_batch, scale, eps):
    S = seq_len
    D = heads * d_k
    inv_sqrt_dk = 1.0 / math.sqrt(d_k)

    hmask = hmask_ref[...]                                   # (H*S, D) block-diag head mask

    # --- positional encoding ---
    x = x_ref[...] * scale + pe_ref[...]                     # (Bl*S, D)

    for l in range(n_layers):                                # static unrolled
        # ---- sublayer 1: pre-norm + multi-head self-attention + residual ----
        x2 = _norm(x, a1_ref[l], g1_ref[l], eps)
        qkv = jnp.dot(x2, wqkv_ref[l],
                      preferred_element_type=jnp.float32) + bqkv_ref[l]
        q = qkv[:, 0 * D:1 * D]
        k = qkv[:, 1 * D:2 * D]
        v = qkv[:, 2 * D:3 * D]

        outs = []
        for b in range(local_batch):                         # static unrolled (<=2)
            r0 = b * S
            q_b = q[r0:r0 + S, :]                            # (S, D)
            # Block-packed K and V: row h*S+j carries head h of token j only.
            k_big = _vtile(k[r0:r0 + S, :], heads) * hmask   # (H*S, D)
            v_big = _vtile(v[r0:r0 + S, :], heads) * hmask   # (H*S, D)
            # All head scores in ONE matmul (contract over D, rhs transposed).
            s_all = lax.dot_general(
                q_b, k_big, (((1,), (1,)), ((), ())),
                preferred_element_type=jnp.float32) * inv_sqrt_dk   # (S, H*S)
            # Segmented softmax over each head's S-wide column block (VPU/EUP only).
            blocks = []
            for h in range(heads):                           # no MXU ops inside
                blk = s_all[:, h * S:(h + 1) * S]
                blk = blk - jnp.max(blk, axis=-1, keepdims=True)
                e = jnp.exp(blk)
                blocks.append(e / jnp.sum(e, axis=-1, keepdims=True))
            p_all = jnp.concatenate(blocks, axis=-1)         # (S, H*S)
            # ONE matmul yields the concatenated head outputs (block-diag V).
            outs.append(jnp.dot(p_all, v_big,
                                preferred_element_type=jnp.float32))  # (S, D)
        concat = outs[0] if local_batch == 1 else jnp.concatenate(outs, axis=0)
        # Single output projection for the whole slab.
        x = x + jnp.dot(concat, wo_ref[l],
                        preferred_element_type=jnp.float32) + bo_ref[l]

        # ---- sublayer 2: pre-norm + feed-forward + residual ----
        x2 = _norm(x, a2_ref[l], g2_ref[l], eps)
        h1 = jnp.dot(x2, w1_ref[l], preferred_element_type=jnp.float32) + c1_ref[l]
        h1 = jnp.maximum(h1, 0.0)                            # ReLU
        x = x + jnp.dot(h1, w2_ref[l], preferred_element_type=jnp.float32) + c2_ref[l]

    # ---- final norm ----
    o_ref[...] = _norm(x, af_ref[...], gf_ref[...], eps).astype(o_ref.dtype)


# ---------------------------------------------------------------------------
# pallas_call wrapper (single fused call)
# ---------------------------------------------------------------------------
def _full_spec(arr):
    n = arr.ndim
    return pl.BlockSpec(arr.shape, lambda g, _n=n: (0,) * _n)


def _grid_steps(batch):
    # v7x exposes 2 TensorCores per chip -> keep a 2-way "parallel" batch split.
    # Single-TC chips (v5e / v6e) do best with one fused grid step.
    try:
        kind = jax.devices()[0].device_kind.lower()
    except Exception:
        kind = ""
    if "7" in kind and batch >= 2 and batch % 2 == 0:
        return 2
    return 1


def encoder_forward(x, pe_table, params, heads):
    # TODO(synk): dropout is a no-op here because Encoder is built with dropout=None.
    B, S, D = x.shape
    d_k = D // heads
    n_layers = params["wqkv"].shape[0]
    G = _grid_steps(B)
    Bl = B // G                                              # batch elements per grid step

    # Flatten (B, S, D) -> (B*S, D) outside the kernel (free XLA reshape) so the
    # row-wise norm/projection/FF matmuls run on Bl*S rows per step.
    x_flat = x.reshape(B * S, D)
    pe_block = jnp.tile(pe_table[:S], (Bl, 1))               # (Bl*S, D)

    # Block-diagonal head mask: row h*S+j belongs to head h, column d to head d//d_k.
    rows = np.arange(heads * S, dtype=np.int32)[:, None] // S
    cols = np.arange(D, dtype=np.int32)[None, :] // d_k
    head_mask = jnp.asarray((rows == cols).astype(np.float32))  # (H*S, D)

    plist = [params[k] for k in ("alpha1", "beta1", "wqkv", "bqkv", "wo", "bo",
                                 "alpha2", "beta2", "w1", "c1", "w2", "c2",
                                 "alpha_f", "beta_f")]

    kernel = functools.partial(encoder_kernel, n_layers=n_layers, heads=heads,
                               d_k=d_k, seq_len=S, local_batch=Bl,
                               scale=math.sqrt(D), eps=EPS)

    out_flat = pl.pallas_call(
        kernel,
        out_shape=jax.ShapeDtypeStruct((B * S, D), x.dtype),
        grid=(G,),
        in_specs=[pl.BlockSpec((Bl * S, D), lambda g: (g, 0)),
                  _full_spec(pe_block), _full_spec(head_mask)]
                 + [_full_spec(a) for a in plist],
        out_specs=pl.BlockSpec((Bl * S, D), lambda g: (g, 0)),
        compiler_params=pltpu.CompilerParams(
            dimension_semantics=("parallel",)),
    )(x_flat, pe_block, head_mask, *plist)
    return out_flat.reshape(B, S, D)


# ---------------------------------------------------------------------------
# deterministic parameter init + positional-encoding table
# ---------------------------------------------------------------------------
def make_pe_table(max_seq_len, d_model):
    # Exact formula from PositionalEncoder.__init__
    pe = np.zeros((max_seq_len, d_model), dtype=np.float32)
    pos = np.arange(max_seq_len, dtype=np.float64)[:, None]
    i_even = np.arange(0, d_model, 2, dtype=np.float64)
    pe[:, 0::2] = np.sin(pos / 10000.0 ** (2.0 * i_even / d_model))
    pe[:, 1::2] = np.cos(pos / 10000.0 ** (2.0 * (i_even + 1.0) / d_model))
    return jnp.asarray(pe)


def _linear_init(key, fan_in, fan_out):
    # Deterministic stand-in for torch.nn.Linear default init.
    bound = 1.0 / math.sqrt(fan_in)
    kw, kb = jax.random.split(key)
    w = jax.random.uniform(kw, (fan_in, fan_out), jnp.float32, -bound, bound)
    b = jax.random.uniform(kb, (1, fan_out), jnp.float32, -bound, bound)
    return w, b


def init_encoder_params(key, d_model, n_layers, d_ff=1024):
    names = ("alpha1", "beta1", "wqkv", "bqkv", "wo", "bo",
             "alpha2", "beta2", "w1", "c1", "w2", "c2")
    per = {n: [] for n in names}
    for _ in range(n_layers):
        key, kq, kk, kv, ko, k1, k2 = jax.random.split(key, 7)
        wq, bq = _linear_init(kq, d_model, d_model)
        wk, bk = _linear_init(kk, d_model, d_model)
        wv, bv = _linear_init(kv, d_model, d_model)
        wo, bo = _linear_init(ko, d_model, d_model)
        w1, c1 = _linear_init(k1, d_model, d_ff)
        w2, c2 = _linear_init(k2, d_ff, d_model)
        per["alpha1"].append(jnp.ones((1, d_model), jnp.float32))
        per["beta1"].append(jnp.zeros((1, d_model), jnp.float32))
        # fused QKV projection: [Wq | Wk | Wv] -> (D, 3D)
        per["wqkv"].append(jnp.concatenate([wq, wk, wv], axis=1))
        per["bqkv"].append(jnp.concatenate([bq, bk, bv], axis=1))
        per["wo"].append(wo)
        per["bo"].append(bo)
        per["alpha2"].append(jnp.ones((1, d_model), jnp.float32))
        per["beta2"].append(jnp.zeros((1, d_model), jnp.float32))
        per["w1"].append(w1)
        per["c1"].append(c1)
        per["w2"].append(w2)
        per["c2"].append(c2)
    params = {n: jnp.stack(v, axis=0) for n, v in per.items()}   # stacked (L, ...)
    params["alpha_f"] = jnp.ones((1, d_model), jnp.float32)
    params["beta_f"] = jnp.zeros((1, d_model), jnp.float32)
    return params


if __name__ == "__main__":
    B, S, D = 2, 8, 32
    HEADS, N_LAYERS = 8, 2

    key = jax.random.PRNGKey(0)
    k_x, k_p = jax.random.split(key)
    x = jax.random.normal(k_x, (B, S, D), dtype=jnp.float32)

    pe_table = make_pe_table(200, D)
    params = init_encoder_params(k_p, D, N_LAYERS)

    out = encoder_forward(x, pe_table, params, HEADS)
    out = jax.block_until_ready(out)
    assert out.shape == (B, S, D) and out.dtype == jnp.float32
    assert bool(jnp.all(jnp.isfinite(out)))
    print("KERNEL_OK")
</pallas_src>

<mosaic_0001>
module attributes {stable_mosaic.version = 11 : i64} {
  func.func @encoder_kernel(%arg0: i32, %arg1: memref<16x32xf32, #tpu.memory_space<vmem>>, %arg2: memref<16x32xf32, #tpu.memory_space<vmem>>, %arg3: memref<64x32xf32, #tpu.memory_space<vmem>>, %arg4: memref<2x1x32xf32, #tpu.memory_space<vmem>>, %arg5: memref<2x1x32xf32, #tpu.memory_space<vmem>>, %arg6: memref<2x32x96xf32, #tpu.memory_space<vmem>>, %arg7: memref<2x1x96xf32, #tpu.memory_space<vmem>>, %arg8: memref<2x32x32xf32, #tpu.memory_space<vmem>>, %arg9: memref<2x1x32xf32, #tpu.memory_space<vmem>>, %arg10: memref<2x1x32xf32, #tpu.memory_space<vmem>>, %arg11: memref<2x1x32xf32, #tpu.memory_space<vmem>>, %arg12: memref<2x32x1024xf32, #tpu.memory_space<vmem>>, %arg13: memref<2x1x1024xf32, #tpu.memory_space<vmem>>, %arg14: memref<2x1024x32xf32, #tpu.memory_space<vmem>>, %arg15: memref<2x1x32xf32, #tpu.memory_space<vmem>>, %arg16: memref<1x32xf32, #tpu.memory_space<vmem>>, %arg17: memref<1x32xf32, #tpu.memory_space<vmem>>, %arg18: memref<16x32xf32, #tpu.memory_space<vmem>>) attributes {dimension_semantics = [#tpu.dimension_semantics<parallel>], iteration_bounds = array<i64: 1>, scalar_prefetch = 0 : i64, scratch_operands = 0 : i64, tpu.core_type = #tpu.core_type<tc>, window_params = [{transform_indices = @transform_0, window_bounds = array<i64: 16, 32>}, {pipeline_mode = #tpu.pipeline_mode<synchronous>, transform_indices = @transform_1, window_bounds = array<i64: 16, 32>}, {pipeline_mode = #tpu.pipeline_mode<synchronous>, transform_indices = @transform_2, window_bounds = array<i64: 64, 32>}, {pipeline_mode = #tpu.pipeline_mode<synchronous>, transform_indices = @transform_3, window_bounds = array<i64: 2, 1, 32>}, {pipeline_mode = #tpu.pipeline_mode<synchronous>, transform_indices = @transform_4, window_bounds = array<i64: 2, 1, 32>}, {pipeline_mode = #tpu.pipeline_mode<synchronous>, transform_indices = @transform_5, window_bounds = array<i64: 2, 32, 96>}, {pipeline_mode = #tpu.pipeline_mode<synchronous>, transform_indices = @transform_6, window_bounds = array<i64: 2, 1, 96>}, {pipeline_mode = #tpu.pipeline_mode<synchronous>, transform_indices = @transform_7, window_bounds = array<i64: 2, 32, 32>}, {pipeline_mode = #tpu.pipeline_mode<synchronous>, transform_indices = @transform_8, window_bounds = array<i64: 2, 1, 32>}, {pipeline_mode = #tpu.pipeline_mode<synchronous>, transform_indices = @transform_9, window_bounds = array<i64: 2, 1, 32>}, {pipeline_mode = #tpu.pipeline_mode<synchronous>, transform_indices = @transform_10, window_bounds = array<i64: 2, 1, 32>}, {pipeline_mode = #tpu.pipeline_mode<synchronous>, transform_indices = @transform_11, window_bounds = array<i64: 2, 32, 1024>}, {pipeline_mode = #tpu.pipeline_mode<synchronous>, transform_indices = @transform_12, window_bounds = array<i64: 2, 1, 1024>}, {pipeline_mode = #tpu.pipeline_mode<synchronous>, transform_indices = @transform_13, window_bounds = array<i64: 2, 1024, 32>}, {pipeline_mode = #tpu.pipeline_mode<synchronous>, transform_indices = @transform_14, window_bounds = array<i64: 2, 1, 32>}, {pipeline_mode = #tpu.pipeline_mode<synchronous>, transform_indices = @transform_15, window_bounds = array<i64: 1, 32>}, {pipeline_mode = #tpu.pipeline_mode<synchronous>, transform_indices = @transform_16, window_bounds = array<i64: 1, 32>}, {transform_indices = @transform_17, window_bounds = array<i64: 16, 32>}]} {
    %c0 = arith.constant 0 : index
    %c0_0 = arith.constant 0 : index
    %0 = vector.load %arg3[%c0, %c0_0] : memref<64x32xf32, #tpu.memory_space<vmem>>, vector<64x32xf32>
    %c0_1 = arith.constant 0 : index
    %c0_2 = arith.constant 0 : index
    %1 = vector.load %arg1[%c0_1, %c0_2] : memref<16x32xf32, #tpu.memory_space<vmem>>, vector<16x32xf32>
    %cst = arith.constant 5.65685415 : f32
    %2 = vector.broadcast %cst : f32 to vector<16x32xf32>
    %3 = arith.mulf %1, %2 : vector<16x32xf32>
    %c0_3 = arith.constant 0 : index
    %c0_4 = arith.constant 0 : index
    %4 = vector.load %arg2[%c0_3, %c0_4] : memref<16x32xf32, #tpu.memory_space<vmem>>, vector<16x32xf32>
    %5 = arith.addf %3, %4 : vector<16x32xf32>
    %c0_5 = arith.constant 0 : index
    %c0_6 = arith.constant 0 : index
    %c0_7 = arith.constant 0 : index
    %6 = vector.load %arg4[%c0_5, %c0_6, %c0_7] : memref<2x1x32xf32, #tpu.memory_space<vmem>>, vector<1x1x32xf32>
    %7 = vector.shape_cast %6 : vector<1x1x32xf32> to vector<1x32xf32>
    %c0_8 = arith.constant 0 : index
    %c0_9 = arith.constant 0 : index
    %c0_10 = arith.constant 0 : index
    %8 = vector.load %arg5[%c0_8, %c0_9, %c0_10] : memref<2x1x32xf32, #tpu.memory_space<vmem>>, vector<1x1x32xf32>
    %9 = vector.shape_cast %8 : vector<1x1x32xf32> to vector<1x32xf32>
    %cst_11 = arith.constant dense<0.000000e+00> : vector<16xf32>
    %10 = vector.multi_reduction <add>, %5, %cst_11 [1] : vector<16x32xf32> to vector<16xf32>
    %11 = vector.shape_cast %10 : vector<16xf32> to vector<16x1xf32>
    %cst_12 = arith.constant 3.200000e+01 : f32
    %12 = vector.broadcast %cst_12 : f32 to vector<16x1xf32>
    %13 = arith.divf %11, %12 : vector<16x1xf32>
    %14 = vector.broadcast %13 : vector<16x1xf32> to vector<16x32xf32>
    %15 = arith.subf %5, %14 : vector<16x32xf32>
    %16 = arith.mulf %15, %15 : vector<16x32xf32>
    %cst_13 = arith.constant dense<0.000000e+00> : vector<16xf32>
    %17 = vector.multi_reduction <add>, %16, %cst_13 [1] : vector<16x32xf32> to vector<16xf32>
    %18 = vector.shape_cast %17 : vector<16xf32> to vector<16x1xf32>
    %cst_14 = arith.constant 0.0322580636 : f32
    %19 = vector.broadcast %cst_14 : f32 to vector<16x1xf32>
    %20 = arith.mulf %18, %19 : vector<16x1xf32>
    %21 = math.sqrt %20 : vector<16x1xf32>
    %22 = vector.broadcast %7 : vector<1x32xf32> to vector<16x32xf32>
    %23 = arith.mulf %22, %15 : vector<16x32xf32>
    %cst_15 = arith.constant 9.99999997E-7 : f32
    %24 = vector.broadcast %cst_15 : f32 to vector<16x1xf32>
    %25 = arith.addf %21, %24 : vector<16x1xf32>
    %26 = vector.broadcast %25 : vector<16x1xf32> to vector<16x32xf32>
    %27 = arith.divf %23, %26 : vector<16x32xf32>
    %28 = vector.broadcast %9 : vector<1x32xf32> to vector<16x32xf32>
    %29 = arith.addf %27, %28 : vector<16x32xf32>
    %c0_16 = arith.constant 0 : index
    %c0_17 = arith.constant 0 : index
    %c0_18 = arith.constant 0 : index
    %30 = vector.load %arg6[%c0_16, %c0_17, %c0_18] : memref<2x32x96xf32, #tpu.memory_space<vmem>>, vector<1x32x96xf32>
    %31 = vector.shape_cast %30 : vector<1x32x96xf32> to vector<32x96xf32>
    %cst_19 = arith.constant dense<0.000000e+00> : vector<16x96xf32>
    %32 = tpu.matmul %29, %31, %cst_19 {dimension_numbers = #tpu.dot_dimension_numbers<[1], [0], [0], [1], [0, 0, 1, 1], [], []>} : vector<16x32xf32>, vector<32x96xf32>, vector<16x96xf32> -> vector<16x96xf32>
    %c0_20 = arith.constant 0 : index
    %c0_21 = arith.constant 0 : index
    %c0_22 = arith.constant 0 : index
    %33 = vector.load %arg7[%c0_20, %c0_21, %c0_22] : memref<2x1x96xf32, #tpu.memory_space<vmem>>, vector<1x1x96xf32>
    %34 = vector.shape_cast %33 : vector<1x1x96xf32> to vector<1x96xf32>
    %35 = vector.broadcast %34 : vector<1x96xf32> to vector<16x96xf32>
    %36 = arith.addf %32, %35 : vector<16x96xf32>
    %37 = vector.extract_strided_slice %36 {offsets = [0, 0], sizes = [16, 32], strides = [1, 1]} : vector<16x96xf32> to vector<16x32xf32>
    %38 = vector.extract_strided_slice %36 {offsets = [0, 32], sizes = [16, 32], strides = [1, 1]} : vector<16x96xf32> to vector<16x32xf32>
    %39 = vector.extract_strided_slice %36 {offsets = [0, 64], sizes = [16, 32], strides = [1, 1]} : vector<16x96xf32> to vector<16x32xf32>
    %40 = vector.extract_strided_slice %37 {offsets = [0, 0], sizes = [8, 32], strides = [1, 1]} : vector<16x32xf32> to vector<8x32xf32>
    %41 = vector.extract_strided_slice %38 {offsets = [0, 0], sizes = [8, 32], strides = [1, 1]} : vector<16x32xf32> to vector<8x32xf32>
    %42 = tpu.concatenate %41, %41, %41, %41, %41, %41, %41, %41 in 0 : vector<8x32xf32>, vector<8x32xf32>, vector<8x32xf32>, vector<8x32xf32>, vector<8x32xf32>, vector<8x32xf32>, vector<8x32xf32>, vector<8x32xf32> -> vector<64x32xf32>
    %43 = arith.mulf %42, %0 : vector<64x32xf32>
    %44 = vector.extract_strided_slice %39 {offsets = [0, 0], sizes = [8, 32], strides = [1, 1]} : vector<16x32xf32> to vector<8x32xf32>
    %45 = tpu.concatenate %44, %44, %44, %44, %44, %44, %44, %44 in 0 : vector<8x32xf32>, vector<8x32xf32>, vector<8x32xf32>, vector<8x32xf32>, vector<8x32xf32>, vector<8x32xf32>, vector<8x32xf32>, vector<8x32xf32> -> vector<64x32xf32>
    %46 = arith.mulf %45, %0 : vector<64x32xf32>
    %cst_23 = arith.constant dense<0.000000e+00> : vector<8x64xf32>
    %47 = tpu.matmul %40, %43, %cst_23 {dimension_numbers = #tpu.dot_dimension_numbers<[1], [1], [0], [0], [0, 0, 1, 0], [], []>} : vector<8x32xf32>, vector<64x32xf32>, vector<8x64xf32> -> vector<8x64xf32>
    %cst_24 = arith.constant 5.000000e-01 : f32
    %48 = vector.broadcast %cst_24 : f32 to vector<8x64xf32>
    %49 = arith.mulf %47, %48 : vector<8x64xf32>
    %50 = vector.extract_strided_slice %49 {offsets = [0, 0], sizes = [8, 8], strides = [1, 1]} : vector<8x64xf32> to vector<8x8xf32>
    %cst_25 = arith.constant dense<0xFF800000> : vector<8xf32>
    %51 = vector.multi_reduction <maximumf>, %50, %cst_25 [1] : vector<8x8xf32> to vector<8xf32>
    %52 = vector.shape_cast %51 : vector<8xf32> to vector<8x1xf32>
    %53 = vector.broadcast %52 : vector<8x1xf32> to vector<8x8xf32>
    %54 = arith.subf %50, %53 : vector<8x8xf32>
    %55 = math.exp %54 : vector<8x8xf32>
    %cst_26 = arith.constant dense<0.000000e+00> : vector<8xf32>
    %56 = vector.multi_reduction <add>, %55, %cst_26 [1] : vector<8x8xf32> to vector<8xf32>
    %57 = vector.shape_cast %56 : vector<8xf32> to vector<8x1xf32>
    %58 = vector.broadcast %57 : vector<8x1xf32> to vector<8x8xf32>
    %59 = arith.divf %55, %58 : vector<8x8xf32>
    %60 = vector.extract_strided_slice %49 {offsets = [0, 8], sizes = [8, 8], strides = [1, 1]} : vector<8x64xf32> to vector<8x8xf32>
    %cst_27 = arith.constant dense<0xFF800000> : vector<8xf32>
    %61 = vector.multi_reduction <maximumf>, %60, %cst_27 [1] : vector<8x8xf32> to vector<8xf32>
    %62 = vector.shape_cast %61 : vector<8xf32> to vector<8x1xf32>
    %63 = vector.broadcast %62 : vector<8x1xf32> to vector<8x8xf32>
    %64 = arith.subf %60, %63 : vector<8x8xf32>
    %65 = math.exp %64 : vector<8x8xf32>
    %cst_28 = arith.constant dense<0.000000e+00> : vector<8xf32>
    %66 = vector.multi_reduction <add>, %65, %cst_28 [1] : vector<8x8xf32> to vector<8xf32>
    %67 = vector.shape_cast %66 : vector<8xf32> to vector<8x1xf32>
    %68 = vector.broadcast %67 : vector<8x1xf32> to vector<8x8xf32>
    %69 = arith.divf %65, %68 : vector<8x8xf32>
    %70 = vector.extract_strided_slice %49 {offsets = [0, 16], sizes = [8, 8], strides = [1, 1]} : vector<8x64xf32> to vector<8x8xf32>
    %cst_29 = arith.constant dense<0xFF800000> : vector<8xf32>
    %71 = vector.multi_reduction <maximumf>, %70, %cst_29 [1] : vector<8x8xf32> to vector<8xf32>
    %72 = vector.shape_cast %71 : vector<8xf32> to vector<8x1xf32>
    %73 = vector.broadcast %72 : vector<8x1xf32> to vector<8x8xf32>
    %74 = arith.subf %70, %73 : vector<8x8xf32>
    %75 = math.exp %74 : vector<8x8xf32>
    %cst_30 = arith.constant dense<0.000000e+00> : vector<8xf32>
    %76 = vector.multi_reduction <add>, %75, %cst_30 [1] : vector<8x8xf32> to vector<8xf32>
    %77 = vector.shape_cast %76 : vector<8xf32> to vector<8x1xf32>
    %78 = vector.broadcast %77 : vector<8x1xf32> to vector<8x8xf32>
    %79 = arith.divf %75, %78 : vector<8x8xf32>
    %80 = vector.extract_strided_slice %49 {offsets = [0, 24], sizes = [8, 8], strides = [1, 1]} : vector<8x64xf32> to vector<8x8xf32>
    %cst_31 = arith.constant dense<0xFF800000> : vector<8xf32>
    %81 = vector.multi_reduction <maximumf>, %80, %cst_31 [1] : vector<8x8xf32> to vector<8xf32>
    %82 = vector.shape_cast %81 : vector<8xf32> to vector<8x1xf32>
    %83 = vector.broadcast %82 : vector<8x1xf32> to vector<8x8xf32>
    %84 = arith.subf %80, %83 : vector<8x8xf32>
    %85 = math.exp %84 : vector<8x8xf32>
    %cst_32 = arith.constant dense<0.000000e+00> : vector<8xf32>
    %86 = vector.multi_reduction <add>, %85, %cst_32 [1] : vector<8x8xf32> to vector<8xf32>
    %87 = vector.shape_cast %86 : vector<8xf32> to vector<8x1xf32>
    %88 = vector.broadcast %87 : vector<8x1xf32> to vector<8x8xf32>
    %89 = arith.divf %85, %88 : vector<8x8xf32>
    %90 = vector.extract_strided_slice %49 {offsets = [0, 32], sizes = [8, 8], strides = [1, 1]} : vector<8x64xf32> to vector<8x8xf32>
    %cst_33 = arith.constant dense<0xFF800000> : vector<8xf32>
    %91 = vector.multi_reduction <maximumf>, %90, %cst_33 [1] : vector<8x8xf32> to vector<8xf32>
    %92 = vector.shape_cast %91 : vector<8xf32> to vector<8x1xf32>
    %93 = vector.broadcast %92 : vector<8x1xf32> to vector<8x8xf32>
    %94 = arith.subf %90, %93 : vector<8x8xf32>
    %95 = math.exp %94 : vector<8x8xf32>
    %cst_34 = arith.constant dense<0.000000e+00> : vector<8xf32>
    %96 = vector.multi_reduction <add>, %95, %cst_34 [1] : vector<8x8xf32> to vector<8xf32>
    %97 = vector.shape_cast %96 : vector<8xf32> to vector<8x1xf32>
    %98 = vector.broadcast %97 : vector<8x1xf32> to vector<8x8xf32>
    %99 = arith.divf %95, %98 : vector<8x8xf32>
    %100 = vector.extract_strided_slice %49 {offsets = [0, 40], sizes = [8, 8], strides = [1, 1]} : vector<8x64xf32> to vector<8x8xf32>
    %cst_35 = arith.constant dense<0xFF800000> : vector<8xf32>
    %101 = vector.multi_reduction <maximumf>, %100, %cst_35 [1] : vector<8x8xf32> to vector<8xf32>
    %102 = vector.shape_cast %101 : vector<8xf32> to vector<8x1xf32>
    %103 = vector.broadcast %102 : vector<8x1xf32> to vector<8x8xf32>
    %104 = arith.subf %100, %103 : vector<8x8xf32>
    %105 = math.exp %104 : vector<8x8xf32>
    %cst_36 = arith.constant dense<0.000000e+00> : vector<8xf32>
    %106 = vector.multi_reduction <add>, %105, %cst_36 [1] : vector<8x8xf32> to vector<8xf32>
    %107 = vector.shape_cast %106 : vector<8xf32> to vector<8x1xf32>
    %108 = vector.broadcast %107 : vector<8x1xf32> to vector<8x8xf32>
    %109 = arith.divf %105, %108 : vector<8x8xf32>
    %110 = vector.extract_strided_slice %49 {offsets = [0, 48], sizes = [8, 8], strides = [1, 1]} : vector<8x64xf32> to vector<8x8xf32>
    %cst_37 = arith.constant dense<0xFF800000> : vector<8xf32>
    %111 = vector.multi_reduction <maximumf>, %110, %cst_37 [1] : vector<8x8xf32> to vector<8xf32>
    %112 = vector.shape_cast %111 : vector<8xf32> to vector<8x1xf32>
    %113 = vector.broadcast %112 : vector<8x1xf32> to vector<8x8xf32>
    %114 = arith.subf %110, %113 : vector<8x8xf32>
    %115 = math.exp %114 : vector<8x8xf32>
    %cst_38 = arith.constant dense<0.000000e+00> : vector<8xf32>
    %116 = vector.multi_reduction <add>, %115, %cst_38 [1] : vector<8x8xf32> to vector<8xf32>
    %117 = vector.shape_cast %116 : vector<8xf32> to vector<8x1xf32>
    %118 = vector.broadcast %117 : vector<8x1xf32> to vector<8x8xf32>
    %119 = arith.divf %115, %118 : vector<8x8xf32>
    %120 = vector.extract_strided_slice %49 {offsets = [0, 56], sizes = [8, 8], strides = [1, 1]} : vector<8x64xf32> to vector<8x8xf32>
    %cst_39 = arith.constant dense<0xFF800000> : vector<8xf32>
    %121 = vector.multi_reduction <maximumf>, %120, %cst_39 [1] : vector<8x8xf32> to vector<8xf32>
    %122 = vector.shape_cast %121 : vector<8xf32> to vector<8x1xf32>
    %123 = vector.broadcast %122 : vector<8x1xf32> to vector<8x8xf32>
    %124 = arith.subf %120, %123 : vector<8x8xf32>
    %125 = math.exp %124 : vector<8x8xf32>
    %cst_40 = arith.constant dense<0.000000e+00> : vector<8xf32>
    %126 = vector.multi_reduction <add>, %125, %cst_40 [1] : vector<8x8xf32> to vector<8xf32>
    %127 = vector.shape_cast %126 : vector<8xf32> to vector<8x1xf32>
    %128 = vector.broadcast %127 : vector<8x1xf32> to vector<8x8xf32>
    %129 = arith.divf %125, %128 : vector<8x8xf32>
    %130 = tpu.concatenate %59, %69, %79, %89, %99, %109, %119, %129 in 1 : vector<8x8xf32>, vector<8x8xf32>, vector<8x8xf32>, vector<8x8xf32>, vector<8x8xf32>, vector<8x8xf32>, vector<8x8xf32>, vector<8x8xf32> -> vector<8x64xf32>
    %cst_41 = arith.constant dense<0.000000e+00> : vector<8x32xf32>
    %131 = tpu.matmul %130, %46, %cst_41 {dimension_numbers = #tpu.dot_dimension_numbers<[1], [0], [0], [1], [0, 0, 1, 1], [], []>} : vector<8x64xf32>, vector<64x32xf32>, vector<8x32xf32> -> vector<8x32xf32>
    %132 = vector.extract_strided_slice %37 {offsets = [8, 0], sizes = [8, 32], strides = [1, 1]} : vector<16x32xf32> to vector<8x32xf32>
    %133 = vector.extract_strided_slice %38 {offsets = [8, 0], sizes = [8, 32], strides = [1, 1]} : vector<16x32xf32> to vector<8x32xf32>
    %134 = tpu.concatenate %133, %133, %133, %133, %133, %133, %133, %133 in 0 : vector<8x32xf32>, vector<8x32xf32>, vector<8x32xf32>, vector<8x32xf32>, vector<8x32xf32>, vector<8x32xf32>, vector<8x32xf32>, vector<8x32xf32> -> vector<64x32xf32>
    %135 = arith.mulf %134, %0 : vector<64x32xf32>
    %136 = vector.extract_strided_slice %39 {offsets = [8, 0], sizes = [8, 32], strides = [1, 1]} : vector<16x32xf32> to vector<8x32xf32>
    %137 = tpu.concatenate %136, %136, %136, %136, %136, %136, %136, %136 in 0 : vector<8x32xf32>, vector<8x32xf32>, vector<8x32xf32>, vector<8x32xf32>, vector<8x32xf32>, vector<8x32xf32>, vector<8x32xf32>, vector<8x32xf32> -> vector<64x32xf32>
    %138 = arith.mulf %137, %0 : vector<64x32xf32>
    %cst_42 = arith.constant dense<0.000000e+00> : vector<8x64xf32>
    %139 = tpu.matmul %132, %135, %cst_42 {dimension_numbers = #tpu.dot_dimension_numbers<[1], [1], [0], [0], [0, 0, 1, 0], [], []>} : vector<8x32xf32>, vector<64x32xf32>, vector<8x64xf32> -> vector<8x64xf32>
    %cst_43 = arith.constant 5.000000e-01 : f32
    %140 = vector.broadcast %cst_43 : f32 to vector<8x64xf32>
    %141 = arith.mulf %139, %140 : vector<8x64xf32>
    %142 = vector.extract_strided_slice %141 {offsets = [0, 0], sizes = [8, 8], strides = [1, 1]} : vector<8x64xf32> to vector<8x8xf32>
    %cst_44 = arith.constant dense<0xFF800000> : vector<8xf32>
    %143 = vector.multi_reduction <maximumf>, %142, %cst_44 [1] : vector<8x8xf32> to vector<8xf32>
    %144 = vector.shape_cast %143 : vector<8xf32> to vector<8x1xf32>
    %145 = vector.broadcast %144 : vector<8x1xf32> to vector<8x8xf32>
    %146 = arith.subf %142, %145 : vector<8x8xf32>
    %147 = math.exp %146 : vector<8x8xf32>
    %cst_45 = arith.constant dense<0.000000e+00> : vector<8xf32>
    %148 = vector.multi_reduction <add>, %147, %cst_45 [1] : vector<8x8xf32> to vector<8xf32>
    %149 = vector.shape_cast %148 : vector<8xf32> to vector<8x1xf32>
    %150 = vector.broadcast %149 : vector<8x1xf32> to vector<8x8xf32>
    %151 = arith.divf %147, %150 : vector<8x8xf32>
    %152 = vector.extract_strided_slice %141 {offsets = [0, 8], sizes = [8, 8], strides = [1, 1]} : vector<8x64xf32> to vector<8x8xf32>
    %cst_46 = arith.constant dense<0xFF800000> : vector<8xf32>
    %153 = vector.multi_reduction <maximumf>, %152, %cst_46 [1] : vector<8x8xf32> to vector<8xf32>
    %154 = vector.shape_cast %153 : vector<8xf32> to vector<8x1xf32>
    %155 = vector.broadcast %154 : vector<8x1xf32> to vector<8x8xf32>
    %156 = arith.subf %152, %155 : vector<8x8xf32>
    %157 = math.exp %156 : vector<8x8xf32>
    %cst_47 = arith.constant dense<0.000000e+00> : vector<8xf32>
    %158 = vector.multi_reduction <add>, %157, %cst_47 [1] : vector<8x8xf32> to vector<8xf32>
    %159 = vector.shape_cast %158 : vector<8xf32> to vector<8x1xf32>
    %160 = vector.broadcast %159 : vector<8x1xf32> to vector<8x8xf32>
    %161 = arith.divf %157, %160 : vector<8x8xf32>
    %162 = vector.extract_strided_slice %141 {offsets = [0, 16], sizes = [8, 8], strides = [1, 1]} : vector<8x64xf32> to vector<8x8xf32>
    %cst_48 = arith.constant dense<0xFF800000> : vector<8xf32>
    %163 = vector.multi_reduction <maximumf>, %162, %cst_48 [1] : vector<8x8xf32> to vector<8xf32>
    %164 = vector.shape_cast %163 : vector<8xf32> to vector<8x1xf32>
    %165 = vector.broadcast %164 : vector<8x1xf32> to vector<8x8xf32>
    %166 = arith.subf %162, %165 : vector<8x8xf32>
    %167 = math.exp %166 : vector<8x8xf32>
    %cst_49 = arith.constant dense<0.000000e+00> : vector<8xf32>
    %168 = vector.multi_reduction <add>, %167, %cst_49 [1] : vector<8x8xf32> to vector<8xf32>
    %169 = vector.shape_cast %168 : vector<8xf32> to vector<8x1xf32>
    %170 = vector.broadcast %169 : vector<8x1xf32> to vector<8x8xf32>
    %171 = arith.divf %167, %170 : vector<8x8xf32>
    %172 = vector.extract_strided_slice %141 {offsets = [0, 24], sizes = [8, 8], strides = [1, 1]} : vector<8x64xf32> to vector<8x8xf32>
    %cst_50 = arith.constant dense<0xFF800000> : vector<8xf32>
    %173 = vector.multi_reduction <maximumf>, %172, %cst_50 [1] : vector<8x8xf32> to vector<8xf32>
    %174 = vector.shape_cast %173 : vector<8xf32> to vector<8x1xf32>
    %175 = vector.broadcast %174 : vector<8x1xf32> to vector<8x8xf32>
    %176 = arith.subf %172, %175 : vector<8x8xf32>
    %177 = math.exp %176 : vector<8x8xf32>
    %cst_51 = arith.constant dense<0.000000e+00> : vector<8xf32>
    %178 = vector.multi_reduction <add>, %177, %cst_51 [1] : vector<8x8xf32> to vector<8xf32>
    %179 = vector.shape_cast %178 : vector<8xf32> to vector<8x1xf32>
    %180 = vector.broadcast %179 : vector<8x1xf32> to vector<8x8xf32>
    %181 = arith.divf %177, %180 : vector<8x8xf32>
    %182 = vector.extract_strided_slice %141 {offsets = [0, 32], sizes = [8, 8], strides = [1, 1]} : vector<8x64xf32> to vector<8x8xf32>
    %cst_52 = arith.constant dense<0xFF800000> : vector<8xf32>
    %183 = vector.multi_reduction <maximumf>, %182, %cst_52 [1] : vector<8x8xf32> to vector<8xf32>
    %184 = vector.shape_cast %183 : vector<8xf32> to vector<8x1xf32>
    %185 = vector.broadcast %184 : vector<8x1xf32> to vector<8x8xf32>
    %186 = arith.subf %182, %185 : vector<8x8xf32>
    %187 = math.exp %186 : vector<8x8xf32>
    %cst_53 = arith.constant dense<0.000000e+00> : vector<8xf32>
    %188 = vector.multi_reduction <add>, %187, %cst_53 [1] : vector<8x8xf32> to vector<8xf32>
    %189 = vector.shape_cast %188 : vector<8xf32> to vector<8x1xf32>
    %190 = vector.broadcast %189 : vector<8x1xf32> to vector<8x8xf32>
    %191 = arith.divf %187, %190 : vector<8x8xf32>
    %192 = vector.extract_strided_slice %141 {offsets = [0, 40], sizes = [8, 8], strides = [1, 1]} : vector<8x64xf32> to vector<8x8xf32>
    %cst_54 = arith.constant dense<0xFF800000> : vector<8xf32>
    %193 = vector.multi_reduction <maximumf>, %192, %cst_54 [1] : vector<8x8xf32> to vector<8xf32>
    %194 = vector.shape_cast %193 : vector<8xf32> to vector<8x1xf32>
    %195 = vector.broadcast %194 : vector<8x1xf32> to vector<8x8xf32>
    %196 = arith.subf %192, %195 : vector<8x8xf32>
    %197 = math.exp %196 : vector<8x8xf32>
    %cst_55 = arith.constant dense<0.000000e+00> : vector<8xf32>
    %198 = vector.multi_reduction <add>, %197, %cst_55 [1] : vector<8x8xf32> to vector<8xf32>
    %199 = vector.shape_cast %198 : vector<8xf32> to vector<8x1xf32>
    %200 = vector.broadcast %199 : vector<8x1xf32> to vector<8x8xf32>
    %201 = arith.divf %197, %200 : vector<8x8xf32>
    %202 = vector.extract_strided_slice %141 {offsets = [0, 48], sizes = [8, 8], strides = [1, 1]} : vector<8x64xf32> to vector<8x8xf32>
    %cst_56 = arith.constant dense<0xFF800000> : vector<8xf32>
    %203 = vector.multi_reduction <maximumf>, %202, %cst_56 [1] : vector<8x8xf32> to vector<8xf32>
    %204 = vector.shape_cast %203 : vector<8xf32> to vector<8x1xf32>
    %205 = vector.broadcast %204 : vector<8x1xf32> to vector<8x8xf32>
    %206 = arith.subf %202, %205 : vector<8x8xf32>
    %207 = math.exp %206 : vector<8x8xf32>
    %cst_57 = arith.constant dense<0.000000e+00> : vector<8xf32>
    %208 = vector.multi_reduction <add>, %207, %cst_57 [1] : vector<8x8xf32> to vector<8xf32>
    %209 = vector.shape_cast %208 : vector<8xf32> to vector<8x1xf32>
    %210 = vector.broadcast %209 : vector<8x1xf32> to vector<8x8xf32>
    %211 = arith.divf %207, %210 : vector<8x8xf32>
    %212 = vector.extract_strided_slice %141 {offsets = [0, 56], sizes = [8, 8], strides = [1, 1]} : vector<8x64xf32> to vector<8x8xf32>
    %cst_58 = arith.constant dense<0xFF800000> : vector<8xf32>
    %213 = vector.multi_reduction <maximumf>, %212, %cst_58 [1] : vector<8x8xf32> to vector<8xf32>
    %214 = vector.shape_cast %213 : vector<8xf32> to vector<8x1xf32>
    %215 = vector.broadcast %214 : vector<8x1xf32> to vector<8x8xf32>
    %216 = arith.subf %212, %215 : vector<8x8xf32>
    %217 = math.exp %216 : vector<8x8xf32>
    %cst_59 = arith.constant dense<0.000000e+00> : vector<8xf32>
    %218 = vector.multi_reduction <add>, %217, %cst_59 [1] : vector<8x8xf32> to vector<8xf32>
    %219 = vector.shape_cast %218 : vector<8xf32> to vector<8x1xf32>
    %220 = vector.broadcast %219 : vector<8x1xf32> to vector<8x8xf32>
    %221 = arith.divf %217, %220 : vector<8x8xf32>
    %222 = tpu.concatenate %151, %161, %171, %181, %191, %201, %211, %221 in 1 : vector<8x8xf32>, vector<8x8xf32>, vector<8x8xf32>, vector<8x8xf32>, vector<8x8xf32>, vector<8x8xf32>, vector<8x8xf32>, vector<8x8xf32> -> vector<8x64xf32>
    %cst_60 = arith.constant dense<0.000000e+00> : vector<8x32xf32>
    %223 = tpu.matmul %222, %138, %cst_60 {dimension_numbers = #tpu.dot_dimension_numbers<[1], [0], [0], [1], [0, 0, 1, 1], [], []>} : vector<8x64xf32>, vector<64x32xf32>, vector<8x32xf32> -> vector<8x32xf32>
    %224 = tpu.concatenate %131, %223 in 0 : vector<8x32xf32>, vector<8x32xf32> -> vector<16x32xf32>
    %c0_61 = arith.constant 0 : index
    %c0_62 = arith.constant 0 : index
    %c0_63 = arith.constant 0 : index
    %225 = vector.load %arg8[%c0_61, %c0_62, %c0_63] : memref<2x32x32xf32, #tpu.memory_space<vmem>>, vector<1x32x32xf32>
    %226 = vector.shape_cast %225 : vector<1x32x32xf32> to vector<32x32xf32>
    %cst_64 = arith.constant dense<0.000000e+00> : vector<16x32xf32>
    %227 = tpu.matmul %224, %226, %cst_64 {dimension_numbers = #tpu.dot_dimension_numbers<[1], [0], [0], [1], [0, 0, 1, 1], [], []>} : vector<16x32xf32>, vector<32x32xf32>, vector<16x32xf32> -> vector<16x32xf32>
    %228 = arith.addf %5, %227 : vector<16x32xf32>
    %c0_65 = arith.constant 0 : index
    %c0_66 = arith.constant 0 : index
    %c0_67 = arith.constant 0 : index
    %229 = vector.load %arg9[%c0_65, %c0_66, %c0_67] : memref<2x1x32xf32, #tpu.memory_space<vmem>>, vector<1x1x32xf32>
    %230 = vector.shape_cast %229 : vector<1x1x32xf32> to vector<1x32xf32>
    %231 = vector.broadcast %230 : vector<1x32xf32> to vector<16x32xf32>
    %232 = arith.addf %228, %231 : vector<16x32xf32>
    %c0_68 = arith.constant 0 : index
    %c0_69 = arith.constant 0 : index
    %c0_70 = arith.constant 0 : index
    %233 = vector.load %arg10[%c0_68, %c0_69, %c0_70] : memref<2x1x32xf32, #tpu.memory_space<vmem>>, vector<1x1x32xf32>
    %234 = vector.shape_cast %233 : vector<1x1x32xf32> to vector<1x32xf32>
    %c0_71 = arith.constant 0 : index
    %c0_72 = arith.constant 0 : index
    %c0_73 = arith.constant 0 : index
    %235 = vector.load %arg11[%c0_71, %c0_72, %c0_73] : memref<2x1x32xf32, #tpu.memory_space<vmem>>, vector<1x1x32xf32>
    %236 = vector.shape_cast %235 : vector<1x1x32xf32> to vector<1x32xf32>
    %cst_74 = arith.constant dense<0.000000e+00> : vector<16xf32>
    %237 = vector.multi_reduction <add>, %232, %cst_74 [1] : vector<16x32xf32> to vector<16xf32>
    %238 = vector.shape_cast %237 : vector<16xf32> to vector<16x1xf32>
    %cst_75 = arith.constant 3.200000e+01 : f32
    %239 = vector.broadcast %cst_75 : f32 to vector<16x1xf32>
    %240 = arith.divf %238, %239 : vector<16x1xf32>
    %241 = vector.broadcast %240 : vector<16x1xf32> to vector<16x32xf32>
    %242 = arith.subf %232, %241 : vector<16x32xf32>
    %243 = arith.mulf %242, %242 : vector<16x32xf32>
    %cst_76 = arith.constant dense<0.000000e+00> : vector<16xf32>
    %244 = vector.multi_reduction <add>, %243, %cst_76 [1] : vector<16x32xf32> to vector<16xf32>
    %245 = vector.shape_cast %244 : vector<16xf32> to vector<16x1xf32>
    %cst_77 = arith.constant 0.0322580636 : f32
    %246 = vector.broadcast %cst_77 : f32 to vector<16x1xf32>
    %247 = arith.mulf %245, %246 : vector<16x1xf32>
    %248 = math.sqrt %247 : vector<16x1xf32>
    %249 = vector.broadcast %234 : vector<1x32xf32> to vector<16x32xf32>
    %250 = arith.mulf %249, %242 : vector<16x32xf32>
    %cst_78 = arith.constant 9.99999997E-7 : f32
    %251 = vector.broadcast %cst_78 : f32 to vector<16x1xf32>
    %252 = arith.addf %248, %251 : vector<16x1xf32>
    %253 = vector.broadcast %252 : vector<16x1xf32> to vector<16x32xf32>
    %254 = arith.divf %250, %253 : vector<16x32xf32>
    %255 = vector.broadcast %236 : vector<1x32xf32> to vector<16x32xf32>
    %256 = arith.addf %254, %255 : vector<16x32xf32>
    %c0_79 = arith.constant 0 : index
    %c0_80 = arith.constant 0 : index
    %c0_81 = arith.constant 0 : index
    %257 = vector.load %arg12[%c0_79, %c0_80, %c0_81] : memref<2x32x1024xf32, #tpu.memory_space<vmem>>, vector<1x32x1024xf32>
    %258 = vector.shape_cast %257 : vector<1x32x1024xf32> to vector<32x1024xf32>
    %cst_82 = arith.constant dense<0.000000e+00> : vector<16x1024xf32>
    %259 = tpu.matmul %256, %258, %cst_82 {dimension_numbers = #tpu.dot_dimension_numbers<[1], [0], [0], [1], [0, 0, 1, 1], [], []>} : vector<16x32xf32>, vector<32x1024xf32>, vector<16x1024xf32> -> vector<16x1024xf32>
    %c0_83 = arith.constant 0 : index
    %c0_84 = arith.constant 0 : index
    %c0_85 = arith.constant 0 : index
    %260 = vector.load %arg13[%c0_83, %c0_84, %c0_85] : memref<2x1x1024xf32, #tpu.memory_space<vmem>>, vector<1x1x1024xf32>
    %261 = vector.shape_cast %260 : vector<1x1x1024xf32> to vector<1x1024xf32>
    %262 = vector.broadcast %261 : vector<1x1024xf32> to vector<16x1024xf32>
    %263 = arith.addf %259, %262 : vector<16x1024xf32>
    %cst_86 = arith.constant 0.000000e+00 : f32
    %264 = vector.broadcast %cst_86 : f32 to vector<16x1024xf32>
    %265 = arith.maximumf %263, %264 : vector<16x1024xf32>
    %c0_87 = arith.constant 0 : index
    %c0_88 = arith.constant 0 : index
    %c0_89 = arith.constant 0 : index
    %266 = vector.load %arg14[%c0_87, %c0_88, %c0_89] : memref<2x1024x32xf32, #tpu.memory_space<vmem>>, vector<1x1024x32xf32>
    %267 = vector.shape_cast %266 : vector<1x1024x32xf32> to vector<1024x32xf32>
    %cst_90 = arith.constant dense<0.000000e+00> : vector<16x32xf32>
    %268 = tpu.matmul %265, %267, %cst_90 {dimension_numbers = #tpu.dot_dimension_numbers<[1], [0], [0], [1], [0, 0, 1, 1], [], []>} : vector<16x1024xf32>, vector<1024x32xf32>, vector<16x32xf32> -> vector<16x32xf32>
    %269 = arith.addf %232, %268 : vector<16x32xf32>
    %c0_91 = arith.constant 0 : index
    %c0_92 = arith.constant 0 : index
    %c0_93 = arith.constant 0 : index
    %270 = vector.load %arg15[%c0_91, %c0_92, %c0_93] : memref<2x1x32xf32, #tpu.memory_space<vmem>>, vector<1x1x32xf32>
    %271 = vector.shape_cast %270 : vector<1x1x32xf32> to vector<1x32xf32>
    %272 = vector.broadcast %271 : vector<1x32xf32> to vector<16x32xf32>
    %273 = arith.addf %269, %272 : vector<16x32xf32>
    %c1 = arith.constant 1 : index
    %c0_94 = arith.constant 0 : index
    %c0_95 = arith.constant 0 : index
    %274 = vector.load %arg4[%c1, %c0_94, %c0_95] : memref<2x1x32xf32, #tpu.memory_space<vmem>>, vector<1x1x32xf32>
    %275 = vector.shape_cast %274 : vector<1x1x32xf32> to vector<1x32xf32>
    %c1_96 = arith.constant 1 : index
    %c0_97 = arith.constant 0 : index
    %c0_98 = arith.constant 0 : index
    %276 = vector.load %arg5[%c1_96, %c0_97, %c0_98] : memref<2x1x32xf32, #tpu.memory_space<vmem>>, vector<1x1x32xf32>
    %277 = vector.shape_cast %276 : vector<1x1x32xf32> to vector<1x32xf32>
    %cst_99 = arith.constant dense<0.000000e+00> : vector<16xf32>
    %278 = vector.multi_reduction <add>, %273, %cst_99 [1] : vector<16x32xf32> to vector<16xf32>
    %279 = vector.shape_cast %278 : vector<16xf32> to vector<16x1xf32>
    %cst_100 = arith.constant 3.200000e+01 : f32
    %280 = vector.broadcast %cst_100 : f32 to vector<16x1xf32>
    %281 = arith.divf %279, %280 : vector<16x1xf32>
    %282 = vector.broadcast %281 : vector<16x1xf32> to vector<16x32xf32>
    %283 = arith.subf %273, %282 : vector<16x32xf32>
    %284 = arith.mulf %283, %283 : vector<16x32xf32>
    %cst_101 = arith.constant dense<0.000000e+00> : vector<16xf32>
    %285 = vector.multi_reduction <add>, %284, %cst_101 [1] : vector<16x32xf32> to vector<16xf32>
    %286 = vector.shape_cast %285 : vector<16xf32> to vector<16x1xf32>
    %cst_102 = arith.constant 0.0322580636 : f32
    %287 = vector.broadcast %cst_102 : f32 to vector<16x1xf32>
    %288 = arith.mulf %286, %287 : vector<16x1xf32>
    %289 = math.sqrt %288 : vector<16x1xf32>
    %290 = vector.broadcast %275 : vector<1x32xf32> to vector<16x32xf32>
    %291 = arith.mulf %290, %283 : vector<16x32xf32>
    %cst_103 = arith.constant 9.99999997E-7 : f32
    %292 = vector.broadcast %cst_103 : f32 to vector<16x1xf32>
    %293 = arith.addf %289, %292 : vector<16x1xf32>
    %294 = vector.broadcast %293 : vector<16x1xf32> to vector<16x32xf32>
    %295 = arith.divf %291, %294 : vector<16x32xf32>
    %296 = vector.broadcast %277 : vector<1x32xf32> to vector<16x32xf32>
    %297 = arith.addf %295, %296 : vector<16x32xf32>
    %c1_104 = arith.constant 1 : index
    %c0_105 = arith.constant 0 : index
    %c0_106 = arith.constant 0 : index
    %298 = vector.load %arg6[%c1_104, %c0_105, %c0_106] : memref<2x32x96xf32, #tpu.memory_space<vmem>>, vector<1x32x96xf32>
    %299 = vector.shape_cast %298 : vector<1x32x96xf32> to vector<32x96xf32>
    %cst_107 = arith.constant dense<0.000000e+00> : vector<16x96xf32>
    %300 = tpu.matmul %297, %299, %cst_107 {dimension_numbers = #tpu.dot_dimension_numbers<[1], [0], [0], [1], [0, 0, 1, 1], [], []>} : vector<16x32xf32>, vector<32x96xf32>, vector<16x96xf32> -> vector<16x96xf32>
    %c1_108 = arith.constant 1 : index
    %c0_109 = arith.constant 0 : index
    %c0_110 = arith.constant 0 : index
    %301 = vector.load %arg7[%c1_108, %c0_109, %c0_110] : memref<2x1x96xf32, #tpu.memory_space<vmem>>, vector<1x1x96xf32>
    %302 = vector.shape_cast %301 : vector<1x1x96xf32> to vector<1x96xf32>
    %303 = vector.broadcast %302 : vector<1x96xf32> to vector<16x96xf32>
    %304 = arith.addf %300, %303 : vector<16x96xf32>
    %305 = vector.extract_strided_slice %304 {offsets = [0, 0], sizes = [16, 32], strides = [1, 1]} : vector<16x96xf32> to vector<16x32xf32>
    %306 = vector.extract_strided_slice %304 {offsets = [0, 32], sizes = [16, 32], strides = [1, 1]} : vector<16x96xf32> to vector<16x32xf32>
    %307 = vector.extract_strided_slice %304 {offsets = [0, 64], sizes = [16, 32], strides = [1, 1]} : vector<16x96xf32> to vector<16x32xf32>
    %308 = vector.extract_strided_slice %305 {offsets = [0, 0], sizes = [8, 32], strides = [1, 1]} : vector<16x32xf32> to vector<8x32xf32>
    %309 = vector.extract_strided_slice %306 {offsets = [0, 0], sizes = [8, 32], strides = [1, 1]} : vector<16x32xf32> to vector<8x32xf32>
    %310 = tpu.concatenate %309, %309, %309, %309, %309, %309, %309, %309 in 0 : vector<8x32xf32>, vector<8x32xf32>, vector<8x32xf32>, vector<8x32xf32>, vector<8x32xf32>, vector<8x32xf32>, vector<8x32xf32>, vector<8x32xf32> -> vector<64x32xf32>
    %311 = arith.mulf %310, %0 : vector<64x32xf32>
    %312 = vector.extract_strided_slice %307 {offsets = [0, 0], sizes = [8, 32], strides = [1, 1]} : vector<16x32xf32> to vector<8x32xf32>
    %313 = tpu.concatenate %312, %312, %312, %312, %312, %312, %312, %312 in 0 : vector<8x32xf32>, vector<8x32xf32>, vector<8x32xf32>, vector<8x32xf32>, vector<8x32xf32>, vector<8x32xf32>, vector<8x32xf32>, vector<8x32xf32> -> vector<64x32xf32>
    %314 = arith.mulf %313, %0 : vector<64x32xf32>
    %cst_111 = arith.constant dense<0.000000e+00> : vector<8x64xf32>
    %315 = tpu.matmul %308, %311, %cst_111 {dimension_numbers = #tpu.dot_dimension_numbers<[1], [1], [0], [0], [0, 0, 1, 0], [], []>} : vector<8x32xf32>, vector<64x32xf32>, vector<8x64xf32> -> vector<8x64xf32>
    %cst_112 = arith.constant 5.000000e-01 : f32
    %316 = vector.broadcast %cst_112 : f32 to vector<8x64xf32>
    %317 = arith.mulf %315, %316 : vector<8x64xf32>
    %318 = vector.extract_strided_slice %317 {offsets = [0, 0], sizes = [8, 8], strides = [1, 1]} : vector<8x64xf32> to vector<8x8xf32>
    %cst_113 = arith.constant dense<0xFF800000> : vector<8xf32>
    %319 = vector.multi_reduction <maximumf>, %318, %cst_113 [1] : vector<8x8xf32> to vector<8xf32>
    %320 = vector.shape_cast %319 : vector<8xf32> to vector<8x1xf32>
    %321 = vector.broadcast %320 : vector<8x1xf32> to vector<8x8xf32>
    %322 = arith.subf %318, %321 : vector<8x8xf32>
    %323 = math.exp %322 : vector<8x8xf32>
    %cst_114 = arith.constant dense<0.000000e+00> : vector<8xf32>
    %324 = vector.multi_reduction <add>, %323, %cst_114 [1] : vector<8x8xf32> to vector<8xf32>
    %325 = vector.shape_cast %324 : vector<8xf32> to vector<8x1xf32>
    %326 = vector.broadcast %325 : vector<8x1xf32> to vector<8x8xf32>
    %327 = arith.divf %323, %326 : vector<8x8xf32>
    %328 = vector.extract_strided_slice %317 {offsets = [0, 8], sizes = [8, 8], strides = [1, 1]} : vector<8x64xf32> to vector<8x8xf32>
    %cst_115 = arith.constant dense<0xFF800000> : vector<8xf32>
    %329 = vector.multi_reduction <maximumf>, %328, %cst_115 [1] : vector<8x8xf32> to vector<8xf32>
    %330 = vector.shape_cast %329 : vector<8xf32> to vector<8x1xf32>
    %331 = vector.broadcast %330 : vector<8x1xf32> to vector<8x8xf32>
    %332 = arith.subf %328, %331 : vector<8x8xf32>
    %333 = math.exp %332 : vector<8x8xf32>
    %cst_116 = arith.constant dense<0.000000e+00> : vector<8xf32>
    %334 = vector.multi_reduction <add>, %333, %cst_116 [1] : vector<8x8xf32> to vector<8xf32>
    %335 = vector.shape_cast %334 : vector<8xf32> to vector<8x1xf32>
    %336 = vector.broadcast %335 : vector<8x1xf32> to vector<8x8xf32>
    %337 = arith.divf %333, %336 : vector<8x8xf32>
    %338 = vector.extract_strided_slice %317 {offsets = [0, 16], sizes = [8, 8], strides = [1, 1]} : vector<8x64xf32> to vector<8x8xf32>
    %cst_117 = arith.constant dense<0xFF800000> : vector<8xf32>
    %339 = vector.multi_reduction <maximumf>, %338, %cst_117 [1] : vector<8x8xf32> to vector<8xf32>
    %340 = vector.shape_cast %339 : vector<8xf32> to vector<8x1xf32>
    %341 = vector.broadcast %340 : vector<8x1xf32> to vector<8x8xf32>
    %342 = arith.subf %338, %341 : vector<8x8xf32>
    %343 = math.exp %342 : vector<8x8xf32>
    %cst_118 = arith.constant dense<0.000000e+00> : vector<8xf32>
    %344 = vector.multi_reduction <add>, %343, %cst_118 [1] : vector<8x8xf32> to vector<8xf32>
    %345 = vector.shape_cast %344 : vector<8xf32> to vector<8x1xf32>
    %346 = vector.broadcast %345 : vector<8x1xf32> to vector<8x8xf32>
    %347 = arith.divf %343, %346 : vector<8x8xf32>
    %348 = vector.extract_strided_slice %317 {offsets = [0, 24], sizes = [8, 8], strides = [1, 1]} : vector<8x64xf32> to vector<8x8xf32>
    %cst_119 = arith.constant dense<0xFF800000> : vector<8xf32>
    %349 = vector.multi_reduction <maximumf>, %348, %cst_119 [1] : vector<8x8xf32> to vector<8xf32>
    %350 = vector.shape_cast %349 : vector<8xf32> to vector<8x1xf32>
    %351 = vector.broadcast %350 : vector<8x1xf32> to vector<8x8xf32>
    %352 = arith.subf %348, %351 : vector<8x8xf32>
    %353 = math.exp %352 : vector<8x8xf32>
    %cst_120 = arith.constant dense<0.000000e+00> : vector<8xf32>
    %354 = vector.multi_reduction <add>, %353, %cst_120 [1] : vector<8x8xf32> to vector<8xf32>
    %355 = vector.shape_cast %354 : vector<8xf32> to vector<8x1xf32>
    %356 = vector.broadcast %355 : vector<8x1xf32> to vector<8x8xf32>
    %357 = arith.divf %353, %356 : vector<8x8xf32>
    %358 = vector.extract_strided_slice %317 {offsets = [0, 32], sizes = [8, 8], strides = [1, 1]} : vector<8x64xf32> to vector<8x8xf32>
    %cst_121 = arith.constant dense<0xFF800000> : vector<8xf32>
    %359 = vector.multi_reduction <maximumf>, %358, %cst_121 [1] : vector<8x8xf32> to vector<8xf32>
    %360 = vector.shape_cast %359 : vector<8xf32> to vector<8x1xf32>
    %361 = vector.broadcast %360 : vector<8x1xf32> to vector<8x8xf32>
    %362 = arith.subf %358, %361 : vector<8x8xf32>
    %363 = math.exp %362 : vector<8x8xf32>
    %cst_122 = arith.constant dense<0.000000e+00> : vector<8xf32>
    %364 = vector.multi_reduction <add>, %363, %cst_122 [1] : vector<8x8xf32> to vector<8xf32>
    %365 = vector.shape_cast %364 : vector<8xf32> to vector<8x1xf32>
    %366 = vector.broadcast %365 : vector<8x1xf32> to vector<8x8xf32>
    %367 = arith.divf %363, %366 : vector<8x8xf32>
    %368 = vector.extract_strided_slice %317 {offsets = [0, 40], sizes = [8, 8], strides = [1, 1]} : vector<8x64xf32> to vector<8x8xf32>
    %cst_123 = arith.constant dense<0xFF800000> : vector<8xf32>
    %369 = vector.multi_reduction <maximumf>, %368, %cst_123 [1] : vector<8x8xf32> to vector<8xf32>
    %370 = vector.shape_cast %369 : vector<8xf32> to vector<8x1xf32>
    %371 = vector.broadcast %370 : vector<8x1xf32> to vector<8x8xf32>
    %372 = arith.subf %368, %371 : vector<8x8xf32>
    %373 = math.exp %372 : vector<8x8xf32>
    %cst_124 = arith.constant dense<0.000000e+00> : vector<8xf32>
    %374 = vector.multi_reduction <add>, %373, %cst_124 [1] : vector<8x8xf32> to vector<8xf32>
    %375 = vector.shape_cast %374 : vector<8xf32> to vector<8x1xf32>
    %376 = vector.broadcast %375 : vector<8x1xf32> to vector<8x8xf32>
    %377 = arith.divf %373, %376 : vector<8x8xf32>
    %378 = vector.extract_strided_slice %317 {offsets = [0, 48], sizes = [8, 8], strides = [1, 1]} : vector<8x64xf32> to vector<8x8xf32>
    %cst_125 = arith.constant dense<0xFF800000> : vector<8xf32>
    %379 = vector.multi_reduction <maximumf>, %378, %cst_125 [1] : vector<8x8xf32> to vector<8xf32>
    %380 = vector.shape_cast %379 : vector<8xf32> to vector<8x1xf32>
    %381 = vector.broadcast %380 : vector<8x1xf32> to vector<8x8xf32>
    %382 = arith.subf %378, %381 : vector<8x8xf32>
    %383 = math.exp %382 : vector<8x8xf32>
    %cst_126 = arith.constant dense<0.000000e+00> : vector<8xf32>
    %384 = vector.multi_reduction <add>, %383, %cst_126 [1] : vector<8x8xf32> to vector<8xf32>
    %385 = vector.shape_cast %384 : vector<8xf32> to vector<8x1xf32>
    %386 = vector.broadcast %385 : vector<8x1xf32> to vector<8x8xf32>
    %387 = arith.divf %383, %386 : vector<8x8xf32>
    %388 = vector.extract_strided_slice %317 {offsets = [0, 56], sizes = [8, 8], strides = [1, 1]} : vector<8x64xf32> to vector<8x8xf32>
    %cst_127 = arith.constant dense<0xFF800000> : vector<8xf32>
    %389 = vector.multi_reduction <maximumf>, %388, %cst_127 [1] : vector<8x8xf32> to vector<8xf32>
    %390 = vector.shape_cast %389 : vector<8xf32> to vector<8x1xf32>
    %391 = vector.broadcast %390 : vector<8x1xf32> to vector<8x8xf32>
    %392 = arith.subf %388, %391 : vector<8x8xf32>
    %393 = math.exp %392 : vector<8x8xf32>
    %cst_128 = arith.constant dense<0.000000e+00> : vector<8xf32>
    %394 = vector.multi_reduction <add>, %393, %cst_128 [1] : vector<8x8xf32> to vector<8xf32>
    %395 = vector.shape_cast %394 : vector<8xf32> to vector<8x1xf32>
    %396 = vector.broadcast %395 : vector<8x1xf32> to vector<8x8xf32>
    %397 = arith.divf %393, %396 : vector<8x8xf32>
    %398 = tpu.concatenate %327, %337, %347, %357, %367, %377, %387, %397 in 1 : vector<8x8xf32>, vector<8x8xf32>, vector<8x8xf32>, vector<8x8xf32>, vector<8x8xf32>, vector<8x8xf32>, vector<8x8xf32>, vector<8x8xf32> -> vector<8x64xf32>
    %cst_129 = arith.constant dense<0.000000e+00> : vector<8x32xf32>
    %399 = tpu.matmul %398, %314, %cst_129 {dimension_numbers = #tpu.dot_dimension_numbers<[1], [0], [0], [1], [0, 0, 1, 1], [], []>} : vector<8x64xf32>, vector<64x32xf32>, vector<8x32xf32> -> vector<8x32xf32>
    %400 = vector.extract_strided_slice %305 {offsets = [8, 0], sizes = [8, 32], strides = [1, 1]} : vector<16x32xf32> to vector<8x32xf32>
    %401 = vector.extract_strided_slice %306 {offsets = [8, 0], sizes = [8, 32], strides = [1, 1]} : vector<16x32xf32> to vector<8x32xf32>
    %402 = tpu.concatenate %401, %401, %401, %401, %401, %401, %401, %401 in 0 : vector<8x32xf32>, vector<8x32xf32>, vector<8x32xf32>, vector<8x32xf32>, vector<8x32xf32>, vector<8x32xf32>, vector<8x32xf32>, vector<8x32xf32> -> vector<64x32xf32>
    %403 = arith.mulf %402, %0 : vector<64x32xf32>
    %404 = vector.extract_strided_slice %307 {offsets = [8, 0], sizes = [8, 32], strides = [1, 1]} : vector<16x32xf32> to vector<8x32xf32>
    %405 = tpu.concatenate %404, %404, %404, %404, %404, %404, %404, %404 in 0 : vector<8x32xf32>, vector<8x32xf32>, vector<8x32xf32>, vector<8x32xf32>, vector<8x32xf32>, vector<8x32xf32>, vector<8x32xf32>, vector<8x32xf32> -> vector<64x32xf32>
    %406 = arith.mulf %405, %0 : vector<64x32xf32>
    %cst_130 = arith.constant dense<0.000000e+00> : vector<8x64xf32>
    %407 = tpu.matmul %400, %403, %cst_130 {dimension_numbers = #tpu.dot_dimension_numbers<[1], [1], [0], [0], [0, 0, 1, 0], [], []>} : vector<8x32xf32>, vector<64x32xf32>, vector<8x64xf32> -> vector<8x64xf32>
    %cst_131 = arith.constant 5.000000e-01 : f32
    %408 = vector.broadcast %cst_131 : f32 to vector<8x64xf32>
    %409 = arith.mulf %407, %408 : vector<8x64xf32>
    %410 = vector.extract_strided_slice %409 {offsets = [0, 0], sizes = [8, 8], strides = [1, 1]} : vector<8x64xf32> to vector<8x8xf32>
    %cst_132 = arith.constant dense<0xFF800000> : vector<8xf32>
    %411 = vector.multi_reduction <maximumf>, %410, %cst_132 [1] : vector<8x8xf32> to vector<8xf32>
    %412 = vector.shape_cast %411 : vector<8xf32> to vector<8x1xf32>
    %413 = vector.broadcast %412 : vector<8x1xf32> to vector<8x8xf32>
    %414 = arith.subf %410, %413 : vector<8x8xf32>
    %415 = math.exp %414 : vector<8x8xf32>
    %cst_133 = arith.constant dense<0.000000e+00> : vector<8xf32>
    %416 = vector.multi_reduction <add>, %415, %cst_133 [1] : vector<8x8xf32> to vector<8xf32>
    %417 = vector.shape_cast %416 : vector<8xf32> to vector<8x1xf32>
    %418 = vector.broadcast %417 : vector<8x1xf32> to vector<8x8xf32>
    %419 = arith.divf %415, %418 : vector<8x8xf32>
    %420 = vector.extract_strided_slice %409 {offsets = [0, 8], sizes = [8, 8], strides = [1, 1]} : vector<8x64xf32> to vector<8x8xf32>
    %cst_134 = arith.constant dense<0xFF800000> : vector<8xf32>
    %421 = vector.multi_reduction <maximumf>, %420, %cst_134 [1] : vector<8x8xf32> to vector<8xf32>
    %422 = vector.shape_cast %421 : vector<8xf32> to vector<8x1xf32>
    %423 = vector.broadcast %422 : vector<8x1xf32> to vector<8x8xf32>
    %424 = arith.subf %420, %423 : vector<8x8xf32>
    %425 = math.exp %424 : vector<8x8xf32>
    %cst_135 = arith.constant dense<0.000000e+00> : vector<8xf32>
    %426 = vector.multi_reduction <add>, %425, %cst_135 [1] : vector<8x8xf32> to vector<8xf32>
    %427 = vector.shape_cast %426 : vector<8xf32> to vector<8x1xf32>
    %428 = vector.broadcast %427 : vector<8x1xf32> to vector<8x8xf32>
    %429 = arith.divf %425, %428 : vector<8x8xf32>
    %430 = vector.extract_strided_slice %409 {offsets = [0, 16], sizes = [8, 8], strides = [1, 1]} : vector<8x64xf32> to vector<8x8xf32>
    %cst_136 = arith.constant dense<0xFF800000> : vector<8xf32>
    %431 = vector.multi_reduction <maximumf>, %430, %cst_136 [1] : vector<8x8xf32> to vector<8xf32>
    %432 = vector.shape_cast %431 : vector<8xf32> to vector<8x1xf32>
    %433 = vector.broadcast %432 : vector<8x1xf32> to vector<8x8xf32>
    %434 = arith.subf %430, %433 : vector<8x8xf32>
    %435 = math.exp %434 : vector<8x8xf32>
    %cst_137 = arith.constant dense<0.000000e+00> : vector<8xf32>
    %436 = vector.multi_reduction <add>, %435, %cst_137 [1] : vector<8x8xf32> to vector<8xf32>
    %437 = vector.shape_cast %436 : vector<8xf32> to vector<8x1xf32>
    %438 = vector.broadcast %437 : vector<8x1xf32> to vector<8x8xf32>
    %439 = arith.divf %435, %438 : vector<8x8xf32>
    %440 = vector.extract_strided_slice %409 {offsets = [0, 24], sizes = [8, 8], strides = [1, 1]} : vector<8x64xf32> to vector<8x8xf32>
    %cst_138 = arith.constant dense<0xFF800000> : vector<8xf32>
    %441 = vector.multi_reduction <maximumf>, %440, %cst_138 [1] : vector<8x8xf32> to vector<8xf32>
    %442 = vector.shape_cast %441 : vector<8xf32> to vector<8x1xf32>
    %443 = vector.broadcast %442 : vector<8x1xf32> to vector<8x8xf32>
    %444 = arith.subf %440, %443 : vector<8x8xf32>
    %445 = math.exp %444 : vector<8x8xf32>
    %cst_139 = arith.constant dense<0.000000e+00> : vector<8xf32>
    %446 = vector.multi_reduction <add>, %445, %cst_139 [1] : vector<8x8xf32> to vector<8xf32>
    %447 = vector.shape_cast %446 : vector<8xf32> to vector<8x1xf32>
    %448 = vector.broadcast %447 : vector<8x1xf32> to vector<8x8xf32>
    %449 = arith.divf %445, %448 : vector<8x8xf32>
    %450 = vector.extract_strided_slice %409 {offsets = [0, 32], sizes = [8, 8], strides = [1, 1]} : vector<8x64xf32> to vector<8x8xf32>
    %cst_140 = arith.constant dense<0xFF800000> : vector<8xf32>
    %451 = vector.multi_reduction <maximumf>, %450, %cst_140 [1] : vector<8x8xf32> to vector<8xf32>
    %452 = vector.shape_cast %451 : vector<8xf32> to vector<8x1xf32>
    %453 = vector.broadcast %452 : vector<8x1xf32> to vector<8x8xf32>
    %454 = arith.subf %450, %453 : vector<8x8xf32>
    %455 = math.exp %454 : vector<8x8xf32>
    %cst_141 = arith.constant dense<0.000000e+00> : vector<8xf32>
    %456 = vector.multi_reduction <add>, %455, %cst_141 [1] : vector<8x8xf32> to vector<8xf32>
    %457 = vector.shape_cast %456 : vector<8xf32> to vector<8x1xf32>
    %458 = vector.broadcast %457 : vector<8x1xf32> to vector<8x8xf32>
    %459 = arith.divf %455, %458 : vector<8x8xf32>
    %460 = vector.extract_strided_slice %409 {offsets = [0, 40], sizes = [8, 8], strides = [1, 1]} : vector<8x64xf32> to vector<8x8xf32>
    %cst_142 = arith.constant dense<0xFF800000> : vector<8xf32>
    %461 = vector.multi_reduction <maximumf>, %460, %cst_142 [1] : vector<8x8xf32> to vector<8xf32>
    %462 = vector.shape_cast %461 : vector<8xf32> to vector<8x1xf32>
    %463 = vector.broadcast %462 : vector<8x1xf32> to vector<8x8xf32>
    %464 = arith.subf %460, %463 : vector<8x8xf32>
    %465 = math.exp %464 : vector<8x8xf32>
    %cst_143 = arith.constant dense<0.000000e+00> : vector<8xf32>
    %466 = vector.multi_reduction <add>, %465, %cst_143 [1] : vector<8x8xf32> to vector<8xf32>
    %467 = vector.shape_cast %466 : vector<8xf32> to vector<8x1xf32>
    %468 = vector.broadcast %467 : vector<8x1xf32> to vector<8x8xf32>
    %469 = arith.divf %465, %468 : vector<8x8xf32>
    %470 = vector.extract_strided_slice %409 {offsets = [0, 48], sizes = [8, 8], strides = [1, 1]} : vector<8x64xf32> to vector<8x8xf32>
    %cst_144 = arith.constant dense<0xFF800000> : vector<8xf32>
    %471 = vector.multi_reduction <maximumf>, %470, %cst_144 [1] : vector<8x8xf32> to vector<8xf32>
    %472 = vector.shape_cast %471 : vector<8xf32> to vector<8x1xf32>
    %473 = vector.broadcast %472 : vector<8x1xf32> to vector<8x8xf32>
    %474 = arith.subf %470, %473 : vector<8x8xf32>
    %475 = math.exp %474 : vector<8x8xf32>
    %cst_145 = arith.constant dense<0.000000e+00> : vector<8xf32>
    %476 = vector.multi_reduction <add>, %475, %cst_145 [1] : vector<8x8xf32> to vector<8xf32>
    %477 = vector.shape_cast %476 : vector<8xf32> to vector<8x1xf32>
    %478 = vector.broadcast %477 : vector<8x1xf32> to vector<8x8xf32>
    %479 = arith.divf %475, %478 : vector<8x8xf32>
    %480 = vector.extract_strided_slice %409 {offsets = [0, 56], sizes = [8, 8], strides = [1, 1]} : vector<8x64xf32> to vector<8x8xf32>
    %cst_146 = arith.constant dense<0xFF800000> : vector<8xf32>
    %481 = vector.multi_reduction <maximumf>, %480, %cst_146 [1] : vector<8x8xf32> to vector<8xf32>
    %482 = vector.shape_cast %481 : vector<8xf32> to vector<8x1xf32>
    %483 = vector.broadcast %482 : vector<8x1xf32> to vector<8x8xf32>
    %484 = arith.subf %480, %483 : vector<8x8xf32>
    %485 = math.exp %484 : vector<8x8xf32>
    %cst_147 = arith.constant dense<0.000000e+00> : vector<8xf32>
    %486 = vector.multi_reduction <add>, %485, %cst_147 [1] : vector<8x8xf32> to vector<8xf32>
    %487 = vector.shape_cast %486 : vector<8xf32> to vector<8x1xf32>
    %488 = vector.broadcast %487 : vector<8x1xf32> to vector<8x8xf32>
    %489 = arith.divf %485, %488 : vector<8x8xf32>
    %490 = tpu.concatenate %419, %429, %439, %449, %459, %469, %479, %489 in 1 : vector<8x8xf32>, vector<8x8xf32>, vector<8x8xf32>, vector<8x8xf32>, vector<8x8xf32>, vector<8x8xf32>, vector<8x8xf32>, vector<8x8xf32> -> vector<8x64xf32>
    %cst_148 = arith.constant dense<0.000000e+00> : vector<8x32xf32>
    %491 = tpu.matmul %490, %406, %cst_148 {dimension_numbers = #tpu.dot_dimension_numbers<[1], [0], [0], [1], [0, 0, 1, 1], [], []>} : vector<8x64xf32>, vector<64x32xf32>, vector<8x32xf32> -> vector<8x32xf32>
    %492 = tpu.concatenate %399, %491 in 0 : vector<8x32xf32>, vector<8x32xf32> -> vector<16x32xf32>
    %c1_149 = arith.constant 1 : index
    %c0_150 = arith.constant 0 : index
    %c0_151 = arith.constant 0 : index
    %493 = vector.load %arg8[%c1_149, %c0_150, %c0_151] : memref<2x32x32xf32, #tpu.memory_space<vmem>>, vector<1x32x32xf32>
    %494 = vector.shape_cast %493 : vector<1x32x32xf32> to vector<32x32xf32>
    %cst_152 = arith.constant dense<0.000000e+00> : vector<16x32xf32>
    %495 = tpu.matmul %492, %494, %cst_152 {dimension_numbers = #tpu.dot_dimension_numbers<[1], [0], [0], [1], [0, 0, 1, 1], [], []>} : vector<16x32xf32>, vector<32x32xf32>, vector<16x32xf32> -> vector<16x32xf32>
    %496 = arith.addf %273, %495 : vector<16x32xf32>
    %c1_153 = arith.constant 1 : index
    %c0_154 = arith.constant 0 : index
    %c0_155 = arith.constant 0 : index
    %497 = vector.load %arg9[%c1_153, %c0_154, %c0_155] : memref<2x1x32xf32, #tpu.memory_space<vmem>>, vector<1x1x32xf32>
    %498 = vector.shape_cast %497 : vector<1x1x32xf32> to vector<1x32xf32>
    %499 = vector.broadcast %498 : vector<1x32xf32> to vector<16x32xf32>
    %500 = arith.addf %496, %499 : vector<16x32xf32>
    %c1_156 = arith.constant 1 : index
    %c0_157 = arith.constant 0 : index
    %c0_158 = arith.constant 0 : index
    %501 = vector.load %arg10[%c1_156, %c0_157, %c0_158] : memref<2x1x32xf32, #tpu.memory_space<vmem>>, vector<1x1x32xf32>
    %502 = vector.shape_cast %501 : vector<1x1x32xf32> to vector<1x32xf32>
    %c1_159 = arith.constant 1 : index
    %c0_160 = arith.constant 0 : index
    %c0_161 = arith.constant 0 : index
    %503 = vector.load %arg11[%c1_159, %c0_160, %c0_161] : memref<2x1x32xf32, #tpu.memory_space<vmem>>, vector<1x1x32xf32>
    %504 = vector.shape_cast %503 : vector<1x1x32xf32> to vector<1x32xf32>
    %cst_162 = arith.constant dense<0.000000e+00> : vector<16xf32>
    %505 = vector.multi_reduction <add>, %500, %cst_162 [1] : vector<16x32xf32> to vector<16xf32>
    %506 = vector.shape_cast %505 : vector<16xf32> to vector<16x1xf32>
    %cst_163 = arith.constant 3.200000e+01 : f32
    %507 = vector.broadcast %cst_163 : f32 to vector<16x1xf32>
    %508 = arith.divf %506, %507 : vector<16x1xf32>
    %509 = vector.broadcast %508 : vector<16x1xf32> to vector<16x32xf32>
    %510 = arith.subf %500, %509 : vector<16x32xf32>
    %511 = arith.mulf %510, %510 : vector<16x32xf32>
    %cst_164 = arith.constant dense<0.000000e+00> : vector<16xf32>
    %512 = vector.multi_reduction <add>, %511, %cst_164 [1] : vector<16x32xf32> to vector<16xf32>
    %513 = vector.shape_cast %512 : vector<16xf32> to vector<16x1xf32>
    %cst_165 = arith.constant 0.0322580636 : f32
    %514 = vector.broadcast %cst_165 : f32 to vector<16x1xf32>
    %515 = arith.mulf %513, %514 : vector<16x1xf32>
    %516 = math.sqrt %515 : vector<16x1xf32>
    %517 = vector.broadcast %502 : vector<1x32xf32> to vector<16x32xf32>
    %518 = arith.mulf %517, %510 : vector<16x32xf32>
    %cst_166 = arith.constant 9.99999997E-7 : f32
    %519 = vector.broadcast %cst_166 : f32 to vector<16x1xf32>
    %520 = arith.addf %516, %519 : vector<16x1xf32>
    %521 = vector.broadcast %520 : vector<16x1xf32> to vector<16x32xf32>
    %522 = arith.divf %518, %521 : vector<16x32xf32>
    %523 = vector.broadcast %504 : vector<1x32xf32> to vector<16x32xf32>
    %524 = arith.addf %522, %523 : vector<16x32xf32>
    %c1_167 = arith.constant 1 : index
    %c0_168 = arith.constant 0 : index
    %c0_169 = arith.constant 0 : index
    %525 = vector.load %arg12[%c1_167, %c0_168, %c0_169] : memref<2x32x1024xf32, #tpu.memory_space<vmem>>, vector<1x32x1024xf32>
    %526 = vector.shape_cast %525 : vector<1x32x1024xf32> to vector<32x1024xf32>
    %cst_170 = arith.constant dense<0.000000e+00> : vector<16x1024xf32>
    %527 = tpu.matmul %524, %526, %cst_170 {dimension_numbers = #tpu.dot_dimension_numbers<[1], [0], [0], [1], [0, 0, 1, 1], [], []>} : vector<16x32xf32>, vector<32x1024xf32>, vector<16x1024xf32> -> vector<16x1024xf32>
    %c1_171 = arith.constant 1 : index
    %c0_172 = arith.constant 0 : index
    %c0_173 = arith.constant 0 : index
    %528 = vector.load %arg13[%c1_171, %c0_172, %c0_173] : memref<2x1x1024xf32, #tpu.memory_space<vmem>>, vector<1x1x1024xf32>
    %529 = vector.shape_cast %528 : vector<1x1x1024xf32> to vector<1x1024xf32>
    %530 = vector.broadcast %529 : vector<1x1024xf32> to vector<16x1024xf32>
    %531 = arith.addf %527, %530 : vector<16x1024xf32>
    %cst_174 = arith.constant 0.000000e+00 : f32
    %532 = vector.broadcast %cst_174 : f32 to vector<16x1024xf32>
    %533 = arith.maximumf %531, %532 : vector<16x1024xf32>
    %c1_175 = arith.constant 1 : index
    %c0_176 = arith.constant 0 : index
    %c0_177 = arith.constant 0 : index
    %534 = vector.load %arg14[%c1_175, %c0_176, %c0_177] : memref<2x1024x32xf32, #tpu.memory_space<vmem>>, vector<1x1024x32xf32>
    %535 = vector.shape_cast %534 : vector<1x1024x32xf32> to vector<1024x32xf32>
    %cst_178 = arith.constant dense<0.000000e+00> : vector<16x32xf32>
    %536 = tpu.matmul %533, %535, %cst_178 {dimension_numbers = #tpu.dot_dimension_numbers<[1], [0], [0], [1], [0, 0, 1, 1], [], []>} : vector<16x1024xf32>, vector<1024x32xf32>, vector<16x32xf32> -> vector<16x32xf32>
    %537 = arith.addf %500, %536 : vector<16x32xf32>
    %c1_179 = arith.constant 1 : index
    %c0_180 = arith.constant 0 : index
    %c0_181 = arith.constant 0 : index
    %538 = vector.load %arg15[%c1_179, %c0_180, %c0_181] : memref<2x1x32xf32, #tpu.memory_space<vmem>>, vector<1x1x32xf32>
    %539 = vector.shape_cast %538 : vector<1x1x32xf32> to vector<1x32xf32>
    %540 = vector.broadcast %539 : vector<1x32xf32> to vector<16x32xf32>
    %541 = arith.addf %537, %540 : vector<16x32xf32>
    %c0_182 = arith.constant 0 : index
    %c0_183 = arith.constant 0 : index
    %542 = vector.load %arg16[%c0_182, %c0_183] : memref<1x32xf32, #tpu.memory_space<vmem>>, vector<1x32xf32>
    %c0_184 = arith.constant 0 : index
    %c0_185 = arith.constant 0 : index
    %543 = vector.load %arg17[%c0_184, %c0_185] : memref<1x32xf32, #tpu.memory_space<vmem>>, vector<1x32xf32>
    %cst_186 = arith.constant dense<0.000000e+00> : vector<16xf32>
    %544 = vector.multi_reduction <add>, %541, %cst_186 [1] : vector<16x32xf32> to vector<16xf32>
    %545 = vector.shape_cast %544 : vector<16xf32> to vector<16x1xf32>
    %cst_187 = arith.constant 3.200000e+01 : f32
    %546 = vector.broadcast %cst_187 : f32 to vector<16x1xf32>
    %547 = arith.divf %545, %546 : vector<16x1xf32>
    %548 = vector.broadcast %547 : vector<16x1xf32> to vector<16x32xf32>
    %549 = arith.subf %541, %548 : vector<16x32xf32>
    %550 = arith.mulf %549, %549 : vector<16x32xf32>
    %cst_188 = arith.constant dense<0.000000e+00> : vector<16xf32>
    %551 = vector.multi_reduction <add>, %550, %cst_188 [1] : vector<16x32xf32> to vector<16xf32>
    %552 = vector.shape_cast %551 : vector<16xf32> to vector<16x1xf32>
    %cst_189 = arith.constant 0.0322580636 : f32
    %553 = vector.broadcast %cst_189 : f32 to vector<16x1xf32>
    %554 = arith.mulf %552, %553 : vector<16x1xf32>
    %555 = math.sqrt %554 : vector<16x1xf32>
    %556 = vector.broadcast %542 : vector<1x32xf32> to vector<16x32xf32>
    %557 = arith.mulf %556, %549 : vector<16x32xf32>
    %cst_190 = arith.constant 9.99999997E-7 : f32
    %558 = vector.broadcast %cst_190 : f32 to vector<16x1xf32>
    %559 = arith.addf %555, %558 : vector<16x1xf32>
    %560 = vector.broadcast %559 : vector<16x1xf32> to vector<16x32xf32>
    %561 = arith.divf %557, %560 : vector<16x32xf32>
    %562 = vector.broadcast %543 : vector<1x32xf32> to vector<16x32xf32>
    %563 = arith.addf %561, %562 : vector<16x32xf32>
    %c0_191 = arith.constant 0 : index
    %c0_192 = arith.constant 0 : index
    %564 = vector.load %arg18[%c0_191, %c0_192] : memref<16x32xf32, #tpu.memory_space<vmem>>, vector<16x32xf32>
    tpu.vector_store %arg18[%c0_191, %c0_192], %563 {strides = array<i32>} : memref<16x32xf32, #tpu.memory_space<vmem>>, vector<16x32xf32>,
    return
  }
  func.func @transform_0(%arg0: i32) -> (i32, i32) {
    %c0_i32 = arith.constant 0 : i32
    %c0_i32_0 = arith.constant 0 : i32
    return %arg0, %c0_i32 : i32, i32
  }
  func.func @transform_1(%arg0: i32) -> (i32, i32) {
    %c0_i32 = arith.constant 0 : i32
    %c0_i32_0 = arith.constant 0 : i32
    %c0_i32_1 = arith.constant 0 : i32
    return %c0_i32, %c0_i32_0 : i32, i32
  }
  func.func @transform_2(%arg0: i32) -> (i32, i32) {
    %c0_i32 = arith.constant 0 : i32
    %c0_i32_0 = arith.constant 0 : i32
    %c0_i32_1 = arith.constant 0 : i32
    return %c0_i32, %c0_i32_0 : i32, i32
  }
  func.func @transform_3(%arg0: i32) -> (i32, i32, i32) {
    %c0_i32 = arith.constant 0 : i32
    %c0_i32_0 = arith.constant 0 : i32
    %c0_i32_1 = arith.constant 0 : i32
    %c0_i32_2 = arith.constant 0 : i32
    return %c0_i32, %c0_i32_0, %c0_i32_1 : i32, i32, i32
  }
  func.func @transform_4(%arg0: i32) -> (i32, i32, i32) {
    %c0_i32 = arith.constant 0 : i32
    %c0_i32_0 = arith.constant 0 : i32
    %c0_i32_1 = arith.constant 0 : i32
    %c0_i32_2 = arith.constant 0 : i32
    return %c0_i32, %c0_i32_0, %c0_i32_1 : i32, i32, i32
  }
  func.func @transform_5(%arg0: i32) -> (i32, i32, i32) {
    %c0_i32 = arith.constant 0 : i32
    %c0_i32_0 = arith.constant 0 : i32
    %c0_i32_1 = arith.constant 0 : i32
    %c0_i32_2 = arith.constant 0 : i32
    return %c0_i32, %c0_i32_0, %c0_i32_1 : i32, i32, i32
  }
  func.func @transform_6(%arg0: i32) -> (i32, i32, i32) {
    %c0_i32 = arith.constant 0 : i32
    %c0_i32_0 = arith.constant 0 : i32
    %c0_i32_1 = arith.constant 0 : i32
    %c0_i32_2 = arith.constant 0 : i32
    return %c0_i32, %c0_i32_0, %c0_i32_1 : i32, i32, i32
  }
  func.func @transform_7(%arg0: i32) -> (i32, i32, i32) {
    %c0_i32 = arith.constant 0 : i32
    %c0_i32_0 = arith.constant 0 : i32
    %c0_i32_1 = arith.constant 0 : i32
    %c0_i32_2 = arith.constant 0 : i32
    return %c0_i32, %c0_i32_0, %c0_i32_1 : i32, i32, i32
  }
  func.func @transform_8(%arg0: i32) -> (i32, i32, i32) {
    %c0_i32 = arith.constant 0 : i32
    %c0_i32_0 = arith.constant 0 : i32
    %c0_i32_1 = arith.constant 0 : i32
    %c0_i32_2 = arith.constant 0 : i32
    return %c0_i32, %c0_i32_0, %c0_i32_1 : i32, i32, i32
  }
  func.func @transform_9(%arg0: i32) -> (i32, i32, i32) {
    %c0_i32 = arith.constant 0 : i32
    %c0_i32_0 = arith.constant 0 : i32
    %c0_i32_1 = arith.constant 0 : i32
    %c0_i32_2 = arith.constant 0 : i32
    return %c0_i32, %c0_i32_0, %c0_i32_1 : i32, i32, i32
  }
  func.func @transform_10(%arg0: i32) -> (i32, i32, i32) {
    %c0_i32 = arith.constant 0 : i32
    %c0_i32_0 = arith.constant 0 : i32
    %c0_i32_1 = arith.constant 0 : i32
    %c0_i32_2 = arith.constant 0 : i32
    return %c0_i32, %c0_i32_0, %c0_i32_1 : i32, i32, i32
  }
  func.func @transform_11(%arg0: i32) -> (i32, i32, i32) {
    %c0_i32 = arith.constant 0 : i32
    %c0_i32_0 = arith.constant 0 : i32
    %c0_i32_1 = arith.constant 0 : i32
    %c0_i32_2 = arith.constant 0 : i32
    return %c0_i32, %c0_i32_0, %c0_i32_1 : i32, i32, i32
  }
  func.func @transform_12(%arg0: i32) -> (i32, i32, i32) {
    %c0_i32 = arith.constant 0 : i32
    %c0_i32_0 = arith.constant 0 : i32
    %c0_i32_1 = arith.constant 0 : i32
    %c0_i32_2 = arith.constant 0 : i32
    return %c0_i32, %c0_i32_0, %c0_i32_1 : i32, i32, i32
  }
  func.func @transform_13(%arg0: i32) -> (i32, i32, i32) {
    %c0_i32 = arith.constant 0 : i32
    %c0_i32_0 = arith.constant 0 : i32
    %c0_i32_1 = arith.constant 0 : i32
    %c0_i32_2 = arith.constant 0 : i32
    return %c0_i32, %c0_i32_0, %c0_i32_1 : i32, i32, i32
  }
  func.func @transform_14(%arg0: i32) -> (i32, i32, i32) {
    %c0_i32 = arith.constant 0 : i32
    %c0_i32_0 = arith.constant 0 : i32
    %c0_i32_1 = arith.constant 0 : i32
    %c0_i32_2 = arith.constant 0 : i32
    return %c0_i32, %c0_i32_0, %c0_i32_1 : i32, i32, i32
  }
  func.func @transform_15(%arg0: i32) -> (i32, i32) {
    %c0_i32 = arith.constant 0 : i32
    %c0_i32_0 = arith.constant 0 : i32
    %c0_i32_1 = arith.constant 0 : i32
    return %c0_i32, %c0_i32_0 : i32, i32
  }
  func.func @transform_16(%arg0: i32) -> (i32, i32) {
    %c0_i32 = arith.constant 0 : i32
    %c0_i32_0 = arith.constant 0 : i32
    %c0_i32_1 = arith.constant 0 : i32
    return %c0_i32, %c0_i32_0 : i32, i32
  }
  func.func @transform_17(%arg0: i32) -> (i32, i32) {
    %c0_i32 = arith.constant 0 : i32
    %c0_i32_0 = arith.constant 0 : i32
    return %arg0, %c0_i32 : i32, i32
  }
}

</mosaic_0001>

<llo_original>
// kernel: tpu_custom_call.1
$region0: #{tpu_custom_call.1}
  #allocation0 [shape = 'u32[]', space=smem, size = 0x4, offset = 0x4, fixed_abs, tag = 'smem constant byte address 0x4 - core index']
  #allocation1 [shape = 'u32[144,128]{1,0:T(1,128)}', space=vmem, size = 0x12000, scoped, tag = 'internal scratch']
  %s0 = inlined_call_operand.vmem [shape: f32[16,32], index: 0, kind: input, shape index: {}]
  %s1 = inlined_call_operand.vmem [shape: f32[16,32], index: 1, kind: input, shape index: {}]
  %s2 = inlined_call_operand.vmem [shape: f32[64,32], index: 2, kind: input, shape index: {}]
  %s3 = inlined_call_operand.vmem [shape: f32[2,1,32], index: 3, kind: input, shape index: {}]
  %s4 = inlined_call_operand.vmem [shape: f32[2,1,32], index: 4, kind: input, shape index: {}]
  %s5 = inlined_call_operand.vmem [shape: f32[2,32,96], index: 5, kind: input, shape index: {}]
  %s6 = inlined_call_operand.vmem [shape: f32[2,1,96], index: 6, kind: input, shape index: {}]
  %s7 = inlined_call_operand.vmem [shape: f32[2,32,32], index: 7, kind: input, shape index: {}]
  %s8 = inlined_call_operand.vmem [shape: f32[2,1,32], index: 8, kind: input, shape index: {}]
  %s9 = inlined_call_operand.vmem [shape: f32[2,1,32], index: 9, kind: input, shape index: {}]
  %s10 = inlined_call_operand.vmem [shape: f32[2,1,32], index: 10, kind: input, shape index: {}]
  %s11 = inlined_call_operand.vmem [shape: f32[2,32,1024], index: 11, kind: input, shape index: {}]
  %s12 = inlined_call_operand.vmem [shape: f32[2,1,1024], index: 12, kind: input, shape index: {}]
  %s13 = inlined_call_operand.vmem [shape: f32[2,1024,32], index: 13, kind: input, shape index: {}]
  %s14 = inlined_call_operand.vmem [shape: f32[2,1,32], index: 14, kind: input, shape index: {}]
  %s15 = inlined_call_operand.vmem [shape: f32[1,32], index: 15, kind: input, shape index: {}]
  %s16 = inlined_call_operand.vmem [shape: f32[1,32], index: 16, kind: input, shape index: {}]
  %s17 = inlined_call_operand.hbm [shape: f32[16,32], index: 17, kind: output, shape index: {}]
  %s18 = sld [smem:[#allocation0]]
  $region78: #{tpu_custom_call.1} parent=0
    _
  %s20 = ssub.s32 1, %s18
  %s21 = scalar_select 0, %s20, %s18
  $region1: #{tpu_custom_call.1} parent=0
    #allocation2 [shape = 'u8[8192]{0}', space=vmem, size = 0x2000, scoped, tag = 'output window, operand 0, single buffered']
    #allocation3 [shape = 's32[1]{0}', space=sflag, size = 0x4, scoped, tag = 'scoped memory for tpu_custom_call.1']
    %22 = vsyncpa [#allocation3], 0
    // Predicated region
    $region2: #{tpu_custom_call.1} parent=1 // pred_check
      _
    $region3: #{tpu_custom_call.1} parent=1 // pred_check_branch
      %24 = sbr.rel (0) target = $region5
    $region4: #{tpu_custom_call.1} parent=1 // pred_region
      _
    $region5: #{tpu_custom_call.1} parent=1 // pred_fallthru
      _
    // Predicated region
    $region6: #{tpu_custom_call.1} parent=1 // pred_check
      _
    $region7: #{tpu_custom_call.1} parent=1 // pred_check_branch
      %26 = sbr.rel (0) target = $region9
    $region8: #{tpu_custom_call.1} parent=1 // pred_region
      _
    $region9: #{tpu_custom_call.1} parent=1 // pred_fallthru
      _
    // Predicated region
    $region10: #{tpu_custom_call.1} parent=1 // pred_check
      _
    $region11: #{tpu_custom_call.1} parent=1 // pred_check_branch
      %28 = sbr.rel (0) target = $region13
    $region12: #{tpu_custom_call.1} parent=1 // pred_region
      _
    $region13: #{tpu_custom_call.1} parent=1 // pred_fallthru
      _
    // Predicated region
    $region14: #{tpu_custom_call.1} parent=1 // pred_check
      _
    $region15: #{tpu_custom_call.1} parent=1 // pred_check_branch
      %30 = sbr.rel (0) target = $region17
    $region16: #{tpu_custom_call.1} parent=1 // pred_region
      _
    $region17: #{tpu_custom_call.1} parent=1 // pred_fallthru
      _
    // Predicated region
    $region18: #{tpu_custom_call.1} parent=1 // pred_check
      _
    $region19: #{tpu_custom_call.1} parent=1 // pred_check_branch
      %32 = sbr.rel (0) target = $region21
    $region20: #{tpu_custom_call.1} parent=1 // pred_region
      _
    $region21: #{tpu_custom_call.1} parent=1 // pred_fallthru
      _
    // Predicated region
    $region22: #{tpu_custom_call.1} parent=1 // pred_check
      _
    $region23: #{tpu_custom_call.1} parent=1 // pred_check_branch
      %34 = sbr.rel (0) target = $region25
    $region24: #{tpu_custom_call.1} parent=1 // pred_region
      _
    $region25: #{tpu_custom_call.1} parent=1 // pred_fallthru
      _
    // Predicated region
    $region26: #{tpu_custom_call.1} parent=1 // pred_check
      _
    $region27: #{tpu_custom_call.1} parent=1 // pred_check_branch
      %36 = sbr.rel (0) target = $region29
    $region28: #{tpu_custom_call.1} parent=1 // pred_region
      _
    $region29: #{tpu_custom_call.1} parent=1 // pred_fallthru
      _
    // Predicated region
    $region30: #{tpu_custom_call.1} parent=1 // pred_check
      _
    $region31: #{tpu_custom_call.1} parent=1 // pred_check_branch
      %38 = sbr.rel (0) target = $region33
    $region32: #{tpu_custom_call.1} parent=1 // pred_region
      _
    $region33: #{tpu_custom_call.1} parent=1 // pred_fallthru
      _
    // Predicated region
    $region34: #{tpu_custom_call.1} parent=1 // pred_check
      _
    $region35: #{tpu_custom_call.1} parent=1 // pred_check_branch
      %40 = sbr.rel (0) target = $region37
    $region36: #{tpu_custom_call.1} parent=1 // pred_region
      _
    $region37: #{tpu_custom_call.1} parent=1 // pred_fallthru
      _
    // Predicated region
    $region38: #{tpu_custom_call.1} parent=1 // pred_check
      _
    $region39: #{tpu_custom_call.1} parent=1 // pred_check_branch
      %42 = sbr.rel (0) target = $region41
    $region40: #{tpu_custom_call.1} parent=1 // pred_region
      _
    $region41: #{tpu_custom_call.1} parent=1 // pred_fallthru
      _
    // Predicated region
    $region42: #{tpu_custom_call.1} parent=1 // pred_check
      _
    $region43: #{tpu_custom_call.1} parent=1 // pred_check_branch
      %44 = sbr.rel (0) target = $region45
    $region44: #{tpu_custom_call.1} parent=1 // pred_region
      _
    $region45: #{tpu_custom_call.1} parent=1 // pred_fallthru
      _
    // Predicated region
    $region46: #{tpu_custom_call.1} parent=1 // pred_check
      _
    $region47: #{tpu_custom_call.1} parent=1 // pred_check_branch
      %46 = sbr.rel (0) target = $region49
    $region48: #{tpu_custom_call.1} parent=1 // pred_region
      _
    $region49: #{tpu_custom_call.1} parent=1 // pred_fallthru
      _
    // Predicated region
    $region50: #{tpu_custom_call.1} parent=1 // pred_check
      _
    $region51: #{tpu_custom_call.1} parent=1 // pred_check_branch
      %48 = sbr.rel (0) target = $region53
    $region52: #{tpu_custom_call.1} parent=1 // pred_region
      _
    $region53: #{tpu_custom_call.1} parent=1 // pred_fallthru
      _
    // Predicated region
    $region54: #{tpu_custom_call.1} parent=1 // pred_check
      _
    $region55: #{tpu_custom_call.1} parent=1 // pred_check_branch
      %50 = sbr.rel (0) target = $region57
    $region56: #{tpu_custom_call.1} parent=1 // pred_region
      _
    $region57: #{tpu_custom_call.1} parent=1 // pred_fallthru
      _
    // Predicated region
    $region58: #{tpu_custom_call.1} parent=1 // pred_check
      _
    $region59: #{tpu_custom_call.1} parent=1 // pred_check_branch
      %52 = sbr.rel (0) target = $region61
    $region60: #{tpu_custom_call.1} parent=1 // pred_region
      _
    $region61: #{tpu_custom_call.1} parent=1 // pred_fallthru
      _
    // Predicated region
    $region62: #{tpu_custom_call.1} parent=1 // pred_check
      _
    $region63: #{tpu_custom_call.1} parent=1 // pred_check_branch
      %54 = sbr.rel (0) target = $region65
    $region64: #{tpu_custom_call.1} parent=1 // pred_region
      _
    $region65: #{tpu_custom_call.1} parent=1 // pred_fallthru
      _
    // Predicated region
    $region66: #{tpu_custom_call.1} parent=1 // pred_check
      _
    $region67: #{tpu_custom_call.1} parent=1 // pred_check_branch
      %56 = sbr.rel (0) target = $region69
    $region68: #{tpu_custom_call.1} parent=1 // pred_region
      _
    $region69: #{tpu_custom_call.1} parent=1 // pred_fallthru
      _
    %v57 = vld [vmem:[%s2] sm:$0xff]
    %v58 = vld [vmem:[%s2 + $0x8] sm:$0xff]
    %v59 = vld [vmem:[%s2 + $0x10] sm:$0xff]
    %v60 = vld [vmem:[%s2 + $0x18] sm:$0xff]
    %v61 = vld [vmem:[%s2 + $0x20] sm:$0xff]
    %v62 = vld [vmem:[%s2 + $0x28] sm:$0xff]
    %v63 = vld [vmem:[%s2 + $0x30] sm:$0xff]
    %v64 = vld [vmem:[%s2 + $0x38] sm:$0xff]
    %v65 = vld [vmem:[%s0] sm:$0xff]
    %v66 = vld [vmem:[%s0 + $0x8] sm:$0xff]
    %v67 = vmul.f32 %v65, 5.656854
    %v68 = vmul.f32 %v66, 5.656854
    %v69 = vld [vmem:[%s1] sm:$0xff]
    %v70 = vld [vmem:[%s1 + $0x8] sm:$0xff]
    %v71 = vadd.f32 %v67, %v69
    %v72 = vadd.f32 %v68, %v70
    %v73 = vld [vmem:[%s3] sm:$0x1]
    %v74 = vld [vmem:[%s4] sm:$0x1]
    %vm75 = vcmask 261120
    %v76 = vsel %vm75, %v71, 0.0
    %77 = vadd.xlane.f32.xlu0 %v76
    %v78 = vpop.xlane.xlu0 %77
    %v79 = vsel %vm75, %v72, 0.0
    %80 = vadd.xlane.f32.xlu0 %v79
    %v81 = vpop.xlane.xlu0 %80
    %v82 = vrcp.pop 32.0
    %v83 = vmul.f32 %v78, %v82
    %v84 = vmul.f32 %v81, %v82
    %v85 = vsub.f32 %v71, %v83
    %v86 = vsub.f32 %v72, %v84
    %v87 = vmul.f32 %v85, %v85
    %v88 = vmul.f32 %v86, %v86
    %v89 = vsel %vm75, %v87, 0.0
    %90 = vadd.xlane.f32.xlu0 %v89
    %v91 = vpop.xlane.xlu0 %90
    %v92 = vsel %vm75, %v88, 0.0
    %93 = vadd.xlane.f32.xlu0 %v92
    %v94 = vpop.xlane.xlu0 %93
    %v95 = vmul.f32 %v91, 0.032258064
    %v96 = vmul.f32 %v94, 0.032258064
    %v97 = vrsqrt.pop %v95
    %v98 = vmul.f32 %v95, %v97
    %vm99 = vcmp.eq.f32.partialorder %v95, inf
    %v100 = vsel %vm99, %v95, %v98
    %vm101 = vcmp.eq.f32.partialorder %v95, 0.0
    %v102 = vand.u32 %v95, 2147483648
    %v103 = vsel %vm101, %v102, %v100
    %v104 = vrsqrt.pop %v96
    %v105 = vmul.f32 %v96, %v104
    %vm106 = vcmp.eq.f32.partialorder %v96, inf
    %v107 = vsel %vm106, %v96, %v105
    %vm108 = vcmp.eq.f32.partialorder %v96, 0.0
    %v109 = vand.u32 %v96, 2147483648
    %v110 = vsel %vm108, %v109, %v107
    %v112 = vlaneseq
    %v113 = vshrl.u32 %v112, 7
    %v114 = vsub.s32 0, %v113
    %v115 = vrot.slane %v73, %v114
    %v117 = vmul.f32 %v115, %v85
    %v118 = vmul.f32 %v115, %v86
    %v119 = vadd.f32 %v103, 1e-06
    %v120 = vadd.f32 %v110, 1e-06
    %v121 = vrcp.pop %v119
    %v122 = vmul.f32 %v117, %v121
    %v123 = vrcp.pop %v120
    %v124 = vmul.f32 %v118, %v123
    %v126 = vlaneseq
    %v127 = vshrl.u32 %v126, 7
    %v128 = vsub.s32 0, %v127
    %v129 = vrot.slane %v74, %v128
    %v131 = vadd.f32 %v122, %v129
    %v132 = vadd.f32 %v124, %v129
    %v133 = vld [vmem:[%s5] sm:$0xff]
    %v134 = vld [vmem:[%s5 + $0x8] sm:$0xff]
    %v135 = vld [vmem:[%s5 + $0x10] sm:$0xff]
    %v136 = vld [vmem:[%s5 + $0x18] sm:$0xff]
    %v137 = vld [vmem:[%s6] sm:$0x1]
    %v139 = vlaneseq
    %v140 = vshrl.u32 %v139, 7
    %v141 = vsub.s32 0, %v140
    %v142 = vrot.slane %v137, %v141
    %v145 = vsel %vm75, %v131, 0
    %v148 = vsel %vm75, %v132, 0
    %150 = vmatprep.subr.mxu0 0.0
    %151 = vmatpush1.msra.mxu0 %v133
    %152 = vmatprep.subr.mxu0 0.0
    %153 = vmatpush1.msra.mxu0 %v134
    %154 = vmatprep.subr.mxu0 0.0
    %155 = vmatpush1.msra.mxu0 %v135
    %156 = vmatprep.subr.mxu0 0.0
    %157 = vmatpush1.msra.mxu0 %v136
    %158 = vmatprep.subr.mxu0 0.0
    %159 = vmatpush1.msra.mxu0 0.0
    %160 = vmatprep.subr.mxu0 0.0
    %161 = vmatpush1.msra.mxu0 0.0
    %162 = vmatprep.subr.mxu0 0.0
    %163 = vmatpush1.msra.mxu0 0.0
    %164 = vmatprep.subr.mxu0 0.0
    %165 = vmatpush1.msra.mxu0 0.0
    %166 = vmatprep.subr.mxu0 0.0
    %167 = vmatpush1.msra.mxu0 0.0
    %168 = vmatprep.subr.mxu0 0.0
    %169 = vmatpush1.msra.mxu0 0.0
    %170 = vmatprep.subr.mxu0 0.0
    %171 = vmatpush1.msra.mxu0 0.0
    %172 = vmatprep.subr.mxu0 0.0
    %173 = vmatpush1.msra.mxu0 0.0
    %174 = vmatprep.subr.mxu0 0.0
    %175 = vmatpush1.msra.mxu0 0.0
    %176 = vmatprep.subr.mxu0 0.0
    %177 = vmatpush1.msra.mxu0 0.0
    %178 = vmatprep.subr.mxu0 0.0
    %179 = vmatpush1.msra.mxu0 0.0
    %180 = vmatprep.subr.mxu0 0.0
    %181 = vmatpush1.msra.mxu0 0.0
    %182 = vmatprep.subr.mxu0 0.0
    %183 = vmatpush1.msra.mxu0 0.0
    %184 = vmatprep.subr.mxu0 0.0
    %185 = vmatpush1.msra.mxu0 0.0
    %186 = vmatprep.subr.mxu0 0.0
    %187 = vmatpush1.msra.mxu0 0.0
    %188 = vmatprep.subr.mxu0 0.0
    %189 = vmatpush1.msra.mxu0 0.0
    %190 = vmatprep.subr.mxu0 0.0
    %191 = vmatpush1.msra.mxu0 0.0
    %192 = vmatprep.subr.mxu0 0.0
    %193 = vmatpush1.msra.mxu0 0.0
    %194 = vmatprep.subr.mxu0 0.0
    %195 = vmatpush1.msra.mxu0 0.0
    %196 = vmatprep.subr.mxu0 0.0
    %197 = vmatpush1.msra.mxu0 0.0
    %198 = vmatprep.subr.mxu0 0.0
    %199 = vmatpush1.msra.mxu0 0.0
    %200 = vmatprep.subr.mxu0 0.0
    %201 = vmatpush1.msra.mxu0 0.0
    %202 = vmatprep.subr.mxu0 0.0
    %203 = vmatpush1.msra.mxu0 0.0
    %204 = vmatprep.subr.mxu0 0.0
    %205 = vmatpush1.msra.mxu0 0.0
    %206 = vmatprep.subr.mxu0 0.0
    %207 = vmatpush1.msra.mxu0 0.0
    %208 = vmatprep.subr.mxu0 0.0
    %209 = vmatpush1.msra.mxu0 0.0
    %210 = vmatprep.subr.mxu0 0.0
    %211 = vmatpush1.msra.mxu0 0.0
    %212 = vmatprep.subr.mxu0 0.0
    %213 = vmatpush1.msra.mxu0 0.0
    %214 = vmatprep.mubr.f32.mxu0 0.0
    %215 = vmatmul.mubr.f32.gmra.mrb[0].mxu0 %v145
    %v216 = vpop.f32.mrb[0].mxu0
    %v217 = vadd.f32 %v142, %v216
    %v218 = vpop.f32.mrb[0].mxu0
    %219 = vmatprep.mubr.f32.mxu0 0.0
    %220 = vmatmul.mubr.f32.gmra.mrb[0].mxu0 %v148
    %v221 = vpop.f32.mrb[0].mxu0
    %v222 = vadd.f32 %v142, %v221
    %v223 = vpop.f32.mrb[0].mxu0
    %224 = vdwg.mxu0
    %233 = vrot.lane.b32.xlu0 %v57, 32
    %v234 = vpop.permute.xlu0 %233
    %235 = vrot.lane.b32.xlu0 %v58, 32
    %v236 = vpop.permute.xlu0 %235
    %237 = vrot.lane.b32.xlu0 %v59, 32
    %v238 = vpop.permute.xlu0 %237
    %239 = vrot.lane.b32.xlu0 %v60, 32
    %v240 = vpop.permute.xlu0 %239
    %241 = vrot.lane.b32.xlu0 %v61, 32
    %v242 = vpop.permute.xlu0 %241
    %243 = vrot.lane.b32.xlu0 %v62, 32
    %v244 = vpop.permute.xlu0 %243
    %245 = vrot.lane.b32.xlu0 %v63, 32
    %v246 = vpop.permute.xlu0 %245
    %247 = vrot.lane.b32.xlu0 %v64, 32
    %v248 = vpop.permute.xlu0 %247
    %v257 = vmul.f32 %v217, %v234
    %v258 = vmul.f32 %v217, %v236
    %v259 = vmul.f32 %v217, %v238
    %v260 = vmul.f32 %v217, %v240
    %v261 = vmul.f32 %v217, %v242
    %v262 = vmul.f32 %v217, %v244
    %v263 = vmul.f32 %v217, %v246
    %v264 = vmul.f32 %v217, %v248
    %265 = vrot.lane.b32.xlu0 %v57, 64
    %v266 = vpop.permute.xlu0 %265
    %267 = vrot.lane.b32.xlu0 %v58, 64
    %v268 = vpop.permute.xlu0 %267
    %269 = vrot.lane.b32.xlu0 %v59, 64
    %v270 = vpop.permute.xlu0 %269
    %271 = vrot.lane.b32.xlu0 %v60, 64
    %v272 = vpop.permute.xlu0 %271
    %273 = vrot.lane.b32.xlu0 %v61, 64
    %v274 = vpop.permute.xlu0 %273
    %275 = vrot.lane.b32.xlu0 %v62, 64
    %v276 = vpop.permute.xlu0 %275
    %277 = vrot.lane.b32.xlu0 %v63, 64
    %v278 = vpop.permute.xlu0 %277
    %279 = vrot.lane.b32.xlu0 %v64, 64
    %v280 = vpop.permute.xlu0 %279
    %v289 = vmul.f32 %v217, %v266
    %v290 = vmul.f32 %v217, %v268
    %v291 = vmul.f32 %v217, %v270
    %v292 = vmul.f32 %v217, %v272
    %v293 = vmul.f32 %v217, %v274
    %v294 = vmul.f32 %v217, %v276
    %v295 = vmul.f32 %v217, %v278
    %v296 = vmul.f32 %v217, %v280
    %305 = vrot.lane.b32.xlu0 %v257, 96
    %v306 = vpop.permute.xlu0 %305
    %307 = vrot.lane.b32.xlu0 %v258, 96
    %v308 = vpop.permute.xlu0 %307
    %309 = vrot.lane.b32.xlu0 %v259, 96
    %v310 = vpop.permute.xlu0 %309
    %311 = vrot.lane.b32.xlu0 %v260, 96
    %v312 = vpop.permute.xlu0 %311
    %313 = vrot.lane.b32.xlu0 %v261, 96
    %v314 = vpop.permute.xlu0 %313
    %315 = vrot.lane.b32.xlu0 %v262, 96
    %v316 = vpop.permute.xlu0 %315
    %317 = vrot.lane.b32.xlu0 %v263, 96
    %v318 = vpop.permute.xlu0 %317
    %319 = vrot.lane.b32.xlu0 %v264, 96
    %v320 = vpop.permute.xlu0 %319
    %v322 = vsel %vm75, %v217, 0
    %v324 = vsel %vm75, %v306, 0
    %v326 = vsel %vm75, %v308, 0
    %v328 = vsel %vm75, %v310, 0
    %v330 = vsel %vm75, %v312, 0
    %v332 = vsel %vm75, %v314, 0
    %v334 = vsel %vm75, %v316, 0
    %v336 = vsel %vm75, %v318, 0
    %v338 = vsel %vm75, %v320, 0
    %340 = vmatprep.subr.mxu0 0.0
    %341 = vmatpush1.xpose.msra.mxu0 %v324
    %342 = vmatprep.subr.mxu0 0.0
    %343 = vmatpush1.xpose.msra.mxu0 %v326
    %344 = vmatprep.subr.mxu0 0.0
    %345 = vmatpush1.xpose.msra.mxu0 %v328
    %346 = vmatprep.subr.mxu0 0.0
    %347 = vmatpush1.xpose.msra.mxu0 %v330
    %348 = vmatprep.subr.mxu0 0.0
    %349 = vmatpush1.xpose.msra.mxu0 %v332
    %350 = vmatprep.subr.mxu0 0.0
    %351 = vmatpush1.xpose.msra.mxu0 %v334
    %352 = vmatprep.subr.mxu0 0.0
    %353 = vmatpush1.xpose.msra.mxu0 %v336
    %354 = vmatprep.subr.mxu0 0.0
    %355 = vmatpush1.xpose.msra.mxu0 %v338
    %356 = vmatprep.subr.mxu0 0.0
    %357 = vmatpush1.xpose.msra.mxu0 0.0
    %358 = vmatprep.subr.mxu0 0.0
    %359 = vmatpush1.xpose.msra.mxu0 0.0
    %360 = vmatprep.subr.mxu0 0.0
    %361 = vmatpush1.xpose.msra.mxu0 0.0
    %362 = vmatprep.subr.mxu0 0.0
    %363 = vmatpush1.xpose.msra.mxu0 0.0
    %364 = vmatprep.subr.mxu0 0.0
    %365 = vmatpush1.xpose.msra.mxu0 0.0
    %366 = vmatprep.subr.mxu0 0.0
    %367 = vmatpush1.xpose.msra.mxu0 0.0
    %368 = vmatprep.subr.mxu0 0.0
    %369 = vmatpush1.xpose.msra.mxu0 0.0
    %370 = vmatprep.subr.mxu0 0.0
    %371 = vmatpush1.xpose.msra.mxu0 0.0
    %372 = vmatprep.subr.mxu0 0.0
    %373 = vmatpush1.xpose.msra.mxu0 0.0
    %374 = vmatprep.subr.mxu0 0.0
    %375 = vmatpush1.xpose.msra.mxu0 0.0
    %376 = vmatprep.subr.mxu0 0.0
    %377 = vmatpush1.xpose.msra.mxu0 0.0
    %378 = vmatprep.subr.mxu0 0.0
    %379 = vmatpush1.xpose.msra.mxu0 0.0
    %380 = vmatprep.subr.mxu0 0.0
    %381 = vmatpush1.xpose.msra.mxu0 0.0
    %382 = vmatprep.subr.mxu0 0.0
    %383 = vmatpush1.xpose.msra.mxu0 0.0
    %384 = vmatprep.subr.mxu0 0.0
    %385 = vmatpush1.xpose.msra.mxu0 0.0
    %386 = vmatprep.subr.mxu0 0.0
    %387 = vmatpush1.xpose.msra.mxu0 0.0
    %388 = vmatprep.subr.mxu0 0.0
    %389 = vmatpush1.xpose.msra.mxu0 0.0
    %390 = vmatprep.subr.mxu0 0.0
    %391 = vmatpush1.xpose.msra.mxu0 0.0
    %392 = vmatprep.subr.mxu0 0.0
    %393 = vmatpush1.xpose.msra.mxu0 0.0
    %394 = vmatprep.subr.mxu0 0.0
    %395 = vmatpush1.xpose.msra.mxu0 0.0
    %396 = vmatprep.subr.mxu0 0.0
    %397 = vmatpush1.xpose.msra.mxu0 0.0
    %398 = vmatprep.subr.mxu0 0.0
    %399 = vmatpush1.xpose.msra.mxu0 0.0
    %400 = vmatprep.subr.mxu0 0.0
    %401 = vmatpush1.xpose.msra.mxu0 0.0
    %402 = vmatprep.subr.mxu0 0.0
    %403 = vmatpush1.xpose.msra.mxu0 0.0
    %404 = vmatprep.mubr.f32.mxu0 0.0
    %405 = vmatmul.mubr.f32.gmra.mrb[0].mxu0 %v322
    %v406 = vpop.f32.mrb[0].mxu0
    %v407 = vadd.f32 0.0, %v406
    %v408 = vpop.f32.mrb[0].mxu0
    %409 = vdwg.mxu0
    %v410 = vmul.f32 %v407, 0.5
    %vm411 = vcmask 64512
    %v412 = vsel %vm411, %v410, -inf
    %413 = vmax.xlane.f32.xlu0 %v412
    %v414 = vpop.xlane.xlu0 %413
    %v415 = vsub.f32 %v410, %v414
    %v416 = vmul.f32 %v415, 1.442695
    %v417 = vpow.pop %v416
    %v418 = vsel %vm411, %v417, 0.0
    %419 = vadd.xlane.f32.xlu0 %v418
    %v420 = vpop.xlane.xlu0 %419
    %v421 = vrcp.pop %v420
    %v422 = vmul.f32 %v417, %v421
    %vm423 = vcmask 130112
    %v424 = vsel %vm423, %v410, -inf
    %425 = vmax.xlane.f32.xlu0 %v424
    %v426 = vpop.xlane.xlu0 %425
    %v427 = vsub.f32 %v410, %v426
    %v428 = vmul.f32 %v427, 1.442695
    %v429 = vpow.pop %v428
    %431 = vrot.lane.b32.xlu0 %v429, 120
    %v432 = vpop.permute.xlu0 %431
    %v434 = vsel %vm411, %v432, 0.0
    %435 = vadd.xlane.f32.xlu0 %v434
    %v436 = vpop.xlane.xlu0 %435
    %v437 = vrcp.pop %v436
    %v438 = vmul.f32 %v429, %v437
    %vm439 = vcmask 195712
    %v440 = vsel %vm439, %v410, -inf
    %441 = vmax.xlane.f32.xlu0 %v440
    %v442 = vpop.xlane.xlu0 %441
    %v443 = vsub.f32 %v410, %v442
    %v444 = vmul.f32 %v443, 1.442695
    %v445 = vpow.pop %v444
    %447 = vrot.lane.b32.xlu0 %v445, 112
    %v448 = vpop.permute.xlu0 %447
    %v450 = vsel %vm411, %v448, 0.0
    %451 = vadd.xlane.f32.xlu0 %v450
    %v452 = vpop.xlane.xlu0 %451
    %v453 = vrcp.pop %v452
    %v454 = vmul.f32 %v445, %v453
    %vm455 = vcmask 261312
    %v456 = vsel %vm455, %v410, -inf
    %457 = vmax.xlane.f32.xlu0 %v456
    %v458 = vpop.xlane.xlu0 %457
    %v459 = vsub.f32 %v410, %v458
    %v460 = vmul.f32 %v459, 1.442695
    %v461 = vpow.pop %v460
    %463 = vrot.lane.b32.xlu0 %v461, 104
    %v464 = vpop.permute.xlu0 %463
    %v466 = vsel %vm411, %v464, 0.0
    %467 = vadd.xlane.f32.xlu0 %v466
    %v468 = vpop.xlane.xlu0 %467
    %v469 = vrcp.pop %v468
    %v470 = vmul.f32 %v461, %v469
    %vm471 = vcmask 326912
    %v472 = vsel %vm471, %v410, -inf
    %473 = vmax.xlane.f32.xlu0 %v472
    %v474 = vpop.xlane.xlu0 %473
    %v475 = vsub.f32 %v410, %v474
    %v476 = vmul.f32 %v475, 1.442695
    %v477 = vpow.pop %v476
    %479 = vrot.lane.b32.xlu0 %v477, 96
    %v480 = vpop.permute.xlu0 %479
    %v482 = vsel %vm411, %v480, 0.0
    %483 = vadd.xlane.f32.xlu0 %v482
    %v484 = vpop.xlane.xlu0 %483
    %v485 = vrcp.pop %v484
    %v486 = vmul.f32 %v477, %v485
    %vm487 = vcmask 392512
    %v488 = vsel %vm487, %v410, -inf
    %489 = vmax.xlane.f32.xlu0 %v488
    %v490 = vpop.xlane.xlu0 %489
    %v491 = vsub.f32 %v410, %v490
    %v492 = vmul.f32 %v491, 1.442695
    %v493 = vpow.pop %v492
    %495 = vrot.lane.b32.xlu0 %v493, 88
    %v496 = vpop.permute.xlu0 %495
    %v498 = vsel %vm411, %v496, 0.0
    %499 = vadd.xlane.f32.xlu0 %v498
    %v500 = vpop.xlane.xlu0 %499
    %v501 = vrcp.pop %v500
    %v502 = vmul.f32 %v493, %v501
    %vm503 = vcmask 458112
    %v504 = vsel %vm503, %v410, -inf
    %505 = vmax.xlane.f32.xlu0 %v504
    %v506 = vpop.xlane.xlu0 %505
    %v507 = vsub.f32 %v410, %v506
    %v508 = vmul.f32 %v507, 1.442695
    %v509 = vpow.pop %v508
    %511 = vrot.lane.b32.xlu0 %v509, 80
    %v512 = vpop.permute.xlu0 %511
    %v514 = vsel %vm411, %v512, 0.0
    %515 = vadd.xlane.f32.xlu0 %v514
    %v516 = vpop.xlane.xlu0 %515
    %v517 = vrcp.pop %v516
    %v518 = vmul.f32 %v509, %v517
    %vm519 = vcmask 523712
    %v520 = vsel %vm519, %v410, -inf
    %521 = vmax.xlane.f32.xlu0 %v520
    %v522 = vpop.xlane.xlu0 %521
    %v523 = vsub.f32 %v410, %v522
    %v524 = vmul.f32 %v523, 1.442695
    %v525 = vpow.pop %v524
    %527 = vrot.lane.b32.xlu0 %v525, 72
    %v528 = vpop.permute.xlu0 %527
    %v530 = vsel %vm411, %v528, 0.0
    %531 = vadd.xlane.f32.xlu0 %v530
    %v532 = vpop.xlane.xlu0 %531
    %v533 = vrcp.pop %v532
    %v534 = vmul.f32 %v525, %v533
    %v535 = vsel %vm411, %v422, %v438
    %vm536 = vcmask 130048
    %v537 = vsel %vm536, %v535, %v454
    %vm538 = vcmask 195584
    %v539 = vsel %vm538, %v537, %v470
    %v540 = vsel %vm75, %v539, %v486
    %vm541 = vcmask 326656
    %v542 = vsel %vm541, %v540, %v502
    %vm543 = vcmask 392192
    %v544 = vsel %vm543, %v542, %v518
    %vm545 = vcmask 457728
    %v546 = vsel %vm545, %v544, %v534
    %555 = vrot.lane.b32.xlu0 %v289, 64
    %v556 = vpop.permute.xlu0 %555
    %557 = vrot.lane.b32.xlu0 %v290, 64
    %v558 = vpop.permute.xlu0 %557
    %559 = vrot.lane.b32.xlu0 %v291, 64
    %v560 = vpop.permute.xlu0 %559
    %561 = vrot.lane.b32.xlu0 %v292, 64
    %v562 = vpop.permute.xlu0 %561
    %563 = vrot.lane.b32.xlu0 %v293, 64
    %v564 = vpop.permute.xlu0 %563
    %565 = vrot.lane.b32.xlu0 %v294, 64
    %v566 = vpop.permute.xlu0 %565
    %567 = vrot.lane.b32.xlu0 %v295, 64
    %v568 = vpop.permute.xlu0 %567
    %569 = vrot.lane.b32.xlu0 %v296, 64
    %v570 = vpop.permute.xlu0 %569
    %vm579 = vcmask 523264
    %v581 = vsel %vm579, %v546, 0
    %583 = vmatprep.subr.mxu0 0.0
    %584 = vmatpush1.msra.mxu0 %v556
    %585 = vmatprep.subr.mxu0 0.0
    %586 = vmatpush1.msra.mxu0 %v558
    %587 = vmatprep.subr.mxu0 0.0
    %588 = vmatpush1.msra.mxu0 %v560
    %589 = vmatprep.subr.mxu0 0.0
    %590 = vmatpush1.msra.mxu0 %v562
    %591 = vmatprep.subr.mxu0 0.0
    %592 = vmatpush1.msra.mxu0 %v564
    %593 = vmatprep.subr.mxu0 0.0
    %594 = vmatpush1.msra.mxu0 %v566
    %595 = vmatprep.subr.mxu0 0.0
    %596 = vmatpush1.msra.mxu0 %v568
    %597 = vmatprep.subr.mxu0 0.0
    %598 = vmatpush1.msra.mxu0 %v570
    %599 = vmatprep.subr.mxu0 0.0
    %600 = vmatpush1.msra.mxu0 0.0
    %601 = vmatprep.subr.mxu0 0.0
    %602 = vmatpush1.msra.mxu0 0.0
    %603 = vmatprep.subr.mxu0 0.0
    %604 = vmatpush1.msra.mxu0 0.0
    %605 = vmatprep.subr.mxu0 0.0
    %606 = vmatpush1.msra.mxu0 0.0
    %607 = vmatprep.subr.mxu0 0.0
    %608 = vmatpush1.msra.mxu0 0.0
    %609 = vmatprep.subr.mxu0 0.0
    %610 = vmatpush1.msra.mxu0 0.0
    %611 = vmatprep.subr.mxu0 0.0
    %612 = vmatpush1.msra.mxu0 0.0
    %613 = vmatprep.subr.mxu0 0.0
    %614 = vmatpush1.msra.mxu0 0.0
    %615 = vmatprep.subr.mxu0 0.0
    %616 = vmatpush1.msra.mxu0 0.0
    %617 = vmatprep.subr.mxu0 0.0
    %618 = vmatpush1.msra.mxu0 0.0
    %619 = vmatprep.subr.mxu0 0.0
    %620 = vmatpush1.msra.mxu0 0.0
    %621 = vmatprep.subr.mxu0 0.0
    %622 = vmatpush1.msra.mxu0 0.0
    %623 = vmatprep.subr.mxu0 0.0
    %624 = vmatpush1.msra.mxu0 0.0
    %625 = vmatprep.subr.mxu0 0.0
    %626 = vmatpush1.msra.mxu0 0.0
    %627 = vmatprep.subr.mxu0 0.0
    %628 = vmatpush1.msra.mxu0 0.0
    %629 = vmatprep.subr.mxu0 0.0
    %630 = vmatpush1.msra.mxu0 0.0
    %631 = vmatprep.subr.mxu0 0.0
    %632 = vmatpush1.msra.mxu0 0.0
    %633 = vmatprep.subr.mxu0 0.0
    %634 = vmatpush1.msra.mxu0 0.0
    %635 = vmatprep.subr.mxu0 0.0
    %636 = vmatpush1.msra.mxu0 0.0
    %637 = vmatprep.subr.mxu0 0.0
    %638 = vmatpush1.msra.mxu0 0.0
    %639 = vmatprep.subr.mxu0 0.0
    %640 = vmatpush1.msra.mxu0 0.0
    %641 = vmatprep.subr.mxu0 0.0
    %642 = vmatpush1.msra.mxu0 0.0
    %643 = vmatprep.subr.mxu0 0.0
    %644 = vmatpush1.msra.mxu0 0.0
    %645 = vmatprep.subr.mxu0 0.0
    %646 = vmatpush1.msra.mxu0 0.0
    %647 = vmatprep.mubr.f32.mxu0 0.0
    %648 = vmatmul.mubr.f32.gmra.mrb[0].mxu0 %v581
    %v649 = vpop.f32.mrb[0].mxu0
    %v650 = vadd.f32 0.0, %v649
    %v651 = vpop.f32.mrb[0].mxu0
    %652 = vdwg.mxu0
    %v653 = vmul.f32 %v222, %v234
    %v654 = vmul.f32 %v222, %v236
    %v655 = vmul.f32 %v222, %v238
    %v656 = vmul.f32 %v222, %v240
    %v657 = vmul.f32 %v222, %v242
    %v658 = vmul.f32 %v222, %v244
    %v659 = vmul.f32 %v222, %v246
    %v660 = vmul.f32 %v222, %v248
    %v661 = vmul.f32 %v222, %v266
    %v662 = vmul.f32 %v222, %v268
    %v663 = vmul.f32 %v222, %v270
    %v664 = vmul.f32 %v222, %v272
    %v665 = vmul.f32 %v222, %v274
    %v666 = vmul.f32 %v222, %v276
    %v667 = vmul.f32 %v222, %v278
    %v668 = vmul.f32 %v222, %v280
    %677 = vrot.lane.b32.xlu0 %v653, 96
    %v678 = vpop.permute.xlu0 %677
    %679 = vrot.lane.b32.xlu0 %v654, 96
    %v680 = vpop.permute.xlu0 %679
    %681 = vrot.lane.b32.xlu0 %v655, 96
    %v682 = vpop.permute.xlu0 %681
    %683 = vrot.lane.b32.xlu0 %v656, 96
    %v684 = vpop.permute.xlu0 %683
    %685 = vrot.lane.b32.xlu0 %v657, 96
    %v686 = vpop.permute.xlu0 %685
    %687 = vrot.lane.b32.xlu0 %v658, 96
    %v688 = vpop.permute.xlu0 %687
    %689 = vrot.lane.b32.xlu0 %v659, 96
    %v690 = vpop.permute.xlu0 %689
    %691 = vrot.lane.b32.xlu0 %v660, 96
    %v692 = vpop.permute.xlu0 %691
    %v694 = vsel %vm75, %v222, 0
    %v696 = vsel %vm75, %v678, 0
    %v698 = vsel %vm75, %v680, 0
    %v700 = vsel %vm75, %v682, 0
    %v702 = vsel %vm75, %v684, 0
    %v704 = vsel %vm75, %v686, 0
    %v706 = vsel %vm75, %v688, 0
    %v708 = vsel %vm75, %v690, 0
    %v710 = vsel %vm75, %v692, 0
    %712 = vmatprep.subr.mxu0 0.0
    %713 = vmatpush1.xpose.msra.mxu0 %v696
    %714 = vmatprep.subr.mxu0 0.0
    %715 = vmatpush1.xpose.msra.mxu0 %v698
    %716 = vmatprep.subr.mxu0 0.0
    %717 = vmatpush1.xpose.msra.mxu0 %v700
    %718 = vmatprep.subr.mxu0 0.0
    %719 = vmatpush1.xpose.msra.mxu0 %v702
    %720 = vmatprep.subr.mxu0 0.0
    %721 = vmatpush1.xpose.msra.mxu0 %v704
    %722 = vmatprep.subr.mxu0 0.0
    %723 = vmatpush1.xpose.msra.mxu0 %v706
    %724 = vmatprep.subr.mxu0 0.0
    %725 = vmatpush1.xpose.msra.mxu0 %v708
    %726 = vmatprep.subr.mxu0 0.0
    %727 = vmatpush1.xpose.msra.mxu0 %v710
    %728 = vmatprep.subr.mxu0 0.0
    %729 = vmatpush1.xpose.msra.mxu0 0.0
    %730 = vmatprep.subr.mxu0 0.0
    %731 = vmatpush1.xpose.msra.mxu0 0.0
    %732 = vmatprep.subr.mxu0 0.0
    %733 = vmatpush1.xpose.msra.mxu0 0.0
    %734 = vmatprep.subr.mxu0 0.0
    %735 = vmatpush1.xpose.msra.mxu0 0.0
    %736 = vmatprep.subr.mxu0 0.0
    %737 = vmatpush1.xpose.msra.mxu0 0.0
    %738 = vmatprep.subr.mxu0 0.0
    %739 = vmatpush1.xpose.msra.mxu0 0.0
    %740 = vmatprep.subr.mxu0 0.0
    %741 = vmatpush1.xpose.msra.mxu0 0.0
    %742 = vmatprep.subr.mxu0 0.0
    %743 = vmatpush1.xpose.msra.mxu0 0.0
    %744 = vmatprep.subr.mxu0 0.0
    %745 = vmatpush1.xpose.msra.mxu0 0.0
    %746 = vmatprep.subr.mxu0 0.0
    %747 = vmatpush1.xpose.msra.mxu0 0.0
    %748 = vmatprep.subr.mxu0 0.0
    %749 = vmatpush1.xpose.msra.mxu0 0.0
    %750 = vmatprep.subr.mxu0 0.0
    %751 = vmatpush1.xpose.msra.mxu0 0.0
    %752 = vmatprep.subr.mxu0 0.0
    %753 = vmatpush1.xpose.msra.mxu0 0.0
    %754 = vmatprep.subr.mxu0 0.0
    %755 = vmatpush1.xpose.msra.mxu0 0.0
    %756 = vmatprep.subr.mxu0 0.0
    %757 = vmatpush1.xpose.msra.mxu0 0.0
    %758 = vmatprep.subr.mxu0 0.0
    %759 = vmatpush1.xpose.msra.mxu0 0.0
    %760 = vmatprep.subr.mxu0 0.0
    %761 = vmatpush1.xpose.msra.mxu0 0.0
    %762 = vmatprep.subr.mxu0 0.0
    %763 = vmatpush1.xpose.msra.mxu0 0.0
    %764 = vmatprep.subr.mxu0 0.0
    %765 = vmatpush1.xpose.msra.mxu0 0.0
    %766 = vmatprep.subr.mxu0 0.0
    %767 = vmatpush1.xpose.msra.mxu0 0.0
    %768 = vmatprep.subr.mxu0 0.0
    %769 = vmatpush1.xpose.msra.mxu0 0.0
    %770 = vmatprep.subr.mxu0 0.0
    %771 = vmatpush1.xpose.msra.mxu0 0.0
    %772 = vmatprep.subr.mxu0 0.0
    %773 = vmatpush1.xpose.msra.mxu0 0.0
    %774 = vmatprep.subr.mxu0 0.0
    %775 = vmatpush1.xpose.msra.mxu0 0.0
    %776 = vmatprep.mubr.f32.mxu0 0.0
    %777 = vmatmul.mubr.f32.gmra.mrb[0].mxu0 %v694
    %v778 = vpop.f32.mrb[0].mxu0
    %v779 = vadd.f32 0.0, %v778
    %v780 = vpop.f32.mrb[0].mxu0
    %781 = vdwg.mxu0
    %v782 = vmul.f32 %v779, 0.5
    %v783 = vsel %vm411, %v782, -inf
    %784 = vmax.xlane.f32.xlu0 %v783
    %v785 = vpop.xlane.xlu0 %784
    %v786 = vsub.f32 %v782, %v785
    %v787 = vmul.f32 %v786, 1.442695
    %v788 = vpow.pop %v787
    %v789 = vsel %vm411, %v788, 0.0
    %790 = vadd.xlane.f32.xlu0 %v789
    %v791 = vpop.xlane.xlu0 %790
    %v792 = vrcp.pop %v791
    %v793 = vmul.f32 %v788, %v792
    %v794 = vsel %vm423, %v782, -inf
    %795 = vmax.xlane.f32.xlu0 %v794
    %v796 = vpop.xlane.xlu0 %795
    %v797 = vsub.f32 %v782, %v796
    %v798 = vmul.f32 %v797, 1.442695
    %v799 = vpow.pop %v798
    %801 = vrot.lane.b32.xlu0 %v799, 120
    %v802 = vpop.permute.xlu0 %801
    %v804 = vsel %vm411, %v802, 0.0
    %805 = vadd.xlane.f32.xlu0 %v804
    %v806 = vpop.xlane.xlu0 %805
    %v807 = vrcp.pop %v806
    %v808 = vmul.f32 %v799, %v807
    %v809 = vsel %vm439, %v782, -inf
    %810 = vmax.xlane.f32.xlu0 %v809
    %v811 = vpop.xlane.xlu0 %810
    %v812 = vsub.f32 %v782, %v811
    %v813 = vmul.f32 %v812, 1.442695
    %v814 = vpow.pop %v813
    %816 = vrot.lane.b32.xlu0 %v814, 112
    %v817 = vpop.permute.xlu0 %816
    %v819 = vsel %vm411, %v817, 0.0
    %820 = vadd.xlane.f32.xlu0 %v819
    %v821 = vpop.xlane.xlu0 %820
    %v822 = vrcp.pop %v821
    %v823 = vmul.f32 %v814, %v822
    %v824 = vsel %vm455, %v782, -inf
    %825 = vmax.xlane.f32.xlu0 %v824
    %v826 = vpop.xlane.xlu0 %825
    %v827 = vsub.f32 %v782, %v826
    %v828 = vmul.f32 %v827, 1.442695
    %v829 = vpow.pop %v828
    %831 = vrot.lane.b32.xlu0 %v829, 104
    %v832 = vpop.permute.xlu0 %831
    %v834 = vsel %vm411, %v832, 0.0
    %835 = vadd.xlane.f32.xlu0 %v834
    %v836 = vpop.xlane.xlu0 %835
    %v837 = vrcp.pop %v836
    %v838 = vmul.f32 %v829, %v837
    %v839 = vsel %vm471, %v782, -inf
    %840 = vmax.xlane.f32.xlu0 %v839
    %v841 = vpop.xlane.xlu0 %840
    %v842 = vsub.f32 %v782, %v841
    %v843 = vmul.f32 %v842, 1.442695
    %v844 = vpow.pop %v843
    %846 = vrot.lane.b32.xlu0 %v844, 96
    %v847 = vpop.permute.xlu0 %846
    %v849 = vsel %vm411, %v847, 0.0
    %850 = vadd.xlane.f32.xlu0 %v849
    %v851 = vpop.xlane.xlu0 %850
    %v852 = vrcp.pop %v851
    %v853 = vmul.f32 %v844, %v852
    %v854 = vsel %vm487, %v782, -inf
    %855 = vmax.xlane.f32.xlu0 %v854
    %v856 = vpop.xlane.xlu0 %855
    %v857 = vsub.f32 %v782, %v856
    %v858 = vmul.f32 %v857, 1.442695
    %v859 = vpow.pop %v858
    %861 = vrot.lane.b32.xlu0 %v859, 88
    %v862 = vpop.permute.xlu0 %861
    %v864 = vsel %vm411, %v862, 0.0
    %865 = vadd.xlane.f32.xlu0 %v864
    %v866 = vpop.xlane.xlu0 %865
    %v867 = vrcp.pop %v866
    %v868 = vmul.f32 %v859, %v867
    %v869 = vsel %vm503, %v782, -inf
    %870 = vmax.xlane.f32.xlu0 %v869
    %v871 = vpop.xlane.xlu0 %870
    %v872 = vsub.f32 %v782, %v871
    %v873 = vmul.f32 %v872, 1.442695
    %v874 = vpow.pop %v873
    %876 = vrot.lane.b32.xlu0 %v874, 80
    %v877 = vpop.permute.xlu0 %876
    %v879 = vsel %vm411, %v877, 0.0
    %880 = vadd.xlane.f32.xlu0 %v879
    %v881 = vpop.xlane.xlu0 %880
    %v882 = vrcp.pop %v881
    %v883 = vmul.f32 %v874, %v882
    %v884 = vsel %vm519, %v782, -inf
    %885 = vmax.xlane.f32.xlu0 %v884
    %v886 = vpop.xlane.xlu0 %885
    %v887 = vsub.f32 %v782, %v886
    %v888 = vmul.f32 %v887, 1.442695
    %v889 = vpow.pop %v888
    %891 = vrot.lane.b32.xlu0 %v889, 72
    %v892 = vpop.permute.xlu0 %891
    %v894 = vsel %vm411, %v892, 0.0
    %895 = vadd.xlane.f32.xlu0 %v894
    %v896 = vpop.xlane.xlu0 %895
    %v897 = vrcp.pop %v896
    %v898 = vmul.f32 %v889, %v897
    %v899 = vsel %vm411, %v793, %v808
    %v900 = vsel %vm536, %v899, %v823
    %v901 = vsel %vm538, %v900, %v838
    %v902 = vsel %vm75, %v901, %v853
    %v903 = vsel %vm541, %v902, %v868
    %v904 = vsel %vm543, %v903, %v883
    %v905 = vsel %vm545, %v904, %v898
    %914 = vrot.lane.b32.xlu0 %v661, 64
    %v915 = vpop.permute.xlu0 %914
    %916 = vrot.lane.b32.xlu0 %v662, 64
    %v917 = vpop.permute.xlu0 %916
    %918 = vrot.lane.b32.xlu0 %v663, 64
    %v919 = vpop.permute.xlu0 %918
    %920 = vrot.lane.b32.xlu0 %v664, 64
    %v921 = vpop.permute.xlu0 %920
    %922 = vrot.lane.b32.xlu0 %v665, 64
    %v923 = vpop.permute.xlu0 %922
    %924 = vrot.lane.b32.xlu0 %v666, 64
    %v925 = vpop.permute.xlu0 %924
    %926 = vrot.lane.b32.xlu0 %v667, 64
    %v927 = vpop.permute.xlu0 %926
    %928 = vrot.lane.b32.xlu0 %v668, 64
    %v929 = vpop.permute.xlu0 %928
    %v939 = vsel %vm579, %v905, 0
    %941 = vmatprep.subr.mxu0 0.0
    %942 = vmatpush1.msra.mxu0 %v915
    %943 = vmatprep.subr.mxu0 0.0
    %944 = vmatpush1.msra.mxu0 %v917
    %945 = vmatprep.subr.mxu0 0.0
    %946 = vmatpush1.msra.mxu0 %v919
    %947 = vmatprep.subr.mxu0 0.0
    %948 = vmatpush1.msra.mxu0 %v921
    %949 = vmatprep.subr.mxu0 0.0
    %950 = vmatpush1.msra.mxu0 %v923
    %951 = vmatprep.subr.mxu0 0.0
    %952 = vmatpush1.msra.mxu0 %v925
    %953 = vmatprep.subr.mxu0 0.0
    %954 = vmatpush1.msra.mxu0 %v927
    %955 = vmatprep.subr.mxu0 0.0
    %956 = vmatpush1.msra.mxu0 %v929
    %957 = vmatprep.subr.mxu0 0.0
    %958 = vmatpush1.msra.mxu0 0.0
    %959 = vmatprep.subr.mxu0 0.0
    %960 = vmatpush1.msra.mxu0 0.0
    %961 = vmatprep.subr.mxu0 0.0
    %962 = vmatpush1.msra.mxu0 0.0
    %963 = vmatprep.subr.mxu0 0.0
    %964 = vmatpush1.msra.mxu0 0.0
    %965 = vmatprep.subr.mxu0 0.0
    %966 = vmatpush1.msra.mxu0 0.0
    %967 = vmatprep.subr.mxu0 0.0
    %968 = vmatpush1.msra.mxu0 0.0
    %969 = vmatprep.subr.mxu0 0.0
    %970 = vmatpush1.msra.mxu0 0.0
    %971 = vmatprep.subr.mxu0 0.0
    %972 = vmatpush1.msra.mxu0 0.0
    %973 = vmatprep.subr.mxu0 0.0
    %974 = vmatpush1.msra.mxu0 0.0
    %975 = vmatprep.subr.mxu0 0.0
    %976 = vmatpush1.msra.mxu0 0.0
    %977 = vmatprep.subr.mxu0 0.0
    %978 = vmatpush1.msra.mxu0 0.0
    %979 = vmatprep.subr.mxu0 0.0
    %980 = vmatpush1.msra.mxu0 0.0
    %981 = vmatprep.subr.mxu0 0.0
    %982 = vmatpush1.msra.mxu0 0.0
    %983 = vmatprep.subr.mxu0 0.0
    %984 = vmatpush1.msra.mxu0 0.0
    %985 = vmatprep.subr.mxu0 0.0
    %986 = vmatpush1.msra.mxu0 0.0
    %987 = vmatprep.subr.mxu0 0.0
    %988 = vmatpush1.msra.mxu0 0.0
    %989 = vmatprep.subr.mxu0 0.0
    %990 = vmatpush1.msra.mxu0 0.0
    %991 = vmatprep.subr.mxu0 0.0
    %992 = vmatpush1.msra.mxu0 0.0
    %993 = vmatprep.subr.mxu0 0.0
    %994 = vmatpush1.msra.mxu0 0.0
    %995 = vmatprep.subr.mxu0 0.0
    %996 = vmatpush1.msra.mxu0 0.0
    %997 = vmatprep.subr.mxu0 0.0
    %998 = vmatpush1.msra.mxu0 0.0
    %999 = vmatprep.subr.mxu0 0.0
    %1000 = vmatpush1.msra.mxu0 0.0
    %1001 = vmatprep.subr.mxu0 0.0
    %1002 = vmatpush1.msra.mxu0 0.0
    %1003 = vmatprep.subr.mxu0 0.0
    %1004 = vmatpush1.msra.mxu0 0.0
    %1005 = vmatprep.mubr.f32.mxu0 0.0
    %1006 = vmatmul.mubr.f32.gmra.mrb[0].mxu0 %v939
    %v1007 = vpop.f32.mrb[0].mxu0
    %v1008 = vadd.f32 0.0, %v1007
    %v1009 = vpop.f32.mrb[0].mxu0
    %1010 = vdwg.mxu0
    %v1011 = vld [vmem:[%s7] sm:$0xff]
    %v1012 = vld [vmem:[%s7 + $0x8] sm:$0xff]
    %v1013 = vld [vmem:[%s7 + $0x10] sm:$0xff]
    %v1014 = vld [vmem:[%s7 + $0x18] sm:$0xff]
    %v1016 = vsel %vm75, %v650, 0
    %v1019 = vsel %vm75, %v1008, 0
    %1021 = vmatprep.subr.mxu0 0.0
    %1022 = vmatpush1.msra.mxu0 %v1011
    %1023 = vmatprep.subr.mxu0 0.0
    %1024 = vmatpush1.msra.mxu0 %v1012
    %1025 = vmatprep.subr.mxu0 0.0
    %1026 = vmatpush1.msra.mxu0 %v1013
    %1027 = vmatprep.subr.mxu0 0.0
    %1028 = vmatpush1.msra.mxu0 %v1014
    %1029 = vmatprep.subr.mxu0 0.0
    %1030 = vmatpush1.msra.mxu0 0.0
    %1031 = vmatprep.subr.mxu0 0.0
    %1032 = vmatpush1.msra.mxu0 0.0
    %1033 = vmatprep.subr.mxu0 0.0
    %1034 = vmatpush1.msra.mxu0 0.0
    %1035 = vmatprep.subr.mxu0 0.0
    %1036 = vmatpush1.msra.mxu0 0.0
    %1037 = vmatprep.subr.mxu0 0.0
    %1038 = vmatpush1.msra.mxu0 0.0
    %1039 = vmatprep.subr.mxu0 0.0
    %1040 = vmatpush1.msra.mxu0 0.0
    %1041 = vmatprep.subr.mxu0 0.0
    %1042 = vmatpush1.msra.mxu0 0.0
    %1043 = vmatprep.subr.mxu0 0.0
    %1044 = vmatpush1.msra.mxu0 0.0
    %1045 = vmatprep.subr.mxu0 0.0
    %1046 = vmatpush1.msra.mxu0 0.0
    %1047 = vmatprep.subr.mxu0 0.0
    %1048 = vmatpush1.msra.mxu0 0.0
    %1049 = vmatprep.subr.mxu0 0.0
    %1050 = vmatpush1.msra.mxu0 0.0
    %1051 = vmatprep.subr.mxu0 0.0
    %1052 = vmatpush1.msra.mxu0 0.0
    %1053 = vmatprep.subr.mxu0 0.0
    %1054 = vmatpush1.msra.mxu0 0.0
    %1055 = vmatprep.subr.mxu0 0.0
    %1056 = vmatpush1.msra.mxu0 0.0
    %1057 = vmatprep.subr.mxu0 0.0
    %1058 = vmatpush1.msra.mxu0 0.0
    %1059 = vmatprep.subr.mxu0 0.0
    %1060 = vmatpush1.msra.mxu0 0.0
    %1061 = vmatprep.subr.mxu0 0.0
    %1062 = vmatpush1.msra.mxu0 0.0
    %1063 = vmatprep.subr.mxu0 0.0
    %1064 = vmatpush1.msra.mxu0 0.0
    %1065 = vmatprep.subr.mxu0 0.0
    %1066 = vmatpush1.msra.mxu0 0.0
    %1067 = vmatprep.subr.mxu0 0.0
    %1068 = vmatpush1.msra.mxu0 0.0
    %1069 = vmatprep.subr.mxu0 0.0
    %1070 = vmatpush1.msra.mxu0 0.0
    %1071 = vmatprep.subr.mxu0 0.0
    %1072 = vmatpush1.msra.mxu0 0.0
    %1073 = vmatprep.subr.mxu0 0.0
    %1074 = vmatpush1.msra.mxu0 0.0
    %1075 = vmatprep.subr.mxu0 0.0
    %1076 = vmatpush1.msra.mxu0 0.0
    %1077 = vmatprep.subr.mxu0 0.0
    %1078 = vmatpush1.msra.mxu0 0.0
    %1079 = vmatprep.subr.mxu0 0.0
    %1080 = vmatpush1.msra.mxu0 0.0
    %1081 = vmatprep.subr.mxu0 0.0
    %1082 = vmatpush1.msra.mxu0 0.0
    %1083 = vmatprep.subr.mxu0 0.0
    %1084 = vmatpush1.msra.mxu0 0.0
    %1085 = vmatprep.mubr.f32.mxu0 0.0
    %1086 = vmatmul.mubr.f32.gmra.mrb[0].mxu0 %v1016
    %v1087 = vpop.f32.mrb[0].mxu0
    %v1088 = vadd.f32 0.0, %v1087
    %v1089 = vpop.f32.mrb[0].mxu0
    %1090 = vmatprep.mubr.f32.mxu0 0.0
    %1091 = vmatmul.mubr.f32.gmra.mrb[0].mxu0 %v1019
    %v1092 = vpop.f32.mrb[0].mxu0
    %v1093 = vadd.f32 0.0, %v1092
    %v1094 = vpop.f32.mrb[0].mxu0
    %1095 = vdwg.mxu0
    %v1096 = vadd.f32 %v71, %v1088
    %v1097 = vadd.f32 %v72, %v1093
    %v1098 = vld [vmem:[%s8] sm:$0x1]
    %v1100 = vlaneseq
    %v1101 = vshrl.u32 %v1100, 7
    %v1102 = vsub.s32 0, %v1101
    %v1103 = vrot.slane %v1098, %v1102
    %v1105 = vadd.f32 %v1096, %v1103
    %v1106 = vadd.f32 %v1097, %v1103
    %v1107 = vld [vmem:[%s9] sm:$0x1]
    %v1108 = vld [vmem:[%s10] sm:$0x1]
    %v1109 = vsel %vm75, %v1105, 0.0
    %1110 = vadd.xlane.f32.xlu0 %v1109
    %v1111 = vpop.xlane.xlu0 %1110
    %v1112 = vsel %vm75, %v1106, 0.0
    %1113 = vadd.xlane.f32.xlu0 %v1112
    %v1114 = vpop.xlane.xlu0 %1113
    %v1115 = vmul.f32 %v1111, %v82
    %v1116 = vmul.f32 %v1114, %v82
    %v1117 = vsub.f32 %v1105, %v1115
    %v1118 = vsub.f32 %v1106, %v1116
    %v1119 = vmul.f32 %v1117, %v1117
    %v1120 = vmul.f32 %v1118, %v1118
    %v1121 = vsel %vm75, %v1119, 0.0
    %1122 = vadd.xlane.f32.xlu0 %v1121
    %v1123 = vpop.xlane.xlu0 %1122
    %v1124 = vsel %vm75, %v1120, 0.0
    %1125 = vadd.xlane.f32.xlu0 %v1124
    %v1126 = vpop.xlane.xlu0 %1125
    %v1127 = vmul.f32 %v1123, 0.032258064
    %v1128 = vmul.f32 %v1126, 0.032258064
    %v1129 = vrsqrt.pop %v1127
    %v1130 = vmul.f32 %v1127, %v1129
    %vm1131 = vcmp.eq.f32.partialorder %v1127, inf
    %v1132 = vsel %vm1131, %v1127, %v1130
    %vm1133 = vcmp.eq.f32.partialorder %v1127, 0.0
    %v1134 = vand.u32 %v1127, 2147483648
    %v1135 = vsel %vm1133, %v1134, %v1132
    %v1136 = vrsqrt.pop %v1128
    %v1137 = vmul.f32 %v1128, %v1136
    %vm1138 = vcmp.eq.f32.partialorder %v1128, inf
    %v1139 = vsel %vm1138, %v1128, %v1137
    %vm1140 = vcmp.eq.f32.partialorder %v1128, 0.0
    %v1141 = vand.u32 %v1128, 2147483648
    %v1142 = vsel %vm1140, %v1141, %v1139
    %v1144 = vlaneseq
    %v1145 = vshrl.u32 %v1144, 7
    %v1146 = vsub.s32 0, %v1145
    %v1147 = vrot.slane %v1107, %v1146
    %v1149 = vmul.f32 %v1147, %v1117
    %v1150 = vmul.f32 %v1147, %v1118
    %v1151 = vadd.f32 %v1135, 1e-06
    %v1152 = vadd.f32 %v1142, 1e-06
    %v1153 = vrcp.pop %v1151
    %v1154 = vmul.f32 %v1149, %v1153
    %v1155 = vrcp.pop %v1152
    %v1156 = vmul.f32 %v1150, %v1155
    %v1158 = vlaneseq
    %v1159 = vshrl.u32 %v1158, 7
    %v1160 = vsub.s32 0, %v1159
    %v1161 = vrot.slane %v1108, %v1160
    %v1163 = vadd.f32 %v1154, %v1161
    %v1164 = vadd.f32 %v1156, %v1161
    %v1165 = vld [vmem:[%s11] sm:$0xff]
    %v1166 = vld [vmem:[%s11 + $0x8] sm:$0xff]
    %v1167 = vld [vmem:[%s11 + $0x10] sm:$0xff]
    %v1168 = vld [vmem:[%s11 + $0x18] sm:$0xff]
    %v1169 = vld [vmem:[%s11 + $0x20] sm:$0xff]
    %v1170 = vld [vmem:[%s11 + $0x28] sm:$0xff]
    %v1171 = vld [vmem:[%s11 + $0x30] sm:$0xff]
    %v1172 = vld [vmem:[%s11 + $0x38] sm:$0xff]
    %v1173 = vld [vmem:[%s11 + $0x40] sm:$0xff]
    %v1174 = vld [vmem:[%s11 + $0x48] sm:$0xff]
    %v1175 = vld [vmem:[%s11 + $0x50] sm:$0xff]
    %v1176 = vld [vmem:[%s11 + $0x58] sm:$0xff]
    %v1177 = vld [vmem:[%s11 + $0x60] sm:$0xff]
    %v1178 = vld [vmem:[%s11 + $0x68] sm:$0xff]
    %v1179 = vld [vmem:[%s11 + $0x70] sm:$0xff]
    %v1180 = vld [vmem:[%s11 + $0x78] sm:$0xff]
    %v1181 = vld [vmem:[%s11 + $0x80] sm:$0xff]
    %v1182 = vld [vmem:[%s11 + $0x88] sm:$0xff]
    %v1183 = vld [vmem:[%s11 + $0x90] sm:$0xff]
    %v1184 = vld [vmem:[%s11 + $0x98] sm:$0xff]
    %v1185 = vld [vmem:[%s11 + $0xa0] sm:$0xff]
    %v1186 = vld [vmem:[%s11 + $0xa8] sm:$0xff]
    %v1187 = vld [vmem:[%s11 + $0xb0] sm:$0xff]
    %v1188 = vld [vmem:[%s11 + $0xb8] sm:$0xff]
    %v1189 = vld [vmem:[%s11 + $0xc0] sm:$0xff]
    %v1190 = vld [vmem:[%s11 + $0xc8] sm:$0xff]
    %v1191 = vld [vmem:[%s11 + $0xd0] sm:$0xff]
    %v1192 = vld [vmem:[%s11 + $0xd8] sm:$0xff]
    %v1193 = vld [vmem:[%s11 + $0xe0] sm:$0xff]
    %v1194 = vld [vmem:[%s11 + $0xe8] sm:$0xff]
    %v1195 = vld [vmem:[%s11 + $0xf0] sm:$0xff]
    %v1196 = vld [vmem:[%s11 + $0xf8] sm:$0xff]
    %v1197 = vld [vmem:[%s12] sm:$0xff]
    %v1199 = vlaneseq
    %v1200 = vshrl.u32 %v1199, 7
    %v1201 = vsub.s32 0, %v1200
    %v1202 = vrot.slane %v1197, %v1201
    %v1203 = vlaneseq
    %v1204 = vshrl.u32 %v1203, 7
    %v1205 = vsub.s32 1, %v1204
    %v1206 = vrot.slane %v1197, %v1205
    %v1207 = vlaneseq
    %v1208 = vshrl.u32 %v1207, 7
    %v1209 = vsub.s32 2, %v1208
    %v1210 = vrot.slane %v1197, %v1209
    %v1211 = vlaneseq
    %v1212 = vshrl.u32 %v1211, 7
    %v1213 = vsub.s32 3, %v1212
    %v1214 = vrot.slane %v1197, %v1213
    %v1215 = vlaneseq
    %v1216 = vshrl.u32 %v1215, 7
    %v1217 = vsub.s32 4, %v1216
    %v1218 = vrot.slane %v1197, %v1217
    %v1219 = vlaneseq
    %v1220 = vshrl.u32 %v1219, 7
    %v1221 = vsub.s32 5, %v1220
    %v1222 = vrot.slane %v1197, %v1221
    %v1223 = vlaneseq
    %v1224 = vshrl.u32 %v1223, 7
    %v1225 = vsub.s32 6, %v1224
    %v1226 = vrot.slane %v1197, %v1225
    %v1227 = vlaneseq
    %v1228 = vshrl.u32 %v1227, 7
    %v1229 = vsub.s32 7, %v1228
    %v1230 = vrot.slane %v1197, %v1229
    %v1240 = vsel %vm75, %v1163, 0
    %v1243 = vsel %vm75, %v1164, 0
    %1245 = vmatprep.subr.mxu0 %v1166
    %1246 = vmatpush1.msra.mxu0 %v1165
    %1247 = vmatprep.subr.mxu0 %v1174
    %1248 = vmatpush1.msra.mxu0 %v1173
    %1249 = vmatprep.subr.mxu0 %v1182
    %1250 = vmatpush1.msra.mxu0 %v1181
    %1251 = vmatprep.subr.mxu0 %v1190
    %1252 = vmatpush1.msra.mxu0 %v1189
    %1253 = vmatprep.subr.mxu0 0.0
    %1254 = vmatpush1.msra.mxu0 0.0
    %1255 = vmatprep.subr.mxu0 0.0
    %1256 = vmatpush1.msra.mxu0 0.0
    %1257 = vmatprep.subr.mxu0 0.0
    %1258 = vmatpush1.msra.mxu0 0.0
    %1259 = vmatprep.subr.mxu0 0.0
    %1260 = vmatpush1.msra.mxu0 0.0
    %1261 = vmatprep.subr.mxu0 0.0
    %1262 = vmatpush1.msra.mxu0 0.0
    %1263 = vmatprep.subr.mxu0 0.0
    %1264 = vmatpush1.msra.mxu0 0.0
    %1265 = vmatprep.subr.mxu0 0.0
    %1266 = vmatpush1.msra.mxu0 0.0
    %1267 = vmatprep.subr.mxu0 0.0
    %1268 = vmatpush1.msra.mxu0 0.0
    %1269 = vmatprep.subr.mxu0 0.0
    %1270 = vmatpush1.msra.mxu0 0.0
    %1271 = vmatprep.subr.mxu0 0.0
    %1272 = vmatpush1.msra.mxu0 0.0
    %1273 = vmatprep.subr.mxu0 0.0
    %1274 = vmatpush1.msra.mxu0 0.0
    %1275 = vmatprep.subr.mxu0 0.0
    %1276 = vmatpush1.msra.mxu0 0.0
    %1277 = vmatprep.subr.mxu0 0.0
    %1278 = vmatpush1.msra.mxu0 0.0
    %1279 = vmatprep.subr.mxu0 0.0
    %1280 = vmatpush1.msra.mxu0 0.0
    %1281 = vmatprep.subr.mxu0 0.0
    %1282 = vmatpush1.msra.mxu0 0.0
    %1283 = vmatprep.subr.mxu0 0.0
    %1284 = vmatpush1.msra.mxu0 0.0
    %1285 = vmatprep.subr.mxu0 0.0
    %1286 = vmatpush1.msra.mxu0 0.0
    %1287 = vmatprep.subr.mxu0 0.0
    %1288 = vmatpush1.msra.mxu0 0.0
    %1289 = vmatprep.subr.mxu0 0.0
    %1290 = vmatpush1.msra.mxu0 0.0
    %1291 = vmatprep.subr.mxu0 0.0
    %1292 = vmatpush1.msra.mxu0 0.0
    %1293 = vmatprep.subr.mxu0 0.0
    %1294 = vmatpush1.msra.mxu0 0.0
    %1295 = vmatprep.subr.mxu0 0.0
    %1296 = vmatpush1.msra.mxu0 0.0
    %1297 = vmatprep.subr.mxu0 0.0
    %1298 = vmatpush1.msra.mxu0 0.0
    %1299 = vmatprep.subr.mxu0 0.0
    %1300 = vmatpush1.msra.mxu0 0.0
    %1301 = vmatprep.subr.mxu0 0.0
    %1302 = vmatpush1.msra.mxu0 0.0
    %1303 = vmatprep.subr.mxu0 0.0
    %1304 = vmatpush1.msra.mxu0 0.0
    %1305 = vmatprep.subr.mxu0 0.0
    %1306 = vmatpush1.msra.mxu0 0.0
    %1307 = vmatprep.subr.mxu0 0.0
    %1308 = vmatpush1.msra.mxu0 0.0
    %1309 = vmatprep.mubr.f32.mxu0 0.0
    %1310 = vmatmul.mubr.f32.gmra.mrb[0].mxu0 %v1240
    %v1311 = vpop.f32.mrb[0].mxu0
    %v1312 = vadd.f32 %v1202, %v1311
    %v1313 = vpop.f32.mrb[0].mxu0
    %v1314 = vadd.f32 %v1206, %v1313
    %1315 = vmatprep.mubr.f32.mxu0 0.0
    %1316 = vmatmul.mubr.f32.gmra.mrb[0].mxu0 %v1243
    %v1317 = vpop.f32.mrb[0].mxu0
    %v1318 = vadd.f32 %v1202, %v1317
    %v1319 = vpop.f32.mrb[0].mxu0
    %v1320 = vadd.f32 %v1206, %v1319
    %1321 = vdwg.mxu0
    %1322 = vmatprep.subr.mxu0 %v1168
    %1323 = vmatpush1.msra.mxu0 %v1167
    %1324 = vmatprep.subr.mxu0 %v1176
    %1325 = vmatpush1.msra.mxu0 %v1175
    %1326 = vmatprep.subr.mxu0 %v1184
    %1327 = vmatpush1.msra.mxu0 %v1183
    %1328 = vmatprep.subr.mxu0 %v1192
    %1329 = vmatpush1.msra.mxu0 %v1191
    %1330 = vmatprep.subr.mxu0 0.0
    %1331 = vmatpush1.msra.mxu0 0.0
    %1332 = vmatprep.subr.mxu0 0.0
    %1333 = vmatpush1.msra.mxu0 0.0
    %1334 = vmatprep.subr.mxu0 0.0
    %1335 = vmatpush1.msra.mxu0 0.0
    %1336 = vmatprep.subr.mxu0 0.0
    %1337 = vmatpush1.msra.mxu0 0.0
    %1338 = vmatprep.subr.mxu0 0.0
    %1339 = vmatpush1.msra.mxu0 0.0
    %1340 = vmatprep.subr.mxu0 0.0
    %1341 = vmatpush1.msra.mxu0 0.0
    %1342 = vmatprep.subr.mxu0 0.0
    %1343 = vmatpush1.msra.mxu0 0.0
    %1344 = vmatprep.subr.mxu0 0.0
    %1345 = vmatpush1.msra.mxu0 0.0
    %1346 = vmatprep.subr.mxu0 0.0
    %1347 = vmatpush1.msra.mxu0 0.0
    %1348 = vmatprep.subr.mxu0 0.0
    %1349 = vmatpush1.msra.mxu0 0.0
    %1350 = vmatprep.subr.mxu0 0.0
    %1351 = vmatpush1.msra.mxu0 0.0
    %1352 = vmatprep.subr.mxu0 0.0
    %1353 = vmatpush1.msra.mxu0 0.0
    %1354 = vmatprep.subr.mxu0 0.0
    %1355 = vmatpush1.msra.mxu0 0.0
    %1356 = vmatprep.subr.mxu0 0.0
    %1357 = vmatpush1.msra.mxu0 0.0
    %1358 = vmatprep.subr.mxu0 0.0
    %1359 = vmatpush1.msra.mxu0 0.0
    %1360 = vmatprep.subr.mxu0 0.0
    %1361 = vmatpush1.msra.mxu0 0.0
    %1362 = vmatprep.subr.mxu0 0.0
    %1363 = vmatpush1.msra.mxu0 0.0
    %1364 = vmatprep.subr.mxu0 0.0
    %1365 = vmatpush1.msra.mxu0 0.0
    %1366 = vmatprep.subr.mxu0 0.0
    %1367 = vmatpush1.msra.mxu0 0.0
    %1368 = vmatprep.subr.mxu0 0.0
    %1369 = vmatpush1.msra.mxu0 0.0
    %1370 = vmatprep.subr.mxu0 0.0
    %1371 = vmatpush1.msra.mxu0 0.0
    %1372 = vmatprep.subr.mxu0 0.0
    %1373 = vmatpush1.msra.mxu0 0.0
    %1374 = vmatprep.subr.mxu0 0.0
    %1375 = vmatpush1.msra.mxu0 0.0
    %1376 = vmatprep.subr.mxu0 0.0
    %1377 = vmatpush1.msra.mxu0 0.0
    %1378 = vmatprep.subr.mxu0 0.0
    %1379 = vmatpush1.msra.mxu0 0.0
    %1380 = vmatprep.subr.mxu0 0.0
    %1381 = vmatpush1.msra.mxu0 0.0
    %1382 = vmatprep.subr.mxu0 0.0
    %1383 = vmatpush1.msra.mxu0 0.0
    %1384 = vmatprep.subr.mxu0 0.0
    %1385 = vmatpush1.msra.mxu0 0.0
    %1386 = vmatprep.mubr.f32.mxu0 0.0
    %1387 = vmatmul.mubr.f32.gmra.mrb[0].mxu0 %v1240
    %v1388 = vpop.f32.mrb[0].mxu0
    %v1389 = vadd.f32 %v1210, %v1388
    %v1390 = vpop.f32.mrb[0].mxu0
    %v1391 = vadd.f32 %v1214, %v1390
    %1392 = vmatprep.mubr.f32.mxu0 0.0
    %1393 = vmatmul.mubr.f32.gmra.mrb[0].mxu0 %v1243
    %v1394 = vpop.f32.mrb[0].mxu0
    %v1395 = vadd.f32 %v1210, %v1394
    %v1396 = vpop.f32.mrb[0].mxu0
    %v1397 = vadd.f32 %v1214, %v1396
    %1398 = vdwg.mxu0
    %1399 = vmatprep.subr.mxu0 %v1170
    %1400 = vmatpush1.msra.mxu0 %v1169
    %1401 = vmatprep.subr.mxu0 %v1178
    %1402 = vmatpush1.msra.mxu0 %v1177
    %1403 = vmatprep.subr.mxu0 %v1186
    %1404 = vmatpush1.msra.mxu0 %v1185
    %1405 = vmatprep.subr.mxu0 %v1194
    %1406 = vmatpush1.msra.mxu0 %v1193
    %1407 = vmatprep.subr.mxu0 0.0
    %1408 = vmatpush1.msra.mxu0 0.0
    %1409 = vmatprep.subr.mxu0 0.0
    %1410 = vmatpush1.msra.mxu0 0.0
    %1411 = vmatprep.subr.mxu0 0.0
    %1412 = vmatpush1.msra.mxu0 0.0
    %1413 = vmatprep.subr.mxu0 0.0
    %1414 = vmatpush1.msra.mxu0 0.0
    %1415 = vmatprep.subr.mxu0 0.0
    %1416 = vmatpush1.msra.mxu0 0.0
    %1417 = vmatprep.subr.mxu0 0.0
    %1418 = vmatpush1.msra.mxu0 0.0
    %1419 = vmatprep.subr.mxu0 0.0
    %1420 = vmatpush1.msra.mxu0 0.0
    %1421 = vmatprep.subr.mxu0 0.0
    %1422 = vmatpush1.msra.mxu0 0.0
    %1423 = vmatprep.subr.mxu0 0.0
    %1424 = vmatpush1.msra.mxu0 0.0
    %1425 = vmatprep.subr.mxu0 0.0
    %1426 = vmatpush1.msra.mxu0 0.0
    %1427 = vmatprep.subr.mxu0 0.0
    %1428 = vmatpush1.msra.mxu0 0.0
    %1429 = vmatprep.subr.mxu0 0.0
    %1430 = vmatpush1.msra.mxu0 0.0
    %1431 = vmatprep.subr.mxu0 0.0
    %1432 = vmatpush1.msra.mxu0 0.0
    %1433 = vmatprep.subr.mxu0 0.0
    %1434 = vmatpush1.msra.mxu0 0.0
    %1435 = vmatprep.subr.mxu0 0.0
    %1436 = vmatpush1.msra.mxu0 0.0
    %1437 = vmatprep.subr.mxu0 0.0
    %1438 = vmatpush1.msra.mxu0 0.0
    %1439 = vmatprep.subr.mxu0 0.0
    %1440 = vmatpush1.msra.mxu0 0.0
    %1441 = vmatprep.subr.mxu0 0.0
    %1442 = vmatpush1.msra.mxu0 0.0
    %1443 = vmatprep.subr.mxu0 0.0
    %1444 = vmatpush1.msra.mxu0 0.0
    %1445 = vmatprep.subr.mxu0 0.0
    %1446 = vmatpush1.msra.mxu0 0.0
    %1447 = vmatprep.subr.mxu0 0.0
    %1448 = vmatpush1.msra.mxu0 0.0
    %1449 = vmatprep.subr.mxu0 0.0
    %1450 = vmatpush1.msra.mxu0 0.0
    %1451 = vmatprep.subr.mxu0 0.0
    %1452 = vmatpush1.msra.mxu0 0.0
    %1453 = vmatprep.subr.mxu0 0.0
    %1454 = vmatpush1.msra.mxu0 0.0
    %1455 = vmatprep.subr.mxu0 0.0
    %1456 = vmatpush1.msra.mxu0 0.0
    %1457 = vmatprep.subr.mxu0 0.0
    %1458 = vmatpush1.msra.mxu0 0.0
    %1459 = vmatprep.subr.mxu0 0.0
    %1460 = vmatpush1.msra.mxu0 0.0
    %1461 = vmatprep.subr.mxu0 0.0
    %1462 = vmatpush1.msra.mxu0 0.0
    %1463 = vmatprep.mubr.f32.mxu0 0.0
    %1464 = vmatmul.mubr.f32.gmra.mrb[0].mxu0 %v1240
    %v1465 = vpop.f32.mrb[0].mxu0
    %v1466 = vadd.f32 %v1218, %v1465
    %v1467 = vpop.f32.mrb[0].mxu0
    %v1468 = vadd.f32 %v1222, %v1467
    %1469 = vmatprep.mubr.f32.mxu0 0.0
    %1470 = vmatmul.mubr.f32.gmra.mrb[0].mxu0 %v1243
    %v1471 = vpop.f32.mrb[0].mxu0
    %v1472 = vadd.f32 %v1218, %v1471
    %v1473 = vpop.f32.mrb[0].mxu0
    %v1474 = vadd.f32 %v1222, %v1473
    %1475 = vdwg.mxu0
    %1476 = vmatprep.subr.mxu0 %v1172
    %1477 = vmatpush1.msra.mxu0 %v1171
    %1478 = vmatprep.subr.mxu0 %v1180
    %1479 = vmatpush1.msra.mxu0 %v1179
    %1480 = vmatprep.subr.mxu0 %v1188
    %1481 = vmatpush1.msra.mxu0 %v1187
    %1482 = vmatprep.subr.mxu0 %v1196
    %1483 = vmatpush1.msra.mxu0 %v1195
    %1484 = vmatprep.subr.mxu0 0.0
    %1485 = vmatpush1.msra.mxu0 0.0
    %1486 = vmatprep.subr.mxu0 0.0
    %1487 = vmatpush1.msra.mxu0 0.0
    %1488 = vmatprep.subr.mxu0 0.0
    %1489 = vmatpush1.msra.mxu0 0.0
    %1490 = vmatprep.subr.mxu0 0.0
    %1491 = vmatpush1.msra.mxu0 0.0
    %1492 = vmatprep.subr.mxu0 0.0
    %1493 = vmatpush1.msra.mxu0 0.0
    %1494 = vmatprep.subr.mxu0 0.0
    %1495 = vmatpush1.msra.mxu0 0.0
    %1496 = vmatprep.subr.mxu0 0.0
    %1497 = vmatpush1.msra.mxu0 0.0
    %1498 = vmatprep.subr.mxu0 0.0
    %1499 = vmatpush1.msra.mxu0 0.0
    %1500 = vmatprep.subr.mxu0 0.0
    %1501 = vmatpush1.msra.mxu0 0.0
    %1502 = vmatprep.subr.mxu0 0.0
    %1503 = vmatpush1.msra.mxu0 0.0
    %1504 = vmatprep.subr.mxu0 0.0
    %1505 = vmatpush1.msra.mxu0 0.0
    %1506 = vmatprep.subr.mxu0 0.0
    %1507 = vmatpush1.msra.mxu0 0.0
    %1508 = vmatprep.subr.mxu0 0.0
    %1509 = vmatpush1.msra.mxu0 0.0
    %1510 = vmatprep.subr.mxu0 0.0
    %1511 = vmatpush1.msra.mxu0 0.0
    %1512 = vmatprep.subr.mxu0 0.0
    %1513 = vmatpush1.msra.mxu0 0.0
    %1514 = vmatprep.subr.mxu0 0.0
    %1515 = vmatpush1.msra.mxu0 0.0
    %1516 = vmatprep.subr.mxu0 0.0
    %1517 = vmatpush1.msra.mxu0 0.0
    %1518 = vmatprep.subr.mxu0 0.0
    %1519 = vmatpush1.msra.mxu0 0.0
    %1520 = vmatprep.subr.mxu0 0.0
    %1521 = vmatpush1.msra.mxu0 0.0
    %1522 = vmatprep.subr.mxu0 0.0
    %1523 = vmatpush1.msra.mxu0 0.0
    %1524 = vmatprep.subr.mxu0 0.0
    %1525 = vmatpush1.msra.mxu0 0.0
    %1526 = vmatprep.subr.mxu0 0.0
    %1527 = vmatpush1.msra.mxu0 0.0
    %1528 = vmatprep.subr.mxu0 0.0
    %1529 = vmatpush1.msra.mxu0 0.0
    %1530 = vmatprep.subr.mxu0 0.0
    %1531 = vmatpush1.msra.mxu0 0.0
    %1532 = vmatprep.subr.mxu0 0.0
    %1533 = vmatpush1.msra.mxu0 0.0
    %1534 = vmatprep.subr.mxu0 0.0
    %1535 = vmatpush1.msra.mxu0 0.0
    %1536 = vmatprep.subr.mxu0 0.0
    %1537 = vmatpush1.msra.mxu0 0.0
    %1538 = vmatprep.subr.mxu0 0.0
    %1539 = vmatpush1.msra.mxu0 0.0
    %1540 = vmatprep.mubr.f32.mxu0 0.0
    %1541 = vmatmul.mubr.f32.gmra.mrb[0].mxu0 %v1240
    %v1542 = vpop.f32.mrb[0].mxu0
    %v1543 = vadd.f32 %v1226, %v1542
    %v1544 = vpop.f32.mrb[0].mxu0
    %v1545 = vadd.f32 %v1230, %v1544
    %1546 = vmatprep.mubr.f32.mxu0 0.0
    %1547 = vmatmul.mubr.f32.gmra.mrb[0].mxu0 %v1243
    %v1548 = vpop.f32.mrb[0].mxu0
    %v1549 = vadd.f32 %v1226, %v1548
    %v1550 = vpop.f32.mrb[0].mxu0
    %v1551 = vadd.f32 %v1230, %v1550
    %1552 = vdwg.mxu0
    %v1553 = vmax.f32 %v1312, 0.0
    %v1554 = vmax.f32 %v1314, 0.0
    %v1555 = vmax.f32 %v1389, 0.0
    %v1556 = vmax.f32 %v1391, 0.0
    %v1557 = vmax.f32 %v1466, 0.0
    %v1558 = vmax.f32 %v1468, 0.0
    %v1559 = vmax.f32 %v1543, 0.0
    %v1560 = vmax.f32 %v1545, 0.0
    %v1561 = vmax.f32 %v1318, 0.0
    %v1562 = vmax.f32 %v1320, 0.0
    %v1563 = vmax.f32 %v1395, 0.0
    %v1564 = vmax.f32 %v1397, 0.0
    %v1565 = vmax.f32 %v1472, 0.0
    %v1566 = vmax.f32 %v1474, 0.0
    %v1567 = vmax.f32 %v1549, 0.0
    %v1568 = vmax.f32 %v1551, 0.0
    %v1569 = vld [vmem:[%s13] sm:$0xff]
    %v1570 = vld [vmem:[%s13 + $0x8] sm:$0xff]
    %v1571 = vld [vmem:[%s13 + $0x10] sm:$0xff]
    %v1572 = vld [vmem:[%s13 + $0x18] sm:$0xff]
    %v1573 = vld [vmem:[%s13 + $0x20] sm:$0xff]
    %v1574 = vld [vmem:[%s13 + $0x28] sm:$0xff]
    %v1575 = vld [vmem:[%s13 + $0x30] sm:$0xff]
    %v1576 = vld [vmem:[%s13 + $0x38] sm:$0xff]
    %v1577 = vld [vmem:[%s13 + $0x40] sm:$0xff]
    %v1578 = vld [vmem:[%s13 + $0x48] sm:$0xff]
    %v1579 = vld [vmem:[%s13 + $0x50] sm:$0xff]
    %v1580 = vld [vmem:[%s13 + $0x58] sm:$0xff]
    %v1581 = vld [vmem:[%s13 + $0x60] sm:$0xff]
    %v1582 = vld [vmem:[%s13 + $0x68] sm:$0xff]
    %v1583 = vld [vmem:[%s13 + $0x70] sm:$0xff]
    %v1584 = vld [vmem:[%s13 + $0x78] sm:$0xff]
    %v1585 = vld [vmem:[%s13 + $0x80] sm:$0xff]
    %v1586 = vld [vmem:[%s13 + $0x88] sm:$0xff]
    %v1587 = vld [vmem:[%s13 + $0x90] sm:$0xff]
    %v1588 = vld [vmem:[%s13 + $0x98] sm:$0xff]
    %v1589 = vld [vmem:[%s13 + $0xa0] sm:$0xff]
    %v1590 = vld [vmem:[%s13 + $0xa8] sm:$0xff]
    %v1591 = vld [vmem:[%s13 + $0xb0] sm:$0xff]
    %v1592 = vld [vmem:[%s13 + $0xb8] sm:$0xff]
    %v1593 = vld [vmem:[%s13 + $0xc0] sm:$0xff]
    %v1594 = vld [vmem:[%s13 + $0xc8] sm:$0xff]
    %v1595 = vld [vmem:[%s13 + $0xd0] sm:$0xff]
    %v1596 = vld [vmem:[%s13 + $0xd8] sm:$0xff]
    %v1597 = vld [vmem:[%s13 + $0xe0] sm:$0xff]
    %v1598 = vld [vmem:[%s13 + $0xe8] sm:$0xff]
    %v1599 = vld [vmem:[%s13 + $0xf0] sm:$0xff]
    %v1600 = vld [vmem:[%s13 + $0xf8] sm:$0xff]
    %v1601 = vld [vmem:[%s13 + $0x100] sm:$0xff]
    %v1602 = vld [vmem:[%s13 + $0x108] sm:$0xff]
    %v1603 = vld [vmem:[%s13 + $0x110] sm:$0xff]
    %v1604 = vld [vmem:[%s13 + $0x118] sm:$0xff]
    %v1605 = vld [vmem:[%s13 + $0x120] sm:$0xff]
    %v1606 = vld [vmem:[%s13 + $0x128] sm:$0xff]
    %v1607 = vld [vmem:[%s13 + $0x130] sm:$0xff]
    %v1608 = vld [vmem:[%s13 + $0x138] sm:$0xff]
    %v1609 = vld [vmem:[%s13 + $0x140] sm:$0xff]
    %v1610 = vld [vmem:[%s13 + $0x148] sm:$0xff]
    %v1611 = vld [vmem:[%s13 + $0x150] sm:$0xff]
    %v1612 = vld [vmem:[%s13 + $0x158] sm:$0xff]
    %v1613 = vld [vmem:[%s13 + $0x160] sm:$0xff]
    %v1614 = vld [vmem:[%s13 + $0x168] sm:$0xff]
    %v1615 = vld [vmem:[%s13 + $0x170] sm:$0xff]
    %v1616 = vld [vmem:[%s13 + $0x178] sm:$0xff]
    %v1617 = vld [vmem:[%s13 + $0x180] sm:$0xff]
    %v1618 = vld [vmem:[%s13 + $0x188] sm:$0xff]
    %v1619 = vld [vmem:[%s13 + $0x190] sm:$0xff]
    %v1620 = vld [vmem:[%s13 + $0x198] sm:$0xff]
    %v1621 = vld [vmem:[%s13 + $0x1a0] sm:$0xff]
    %v1622 = vld [vmem:[%s13 + $0x1a8] sm:$0xff]
    %v1623 = vld [vmem:[%s13 + $0x1b0] sm:$0xff]
    %v1624 = vld [vmem:[%s13 + $0x1b8] sm:$0xff]
    %v1625 = vld [vmem:[%s13 + $0x1c0] sm:$0xff]
    %v1626 = vld [vmem:[%s13 + $0x1c8] sm:$0xff]
    %v1627 = vld [vmem:[%s13 + $0x1d0] sm:$0xff]
    %v1628 = vld [vmem:[%s13 + $0x1d8] sm:$0xff]
    %v1629 = vld [vmem:[%s13 + $0x1e0] sm:$0xff]
    %v1630 = vld [vmem:[%s13 + $0x1e8] sm:$0xff]
    %v1631 = vld [vmem:[%s13 + $0x1f0] sm:$0xff]
    %v1632 = vld [vmem:[%s13 + $0x1f8] sm:$0xff]
    %v1633 = vld [vmem:[%s13 + $0x200] sm:$0xff]
    %v1634 = vld [vmem:[%s13 + $0x208] sm:$0xff]
    %v1635 = vld [vmem:[%s13 + $0x210] sm:$0xff]
    %v1636 = vld [vmem:[%s13 + $0x218] sm:$0xff]
    %v1637 = vld [vmem:[%s13 + $0x220] sm:$0xff]
    %v1638 = vld [vmem:[%s13 + $0x228] sm:$0xff]
    %v1639 = vld [vmem:[%s13 + $0x230] sm:$0xff]
    %v1640 = vld [vmem:[%s13 + $0x238] sm:$0xff]
    %v1641 = vld [vmem:[%s13 + $0x240] sm:$0xff]
    %v1642 = vld [vmem:[%s13 + $0x248] sm:$0xff]
    %v1643 = vld [vmem:[%s13 + $0x250] sm:$0xff]
    %v1644 = vld [vmem:[%s13 + $0x258] sm:$0xff]
    %v1645 = vld [vmem:[%s13 + $0x260] sm:$0xff]
    %v1646 = vld [vmem:[%s13 + $0x268] sm:$0xff]
    %v1647 = vld [vmem:[%s13 + $0x270] sm:$0xff]
    %v1648 = vld [vmem:[%s13 + $0x278] sm:$0xff]
    %v1649 = vld [vmem:[%s13 + $0x280] sm:$0xff]
    %v1650 = vld [vmem:[%s13 + $0x288] sm:$0xff]
    %v1651 = vld [vmem:[%s13 + $0x290] sm:$0xff]
    %v1652 = vld [vmem:[%s13 + $0x298] sm:$0xff]
    %v1653 = vld [vmem:[%s13 + $0x2a0] sm:$0xff]
    %v1654 = vld [vmem:[%s13 + $0x2a8] sm:$0xff]
    %v1655 = vld [vmem:[%s13 + $0x2b0] sm:$0xff]
    %v1656 = vld [vmem:[%s13 + $0x2b8] sm:$0xff]
    %v1657 = vld [vmem:[%s13 + $0x2c0] sm:$0xff]
    %v1658 = vld [vmem:[%s13 + $0x2c8] sm:$0xff]
    %v1659 = vld [vmem:[%s13 + $0x2d0] sm:$0xff]
    %v1660 = vld [vmem:[%s13 + $0x2d8] sm:$0xff]
    %v1661 = vld [vmem:[%s13 + $0x2e0] sm:$0xff]
    %v1662 = vld [vmem:[%s13 + $0x2e8] sm:$0xff]
    %v1663 = vld [vmem:[%s13 + $0x2f0] sm:$0xff]
    %v1664 = vld [vmem:[%s13 + $0x2f8] sm:$0xff]
    %v1665 = vld [vmem:[%s13 + $0x300] sm:$0xff]
    %v1666 = vld [vmem:[%s13 + $0x308] sm:$0xff]
    %v1667 = vld [vmem:[%s13 + $0x310] sm:$0xff]
    %v1668 = vld [vmem:[%s13 + $0x318] sm:$0xff]
    %v1669 = vld [vmem:[%s13 + $0x320] sm:$0xff]
    %v1670 = vld [vmem:[%s13 + $0x328] sm:$0xff]
    %v1671 = vld [vmem:[%s13 + $0x330] sm:$0xff]
    %v1672 = vld [vmem:[%s13 + $0x338] sm:$0xff]
    %v1673 = vld [vmem:[%s13 + $0x340] sm:$0xff]
    %v1674 = vld [vmem:[%s13 + $0x348] sm:$0xff]
    %v1675 = vld [vmem:[%s13 + $0x350] sm:$0xff]
    %v1676 = vld [vmem:[%s13 + $0x358] sm:$0xff]
    %v1677 = vld [vmem:[%s13 + $0x360] sm:$0xff]
    %v1678 = vld [vmem:[%s13 + $0x368] sm:$0xff]
    %v1679 = vld [vmem:[%s13 + $0x370] sm:$0xff]
    %v1680 = vld [vmem:[%s13 + $0x378] sm:$0xff]
    %v1681 = vld [vmem:[%s13 + $0x380] sm:$0xff]
    %v1682 = vld [vmem:[%s13 + $0x388] sm:$0xff]
    %v1683 = vld [vmem:[%s13 + $0x390] sm:$0xff]
    %v1684 = vld [vmem:[%s13 + $0x398] sm:$0xff]
    %v1685 = vld [vmem:[%s13 + $0x3a0] sm:$0xff]
    %v1686 = vld [vmem:[%s13 + $0x3a8] sm:$0xff]
    %v1687 = vld [vmem:[%s13 + $0x3b0] sm:$0xff]
    %v1688 = vld [vmem:[%s13 + $0x3b8] sm:$0xff]
    %v1689 = vld [vmem:[%s13 + $0x3c0] sm:$0xff]
    %v1690 = vld [vmem:[%s13 + $0x3c8] sm:$0xff]
    %v1691 = vld [vmem:[%s13 + $0x3d0] sm:$0xff]
    %v1692 = vld [vmem:[%s13 + $0x3d8] sm:$0xff]
    %v1693 = vld [vmem:[%s13 + $0x3e0] sm:$0xff]
    %v1694 = vld [vmem:[%s13 + $0x3e8] sm:$0xff]
    %v1695 = vld [vmem:[%s13 + $0x3f0] sm:$0xff]
    %v1696 = vld [vmem:[%s13 + $0x3f8] sm:$0xff]
    %1697 = vmatprep.subr.mxu0 0.0
    %1698 = vmatpush1.msra.mxu0 %v1569
    %1699 = vmatprep.subr.mxu0 0.0
    %1700 = vmatpush1.msra.mxu0 %v1570
    %1701 = vmatprep.subr.mxu0 0.0
    %1702 = vmatpush1.msra.mxu0 %v1571
    %1703 = vmatprep.subr.mxu0 0.0
    %1704 = vmatpush1.msra.mxu0 %v1572
    %1705 = vmatprep.subr.mxu0 0.0
    %1706 = vmatpush1.msra.mxu0 %v1573
    %1707 = vmatprep.subr.mxu0 0.0
    %1708 = vmatpush1.msra.mxu0 %v1574
    %1709 = vmatprep.subr.mxu0 0.0
    %1710 = vmatpush1.msra.mxu0 %v1575
    %1711 = vmatprep.subr.mxu0 0.0
    %1712 = vmatpush1.msra.mxu0 %v1576
    %1713 = vmatprep.subr.mxu0 0.0
    %1714 = vmatpush1.msra.mxu0 %v1577
    %1715 = vmatprep.subr.mxu0 0.0
    %1716 = vmatpush1.msra.mxu0 %v1578
    %1717 = vmatprep.subr.mxu0 0.0
    %1718 = vmatpush1.msra.mxu0 %v1579
    %1719 = vmatprep.subr.mxu0 0.0
    %1720 = vmatpush1.msra.mxu0 %v1580
    %1721 = vmatprep.subr.mxu0 0.0
    %1722 = vmatpush1.msra.mxu0 %v1581
    %1723 = vmatprep.subr.mxu0 0.0
    %1724 = vmatpush1.msra.mxu0 %v1582
    %1725 = vmatprep.subr.mxu0 0.0
    %1726 = vmatpush1.msra.mxu0 %v1583
    %1727 = vmatprep.subr.mxu0 0.0
    %1728 = vmatpush1.msra.mxu0 %v1584
    %1729 = vmatprep.subr.mxu0 0.0
    %1730 = vmatpush1.msra.mxu0 %v1585
    %1731 = vmatprep.subr.mxu0 0.0
    %1732 = vmatpush1.msra.mxu0 %v1586
    %1733 = vmatprep.subr.mxu0 0.0
    %1734 = vmatpush1.msra.mxu0 %v1587
    %1735 = vmatprep.subr.mxu0 0.0
    %1736 = vmatpush1.msra.mxu0 %v1588
    %1737 = vmatprep.subr.mxu0 0.0
    %1738 = vmatpush1.msra.mxu0 %v1589
    %1739 = vmatprep.subr.mxu0 0.0
    %1740 = vmatpush1.msra.mxu0 %v1590
    %1741 = vmatprep.subr.mxu0 0.0
    %1742 = vmatpush1.msra.mxu0 %v1591
    %1743 = vmatprep.subr.mxu0 0.0
    %1744 = vmatpush1.msra.mxu0 %v1592
    %1745 = vmatprep.subr.mxu0 0.0
    %1746 = vmatpush1.msra.mxu0 %v1593
    %1747 = vmatprep.subr.mxu0 0.0
    %1748 = vmatpush1.msra.mxu0 %v1594
    %1749 = vmatprep.subr.mxu0 0.0
    %1750 = vmatpush1.msra.mxu0 %v1595
    %1751 = vmatprep.subr.mxu0 0.0
    %1752 = vmatpush1.msra.mxu0 %v1596
    %1753 = vmatprep.subr.mxu0 0.0
    %1754 = vmatpush1.msra.mxu0 %v1597
    %1755 = vmatprep.subr.mxu0 0.0
    %1756 = vmatpush1.msra.mxu0 %v1598
    %1757 = vmatprep.subr.mxu0 0.0
    %1758 = vmatpush1.msra.mxu0 %v1599
    %1759 = vmatprep.subr.mxu0 0.0
    %1760 = vmatpush1.msra.mxu0 %v1600
    %1761 = vmatprep.mubr.f32.mxu0 %v1554
    %1762 = vmatmul.mubr.f32.gmra.mrb[0].mxu0 %v1553
    %v1763 = vpop.f32.mrb[0].mxu0
    %v1764 = vadd.f32 0.0, %v1763
    %v1765 = vpop.f32.mrb[0].mxu0
    %1766 = vmatprep.mubr.f32.mxu0 %v1562
    %1767 = vmatmul.mubr.f32.gmra.mrb[0].mxu0 %v1561
    %v1768 = vpop.f32.mrb[0].mxu0
    %v1769 = vadd.f32 0.0, %v1768
    %v1770 = vpop.f32.mrb[0].mxu0
    %1771 = vdwg.mxu0
    %1772 = vmatprep.subr.mxu0 0.0
    %1773 = vmatpush1.msra.mxu0 %v1601
    %1774 = vmatprep.subr.mxu0 0.0
    %1775 = vmatpush1.msra.mxu0 %v1602
    %1776 = vmatprep.subr.mxu0 0.0
    %1777 = vmatpush1.msra.mxu0 %v1603
    %1778 = vmatprep.subr.mxu0 0.0
    %1779 = vmatpush1.msra.mxu0 %v1604
    %1780 = vmatprep.subr.mxu0 0.0
    %1781 = vmatpush1.msra.mxu0 %v1605
    %1782 = vmatprep.subr.mxu0 0.0
    %1783 = vmatpush1.msra.mxu0 %v1606
    %1784 = vmatprep.subr.mxu0 0.0
    %1785 = vmatpush1.msra.mxu0 %v1607
    %1786 = vmatprep.subr.mxu0 0.0
    %1787 = vmatpush1.msra.mxu0 %v1608
    %1788 = vmatprep.subr.mxu0 0.0
    %1789 = vmatpush1.msra.mxu0 %v1609
    %1790 = vmatprep.subr.mxu0 0.0
    %1791 = vmatpush1.msra.mxu0 %v1610
    %1792 = vmatprep.subr.mxu0 0.0
    %1793 = vmatpush1.msra.mxu0 %v1611
    %1794 = vmatprep.subr.mxu0 0.0
    %1795 = vmatpush1.msra.mxu0 %v1612
    %1796 = vmatprep.subr.mxu0 0.0
    %1797 = vmatpush1.msra.mxu0 %v1613
    %1798 = vmatprep.subr.mxu0 0.0
    %1799 = vmatpush1.msra.mxu0 %v1614
    %1800 = vmatprep.subr.mxu0 0.0
    %1801 = vmatpush1.msra.mxu0 %v1615
    %1802 = vmatprep.subr.mxu0 0.0
    %1803 = vmatpush1.msra.mxu0 %v1616
    %1804 = vmatprep.subr.mxu0 0.0
    %1805 = vmatpush1.msra.mxu0 %v1617
    %1806 = vmatprep.subr.mxu0 0.0
    %1807 = vmatpush1.msra.mxu0 %v1618
    %1808 = vmatprep.subr.mxu0 0.0
    %1809 = vmatpush1.msra.mxu0 %v1619
    %1810 = vmatprep.subr.mxu0 0.0
    %1811 = vmatpush1.msra.mxu0 %v1620
    %1812 = vmatprep.subr.mxu0 0.0
    %1813 = vmatpush1.msra.mxu0 %v1621
    %1814 = vmatprep.subr.mxu0 0.0
    %1815 = vmatpush1.msra.mxu0 %v1622
    %1816 = vmatprep.subr.mxu0 0.0
    %1817 = vmatpush1.msra.mxu0 %v1623
    %1818 = vmatprep.subr.mxu0 0.0
    %1819 = vmatpush1.msra.mxu0 %v1624
    %1820 = vmatprep.subr.mxu0 0.0
    %1821 = vmatpush1.msra.mxu0 %v1625
    %1822 = vmatprep.subr.mxu0 0.0
    %1823 = vmatpush1.msra.mxu0 %v1626
    %1824 = vmatprep.subr.mxu0 0.0
    %1825 = vmatpush1.msra.mxu0 %v1627
    %1826 = vmatprep.subr.mxu0 0.0
    %1827 = vmatpush1.msra.mxu0 %v1628
    %1828 = vmatprep.subr.mxu0 0.0
    %1829 = vmatpush1.msra.mxu0 %v1629
    %1830 = vmatprep.subr.mxu0 0.0
    %1831 = vmatpush1.msra.mxu0 %v1630
    %1832 = vmatprep.subr.mxu0 0.0
    %1833 = vmatpush1.msra.mxu0 %v1631
    %1834 = vmatprep.subr.mxu0 0.0
    %1835 = vmatpush1.msra.mxu0 %v1632
    %1836 = vmatprep.mubr.f32.mxu0 %v1556
    %1837 = vmatmul.mubr.f32.gmra.mrb[0].mxu0 %v1555
    %v1838 = vpop.f32.mrb[0].mxu0
    %v1839 = vadd.f32 %v1764, %v1838
    %v1840 = vpop.f32.mrb[0].mxu0
    %1841 = vmatprep.mubr.f32.mxu0 %v1564
    %1842 = vmatmul.mubr.f32.gmra.mrb[0].mxu0 %v1563
    %v1843 = vpop.f32.mrb[0].mxu0
    %v1844 = vadd.f32 %v1769, %v1843
    %v1845 = vpop.f32.mrb[0].mxu0
    %1846 = vdwg.mxu0
    %1847 = vmatprep.subr.mxu0 0.0
    %1848 = vmatpush1.msra.mxu0 %v1633
    %1849 = vmatprep.subr.mxu0 0.0
    %1850 = vmatpush1.msra.mxu0 %v1634
    %1851 = vmatprep.subr.mxu0 0.0
    %1852 = vmatpush1.msra.mxu0 %v1635
    %1853 = vmatprep.subr.mxu0 0.0
    %1854 = vmatpush1.msra.mxu0 %v1636
    %1855 = vmatprep.subr.mxu0 0.0
    %1856 = vmatpush1.msra.mxu0 %v1637
    %1857 = vmatprep.subr.mxu0 0.0
    %1858 = vmatpush1.msra.mxu0 %v1638
    %1859 = vmatprep.subr.mxu0 0.0
    %1860 = vmatpush1.msra.mxu0 %v1639
    %1861 = vmatprep.subr.mxu0 0.0
    %1862 = vmatpush1.msra.mxu0 %v1640
    %1863 = vmatprep.subr.mxu0 0.0
    %1864 = vmatpush1.msra.mxu0 %v1641
    %1865 = vmatprep.subr.mxu0 0.0
    %1866 = vmatpush1.msra.mxu0 %v1642
    %1867 = vmatprep.subr.mxu0 0.0
    %1868 = vmatpush1.msra.mxu0 %v1643
    %1869 = vmatprep.subr.mxu0 0.0
    %1870 = vmatpush1.msra.mxu0 %v1644
    %1871 = vmatprep.subr.mxu0 0.0
    %1872 = vmatpush1.msra.mxu0 %v1645
    %1873 = vmatprep.subr.mxu0 0.0
    %1874 = vmatpush1.msra.mxu0 %v1646
    %1875 = vmatprep.subr.mxu0 0.0
    %1876 = vmatpush1.msra.mxu0 %v1647
    %1877 = vmatprep.subr.mxu0 0.0
    %1878 = vmatpush1.msra.mxu0 %v1648
    %1879 = vmatprep.subr.mxu0 0.0
    %1880 = vmatpush1.msra.mxu0 %v1649
    %1881 = vmatprep.subr.mxu0 0.0
    %1882 = vmatpush1.msra.mxu0 %v1650
    %1883 = vmatprep.subr.mxu0 0.0
    %1884 = vmatpush1.msra.mxu0 %v1651
    %1885 = vmatprep.subr.mxu0 0.0
    %1886 = vmatpush1.msra.mxu0 %v1652
    %1887 = vmatprep.subr.mxu0 0.0
    %1888 = vmatpush1.msra.mxu0 %v1653
    %1889 = vmatprep.subr.mxu0 0.0
    %1890 = vmatpush1.msra.mxu0 %v1654
    %1891 = vmatprep.subr.mxu0 0.0
    %1892 = vmatpush1.msra.mxu0 %v1655
    %1893 = vmatprep.subr.mxu0 0.0
    %1894 = vmatpush1.msra.mxu0 %v1656
    %1895 = vmatprep.subr.mxu0 0.0
    %1896 = vmatpush1.msra.mxu0 %v1657
    %1897 = vmatprep.subr.mxu0 0.0
    %1898 = vmatpush1.msra.mxu0 %v1658
    %1899 = vmatprep.subr.mxu0 0.0
    %1900 = vmatpush1.msra.mxu0 %v1659
    %1901 = vmatprep.subr.mxu0 0.0
    %1902 = vmatpush1.msra.mxu0 %v1660
    %1903 = vmatprep.subr.mxu0 0.0
    %1904 = vmatpush1.msra.mxu0 %v1661
    %1905 = vmatprep.subr.mxu0 0.0
    %1906 = vmatpush1.msra.mxu0 %v1662
    %1907 = vmatprep.subr.mxu0 0.0
    %1908 = vmatpush1.msra.mxu0 %v1663
    %1909 = vmatprep.subr.mxu0 0.0
    %1910 = vmatpush1.msra.mxu0 %v1664
    %1911 = vmatprep.mubr.f32.mxu0 %v1558
    %1912 = vmatmul.mubr.f32.gmra.mrb[0].mxu0 %v1557
    %v1913 = vpop.f32.mrb[0].mxu0
    %v1914 = vadd.f32 %v1839, %v1913
    %v1915 = vpop.f32.mrb[0].mxu0
    %1916 = vmatprep.mubr.f32.mxu0 %v1566
    %1917 = vmatmul.mubr.f32.gmra.mrb[0].mxu0 %v1565
    %v1918 = vpop.f32.mrb[0].mxu0
    %v1919 = vadd.f32 %v1844, %v1918
    %v1920 = vpop.f32.mrb[0].mxu0
    %1921 = vdwg.mxu0
    %1922 = vmatprep.subr.mxu0 0.0
    %1923 = vmatpush1.msra.mxu0 %v1665
    %1924 = vmatprep.subr.mxu0 0.0
    %1925 = vmatpush1.msra.mxu0 %v1666
    %1926 = vmatprep.subr.mxu0 0.0
    %1927 = vmatpush1.msra.mxu0 %v1667
    %1928 = vmatprep.subr.mxu0 0.0
    %1929 = vmatpush1.msra.mxu0 %v1668
    %1930 = vmatprep.subr.mxu0 0.0
    %1931 = vmatpush1.msra.mxu0 %v1669
    %1932 = vmatprep.subr.mxu0 0.0
    %1933 = vmatpush1.msra.mxu0 %v1670
    %1934 = vmatprep.subr.mxu0 0.0
    %1935 = vmatpush1.msra.mxu0 %v1671
    %1936 = vmatprep.subr.mxu0 0.0
    %1937 = vmatpush1.msra.mxu0 %v1672
    %1938 = vmatprep.subr.mxu0 0.0
    %1939 = vmatpush1.msra.mxu0 %v1673
    %1940 = vmatprep.subr.mxu0 0.0
    %1941 = vmatpush1.msra.mxu0 %v1674
    %1942 = vmatprep.subr.mxu0 0.0
    %1943 = vmatpush1.msra.mxu0 %v1675
    %1944 = vmatprep.subr.mxu0 0.0
    %1945 = vmatpush1.msra.mxu0 %v1676
    %1946 = vmatprep.subr.mxu0 0.0
    %1947 = vmatpush1.msra.mxu0 %v1677
    %1948 = vmatprep.subr.mxu0 0.0
    %1949 = vmatpush1.msra.mxu0 %v1678
    %1950 = vmatprep.subr.mxu0 0.0
    %1951 = vmatpush1.msra.mxu0 %v1679
    %1952 = vmatprep.subr.mxu0 0.0
    %1953 = vmatpush1.msra.mxu0 %v1680
    %1954 = vmatprep.subr.mxu0 0.0
    %1955 = vmatpush1.msra.mxu0 %v1681
    %1956 = vmatprep.subr.mxu0 0.0
    %1957 = vmatpush1.msra.mxu0 %v1682
    %1958 = vmatprep.subr.mxu0 0.0
    %1959 = vmatpush1.msra.mxu0 %v1683
    %1960 = vmatprep.subr.mxu0 0.0
    %1961 = vmatpush1.msra.mxu0 %v1684
    %1962 = vmatprep.subr.mxu0 0.0
    %1963 = vmatpush1.msra.mxu0 %v1685
    %1964 = vmatprep.subr.mxu0 0.0
    %1965 = vmatpush1.msra.mxu0 %v1686
    %1966 = vmatprep.subr.mxu0 0.0
    %1967 = vmatpush1.msra.mxu0 %v1687
    %1968 = vmatprep.subr.mxu0 0.0
    %1969 = vmatpush1.msra.mxu0 %v1688
    %1970 = vmatprep.subr.mxu0 0.0
    %1971 = vmatpush1.msra.mxu0 %v1689
    %1972 = vmatprep.subr.mxu0 0.0
    %1973 = vmatpush1.msra.mxu0 %v1690
    %1974 = vmatprep.subr.mxu0 0.0
    %1975 = vmatpush1.msra.mxu0 %v1691
    %1976 = vmatprep.subr.mxu0 0.0
    %1977 = vmatpush1.msra.mxu0 %v1692
    %1978 = vmatprep.subr.mxu0 0.0
    %1979 = vmatpush1.msra.mxu0 %v1693
    %1980 = vmatprep.subr.mxu0 0.0
    %1981 = vmatpush1.msra.mxu0 %v1694
    %1982 = vmatprep.subr.mxu0 0.0
    %1983 = vmatpush1.msra.mxu0 %v1695
    %1984 = vmatprep.subr.mxu0 0.0
    %1985 = vmatpush1.msra.mxu0 %v1696
    %1986 = vmatprep.mubr.f32.mxu0 %v1560
    %1987 = vmatmul.mubr.f32.gmra.mrb[0].mxu0 %v1559
    %v1988 = vpop.f32.mrb[0].mxu0
    %v1989 = vadd.f32 %v1914, %v1988
    %v1990 = vpop.f32.mrb[0].mxu0
    %1991 = vmatprep.mubr.f32.mxu0 %v1568
    %1992 = vmatmul.mubr.f32.gmra.mrb[0].mxu0 %v1567
    %v1993 = vpop.f32.mrb[0].mxu0
    %v1994 = vadd.f32 %v1919, %v1993
    %v1995 = vpop.f32.mrb[0].mxu0
    %1996 = vdwg.mxu0
    %v1997 = vadd.f32 %v1105, %v1989
    %v1998 = vadd.f32 %v1106, %v1994
    %v1999 = vld [vmem:[%s14] sm:$0x1]
    %v2001 = vlaneseq
    %v2002 = vshrl.u32 %v2001, 7
    %v2003 = vsub.s32 0, %v2002
    %v2004 = vrot.slane %v1999, %v2003
    %v2006 = vadd.f32 %v1997, %v2004
    %v2007 = vadd.f32 %v1998, %v2004
    %s2008 = scalar_lea.vmem %s3, 1
    %v2009 = vld [vmem:[%s2008] sm:$0x1]
    %s2010 = scalar_lea.vmem %s4, 1
    %v2011 = vld [vmem:[%s2010] sm:$0x1]
    %v2012 = vsel %vm75, %v2006, 0.0
    %2013 = vadd.xlane.f32.xlu0 %v2012
    %v2014 = vpop.xlane.xlu0 %2013
    %v2015 = vsel %vm75, %v2007, 0.0
    %2016 = vadd.xlane.f32.xlu0 %v2015
    %v2017 = vpop.xlane.xlu0 %2016
    %v2018 = vmul.f32 %v2014, %v82
    %v2019 = vmul.f32 %v2017, %v82
    %v2020 = vsub.f32 %v2006, %v2018
    %v2021 = vsub.f32 %v2007, %v2019
    %v2022 = vmul.f32 %v2020, %v2020
    %v2023 = vmul.f32 %v2021, %v2021
    %v2024 = vsel %vm75, %v2022, 0.0
    %2025 = vadd.xlane.f32.xlu0 %v2024
    %v2026 = vpop.xlane.xlu0 %2025
    %v2027 = vsel %vm75, %v2023, 0.0
    %2028 = vadd.xlane.f32.xlu0 %v2027
    %v2029 = vpop.xlane.xlu0 %2028
    %v2030 = vmul.f32 %v2026, 0.032258064
    %v2031 = vmul.f32 %v2029, 0.032258064
    %v2032 = vrsqrt.pop %v2030
    %v2033 = vmul.f32 %v2030, %v2032
    %vm2034 = vcmp.eq.f32.partialorder %v2030, inf
    %v2035 = vsel %vm2034, %v2030, %v2033
    %vm2036 = vcmp.eq.f32.partialorder %v2030, 0.0
    %v2037 = vand.u32 %v2030, 2147483648
    %v2038 = vsel %vm2036, %v2037, %v2035
    %v2039 = vrsqrt.pop %v2031
    %v2040 = vmul.f32 %v2031, %v2039
    %vm2041 = vcmp.eq.f32.partialorder %v2031, inf
    %v2042 = vsel %vm2041, %v2031, %v2040
    %vm2043 = vcmp.eq.f32.partialorder %v2031, 0.0
    %v2044 = vand.u32 %v2031, 2147483648
    %v2045 = vsel %vm2043, %v2044, %v2042
    %v2047 = vlaneseq
    %v2048 = vshrl.u32 %v2047, 7
    %v2049 = vsub.s32 0, %v2048
    %v2050 = vrot.slane %v2009, %v2049
    %v2052 = vmul.f32 %v2050, %v2020
    %v2053 = vmul.f32 %v2050, %v2021
    %v2054 = vadd.f32 %v2038, 1e-06
    %v2055 = vadd.f32 %v2045, 1e-06
    %v2056 = vrcp.pop %v2054
    %v2057 = vmul.f32 %v2052, %v2056
    %v2058 = vrcp.pop %v2055
    %v2059 = vmul.f32 %v2053, %v2058
    %v2061 = vlaneseq
    %v2062 = vshrl.u32 %v2061, 7
    %v2063 = vsub.s32 0, %v2062
    %v2064 = vrot.slane %v2011, %v2063
    %v2066 = vadd.f32 %v2057, %v2064
    %v2067 = vadd.f32 %v2059, %v2064
    %s2068 = scalar_lea.vmem %s5, 32
    %v2069 = vld [vmem:[%s2068] sm:$0xff]
    %v2070 = vld [vmem:[%s2068 + $0x8] sm:$0xff]
    %v2071 = vld [vmem:[%s2068 + $0x10] sm:$0xff]
    %v2072 = vld [vmem:[%s2068 + $0x18] sm:$0xff]
    %s2073 = scalar_lea.vmem %s6, 1
    %v2074 = vld [vmem:[%s2073] sm:$0x1]
    %v2076 = vlaneseq
    %v2077 = vshrl.u32 %v2076, 7
    %v2078 = vsub.s32 0, %v2077
    %v2079 = vrot.slane %v2074, %v2078
    %v2082 = vsel %vm75, %v2066, 0
    %v2085 = vsel %vm75, %v2067, 0
    %2087 = vmatprep.subr.mxu0 0.0
    %2088 = vmatpush1.msra.mxu0 %v2069
    %2089 = vmatprep.subr.mxu0 0.0
    %2090 = vmatpush1.msra.mxu0 %v2070
    %2091 = vmatprep.subr.mxu0 0.0
    %2092 = vmatpush1.msra.mxu0 %v2071
    %2093 = vmatprep.subr.mxu0 0.0
    %2094 = vmatpush1.msra.mxu0 %v2072
    %2095 = vmatprep.subr.mxu0 0.0
    %2096 = vmatpush1.msra.mxu0 0.0
    %2097 = vmatprep.subr.mxu0 0.0
    %2098 = vmatpush1.msra.mxu0 0.0
    %2099 = vmatprep.subr.mxu0 0.0
    %2100 = vmatpush1.msra.mxu0 0.0
    %2101 = vmatprep.subr.mxu0 0.0
    %2102 = vmatpush1.msra.mxu0 0.0
    %2103 = vmatprep.subr.mxu0 0.0
    %2104 = vmatpush1.msra.mxu0 0.0
    %2105 = vmatprep.subr.mxu0 0.0
    %2106 = vmatpush1.msra.mxu0 0.0
    %2107 = vmatprep.subr.mxu0 0.0
    %2108 = vmatpush1.msra.mxu0 0.0
    %2109 = vmatprep.subr.mxu0 0.0
    %2110 = vmatpush1.msra.mxu0 0.0
    %2111 = vmatprep.subr.mxu0 0.0
    %2112 = vmatpush1.msra.mxu0 0.0
    %2113 = vmatprep.subr.mxu0 0.0
    %2114 = vmatpush1.msra.mxu0 0.0
    %2115 = vmatprep.subr.mxu0 0.0
    %2116 = vmatpush1.msra.mxu0 0.0
    %2117 = vmatprep.subr.mxu0 0.0
    %2118 = vmatpush1.msra.mxu0 0.0
    %2119 = vmatprep.subr.mxu0 0.0
    %2120 = vmatpush1.msra.mxu0 0.0
    %2121 = vmatprep.subr.mxu0 0.0
    %2122 = vmatpush1.msra.mxu0 0.0
    %2123 = vmatprep.subr.mxu0 0.0
    %2124 = vmatpush1.msra.mxu0 0.0
    %2125 = vmatprep.subr.mxu0 0.0
    %2126 = vmatpush1.msra.mxu0 0.0
    %2127 = vmatprep.subr.mxu0 0.0
    %2128 = vmatpush1.msra.mxu0 0.0
    %2129 = vmatprep.subr.mxu0 0.0
    %2130 = vmatpush1.msra.mxu0 0.0
    %2131 = vmatprep.subr.mxu0 0.0
    %2132 = vmatpush1.msra.mxu0 0.0
    %2133 = vmatprep.subr.mxu0 0.0
    %2134 = vmatpush1.msra.mxu0 0.0
    %2135 = vmatprep.subr.mxu0 0.0
    %2136 = vmatpush1.msra.mxu0 0.0
    %2137 = vmatprep.subr.mxu0 0.0
    %2138 = vmatpush1.msra.mxu0 0.0
    %2139 = vmatprep.subr.mxu0 0.0
    %2140 = vmatpush1.msra.mxu0 0.0
    %2141 = vmatprep.subr.mxu0 0.0
    %2142 = vmatpush1.msra.mxu0 0.0
    %2143 = vmatprep.subr.mxu0 0.0
    %2144 = vmatpush1.msra.mxu0 0.0
    %2145 = vmatprep.subr.mxu0 0.0
    %2146 = vmatpush1.msra.mxu0 0.0
    %2147 = vmatprep.subr.mxu0 0.0
    %2148 = vmatpush1.msra.mxu0 0.0
    %2149 = vmatprep.subr.mxu0 0.0
    %2150 = vmatpush1.msra.mxu0 0.0
    %2151 = vmatprep.mubr.f32.mxu0 0.0
    %2152 = vmatmul.mubr.f32.gmra.mrb[0].mxu0 %v2082
    %v2153 = vpop.f32.mrb[0].mxu0
    %v2154 = vadd.f32 %v2079, %v2153
    %v2155 = vpop.f32.mrb[0].mxu0
    %2156 = vmatprep.mubr.f32.mxu0 0.0
    %2157 = vmatmul.mubr.f32.gmra.mrb[0].mxu0 %v2085
    %v2158 = vpop.f32.mrb[0].mxu0
    %v2159 = vadd.f32 %v2079, %v2158
    %v2160 = vpop.f32.mrb[0].mxu0
    %2161 = vdwg.mxu0
    %v2162 = vmul.f32 %v2154, %v234
    %v2163 = vmul.f32 %v2154, %v236
    %v2164 = vmul.f32 %v2154, %v238
    %v2165 = vmul.f32 %v2154, %v240
    %v2166 = vmul.f32 %v2154, %v242
    %v2167 = vmul.f32 %v2154, %v244
    %v2168 = vmul.f32 %v2154, %v246
    %v2169 = vmul.f32 %v2154, %v248
    %v2170 = vmul.f32 %v2154, %v266
    %v2171 = vmul.f32 %v2154, %v268
    %v2172 = vmul.f32 %v2154, %v270
    %v2173 = vmul.f32 %v2154, %v272
    %v2174 = vmul.f32 %v2154, %v274
    %v2175 = vmul.f32 %v2154, %v276
    %v2176 = vmul.f32 %v2154, %v278
    %v2177 = vmul.f32 %v2154, %v280
    %2186 = vrot.lane.b32.xlu0 %v2162, 96
    %v2187 = vpop.permute.xlu0 %2186
    %2188 = vrot.lane.b32.xlu0 %v2163, 96
    %v2189 = vpop.permute.xlu0 %2188
    %2190 = vrot.lane.b32.xlu0 %v2164, 96
    %v2191 = vpop.permute.xlu0 %2190
    %2192 = vrot.lane.b32.xlu0 %v2165, 96
    %v2193 = vpop.permute.xlu0 %2192
    %2194 = vrot.lane.b32.xlu0 %v2166, 96
    %v2195 = vpop.permute.xlu0 %2194
    %2196 = vrot.lane.b32.xlu0 %v2167, 96
    %v2197 = vpop.permute.xlu0 %2196
    %2198 = vrot.lane.b32.xlu0 %v2168, 96
    %v2199 = vpop.permute.xlu0 %2198
    %2200 = vrot.lane.b32.xlu0 %v2169, 96
    %v2201 = vpop.permute.xlu0 %2200
    %v2203 = vsel %vm75, %v2154, 0
    %v2205 = vsel %vm75, %v2187, 0
    %v2207 = vsel %vm75, %v2189, 0
    %v2209 = vsel %vm75, %v2191, 0
    %v2211 = vsel %vm75, %v2193, 0
    %v2213 = vsel %vm75, %v2195, 0
    %v2215 = vsel %vm75, %v2197, 0
    %v2217 = vsel %vm75, %v2199, 0
    %v2219 = vsel %vm75, %v2201, 0
    %2221 = vmatprep.subr.mxu0 0.0
    %2222 = vmatpush1.xpose.msra.mxu0 %v2205
    %2223 = vmatprep.subr.mxu0 0.0
    %2224 = vmatpush1.xpose.msra.mxu0 %v2207
    %2225 = vmatprep.subr.mxu0 0.0
    %2226 = vmatpush1.xpose.msra.mxu0 %v2209
    %2227 = vmatprep.subr.mxu0 0.0
    %2228 = vmatpush1.xpose.msra.mxu0 %v2211
    %2229 = vmatprep.subr.mxu0 0.0
    %2230 = vmatpush1.xpose.msra.mxu0 %v2213
    %2231 = vmatprep.subr.mxu0 0.0
    %2232 = vmatpush1.xpose.msra.mxu0 %v2215
    %2233 = vmatprep.subr.mxu0 0.0
    %2234 = vmatpush1.xpose.msra.mxu0 %v2217
    %2235 = vmatprep.subr.mxu0 0.0
    %2236 = vmatpush1.xpose.msra.mxu0 %v2219
    %2237 = vmatprep.subr.mxu0 0.0
    %2238 = vmatpush1.xpose.msra.mxu0 0.0
    %2239 = vmatprep.subr.mxu0 0.0
    %2240 = vmatpush1.xpose.msra.mxu0 0.0
    %2241 = vmatprep.subr.mxu0 0.0
    %2242 = vmatpush1.xpose.msra.mxu0 0.0
    %2243 = vmatprep.subr.mxu0 0.0
    %2244 = vmatpush1.xpose.msra.mxu0 0.0
    %2245 = vmatprep.subr.mxu0 0.0
    %2246 = vmatpush1.xpose.msra.mxu0 0.0
    %2247 = vmatprep.subr.mxu0 0.0
    %2248 = vmatpush1.xpose.msra.mxu0 0.0
    %2249 = vmatprep.subr.mxu0 0.0
    %2250 = vmatpush1.xpose.msra.mxu0 0.0
    %2251 = vmatprep.subr.mxu0 0.0
    %2252 = vmatpush1.xpose.msra.mxu0 0.0
    %2253 = vmatprep.subr.mxu0 0.0
    %2254 = vmatpush1.xpose.msra.mxu0 0.0
    %2255 = vmatprep.subr.mxu0 0.0
    %2256 = vmatpush1.xpose.msra.mxu0 0.0
    %2257 = vmatprep.subr.mxu0 0.0
    %2258 = vmatpush1.xpose.msra.mxu0 0.0
    %2259 = vmatprep.subr.mxu0 0.0
    %2260 = vmatpush1.xpose.msra.mxu0 0.0
    %2261 = vmatprep.subr.mxu0 0.0
    %2262 = vmatpush1.xpose.msra.mxu0 0.0
    %2263 = vmatprep.subr.mxu0 0.0
    %2264 = vmatpush1.xpose.msra.mxu0 0.0
    %2265 = vmatprep.subr.mxu0 0.0
    %2266 = vmatpush1.xpose.msra.mxu0 0.0
    %2267 = vmatprep.subr.mxu0 0.0
    %2268 = vmatpush1.xpose.msra.mxu0 0.0
    %2269 = vmatprep.subr.mxu0 0.0
    %2270 = vmatpush1.xpose.msra.mxu0 0.0
    %2271 = vmatprep.subr.mxu0 0.0
    %2272 = vmatpush1.xpose.msra.mxu0 0.0
    %2273 = vmatprep.subr.mxu0 0.0
    %2274 = vmatpush1.xpose.msra.mxu0 0.0
    %2275 = vmatprep.subr.mxu0 0.0
    %2276 = vmatpush1.xpose.msra.mxu0 0.0
    %2277 = vmatprep.subr.mxu0 0.0
    %2278 = vmatpush1.xpose.msra.mxu0 0.0
    %2279 = vmatprep.subr.mxu0 0.0
    %2280 = vmatpush1.xpose.msra.mxu0 0.0
    %2281 = vmatprep.subr.mxu0 0.0
    %2282 = vmatpush1.xpose.msra.mxu0 0.0
    %2283 = vmatprep.subr.mxu0 0.0
    %2284 = vmatpush1.xpose.msra.mxu0 0.0
    %2285 = vmatprep.mubr.f32.mxu0 0.0
    %2286 = vmatmul.mubr.f32.gmra.mrb[0].mxu0 %v2203
    %v2287 = vpop.f32.mrb[0].mxu0
    %v2288 = vadd.f32 0.0, %v2287
    %v2289 = vpop.f32.mrb[0].mxu0
    %2290 = vdwg.mxu0
    %v2291 = vmul.f32 %v2288, 0.5
    %v2292 = vsel %vm411, %v2291, -inf
    %2293 = vmax.xlane.f32.xlu0 %v2292
    %v2294 = vpop.xlane.xlu0 %2293
    %v2295 = vsub.f32 %v2291, %v2294
    %v2296 = vmul.f32 %v2295, 1.442695
    %v2297 = vpow.pop %v2296
    %v2298 = vsel %vm411, %v2297, 0.0
    %2299 = vadd.xlane.f32.xlu0 %v2298
    %v2300 = vpop.xlane.xlu0 %2299
    %v2301 = vrcp.pop %v2300
    %v2302 = vmul.f32 %v2297, %v2301
    %v2303 = vsel %vm423, %v2291, -inf
    %2304 = vmax.xlane.f32.xlu0 %v2303
    %v2305 = vpop.xlane.xlu0 %2304
    %v2306 = vsub.f32 %v2291, %v2305
    %v2307 = vmul.f32 %v2306, 1.442695
    %v2308 = vpow.pop %v2307
    %2310 = vrot.lane.b32.xlu0 %v2308, 120
    %v2311 = vpop.permute.xlu0 %2310
    %v2313 = vsel %vm411, %v2311, 0.0
    %2314 = vadd.xlane.f32.xlu0 %v2313
    %v2315 = vpop.xlane.xlu0 %2314
    %v2316 = vrcp.pop %v2315
    %v2317 = vmul.f32 %v2308, %v2316
    %v2318 = vsel %vm439, %v2291, -inf
    %2319 = vmax.xlane.f32.xlu0 %v2318
    %v2320 = vpop.xlane.xlu0 %2319
    %v2321 = vsub.f32 %v2291, %v2320
    %v2322 = vmul.f32 %v2321, 1.442695
    %v2323 = vpow.pop %v2322
    %2325 = vrot.lane.b32.xlu0 %v2323, 112
    %v2326 = vpop.permute.xlu0 %2325
    %v2328 = vsel %vm411, %v2326, 0.0
    %2329 = vadd.xlane.f32.xlu0 %v2328
    %v2330 = vpop.xlane.xlu0 %2329
    %v2331 = vrcp.pop %v2330
    %v2332 = vmul.f32 %v2323, %v2331
    %v2333 = vsel %vm455, %v2291, -inf
    %2334 = vmax.xlane.f32.xlu0 %v2333
    %v2335 = vpop.xlane.xlu0 %2334
    %v2336 = vsub.f32 %v2291, %v2335
    %v2337 = vmul.f32 %v2336, 1.442695
    %v2338 = vpow.pop %v2337
    %2340 = vrot.lane.b32.xlu0 %v2338, 104
    %v2341 = vpop.permute.xlu0 %2340
    %v2343 = vsel %vm411, %v2341, 0.0
    %2344 = vadd.xlane.f32.xlu0 %v2343
    %v2345 = vpop.xlane.xlu0 %2344
    %v2346 = vrcp.pop %v2345
    %v2347 = vmul.f32 %v2338, %v2346
    %v2348 = vsel %vm471, %v2291, -inf
    %2349 = vmax.xlane.f32.xlu0 %v2348
    %v2350 = vpop.xlane.xlu0 %2349
    %v2351 = vsub.f32 %v2291, %v2350
    %v2352 = vmul.f32 %v2351, 1.442695
    %v2353 = vpow.pop %v2352
    %2355 = vrot.lane.b32.xlu0 %v2353, 96
    %v2356 = vpop.permute.xlu0 %2355
    %v2358 = vsel %vm411, %v2356, 0.0
    %2359 = vadd.xlane.f32.xlu0 %v2358
    %v2360 = vpop.xlane.xlu0 %2359
    %v2361 = vrcp.pop %v2360
    %v2362 = vmul.f32 %v2353, %v2361
    %v2363 = vsel %vm487, %v2291, -inf
    %2364 = vmax.xlane.f32.xlu0 %v2363
    %v2365 = vpop.xlane.xlu0 %2364
    %v2366 = vsub.f32 %v2291, %v2365
    %v2367 = vmul.f32 %v2366, 1.442695
    %v2368 = vpow.pop %v2367
    %2370 = vrot.lane.b32.xlu0 %v2368, 88
    %v2371 = vpop.permute.xlu0 %2370
    %v2373 = vsel %vm411, %v2371, 0.0
    %2374 = vadd.xlane.f32.xlu0 %v2373
    %v2375 = vpop.xlane.xlu0 %2374
    %v2376 = vrcp.pop %v2375
    %v2377 = vmul.f32 %v2368, %v2376
    %v2378 = vsel %vm503, %v2291, -inf
    %2379 = vmax.xlane.f32.xlu0 %v2378
    %v2380 = vpop.xlane.xlu0 %2379
    %v2381 = vsub.f32 %v2291, %v2380
    %v2382 = vmul.f32 %v2381, 1.442695
    %v2383 = vpow.pop %v2382
    %2385 = vrot.lane.b32.xlu0 %v2383, 80
    %v2386 = vpop.permute.xlu0 %2385
    %v2388 = vsel %vm411, %v2386, 0.0
    %2389 = vadd.xlane.f32.xlu0 %v2388
    %v2390 = vpop.xlane.xlu0 %2389
    %v2391 = vrcp.pop %v2390
    %v2392 = vmul.f32 %v2383, %v2391
    %v2393 = vsel %vm519, %v2291, -inf
    %2394 = vmax.xlane.f32.xlu0 %v2393
    %v2395 = vpop.xlane.xlu0 %2394
    %v2396 = vsub.f32 %v2291, %v2395
    %v2397 = vmul.f32 %v2396, 1.442695
    %v2398 = vpow.pop %v2397
    %2400 = vrot.lane.b32.xlu0 %v2398, 72
    %v2401 = vpop.permute.xlu0 %2400
    %v2403 = vsel %vm411, %v2401, 0.0
    %2404 = vadd.xlane.f32.xlu0 %v2403
    %v2405 = vpop.xlane.xlu0 %2404
    %v2406 = vrcp.pop %v2405
    %v2407 = vmul.f32 %v2398, %v2406
    %v2408 = vsel %vm411, %v2302, %v2317
    %v2409 = vsel %vm536, %v2408, %v2332
    %v2410 = vsel %vm538, %v2409, %v2347
    %v2411 = vsel %vm75, %v2410, %v2362
    %v2412 = vsel %vm541, %v2411, %v2377
    %v2413 = vsel %vm543, %v2412, %v2392
    %v2414 = vsel %vm545, %v2413, %v2407
    %2423 = vrot.lane.b32.xlu0 %v2170, 64
    %v2424 = vpop.permute.xlu0 %2423
    %2425 = vrot.lane.b32.xlu0 %v2171, 64
    %v2426 = vpop.permute.xlu0 %2425
    %2427 = vrot.lane.b32.xlu0 %v2172, 64
    %v2428 = vpop.permute.xlu0 %2427
    %2429 = vrot.lane.b32.xlu0 %v2173, 64
    %v2430 = vpop.permute.xlu0 %2429
    %2431 = vrot.lane.b32.xlu0 %v2174, 64
    %v2432 = vpop.permute.xlu0 %2431
    %2433 = vrot.lane.b32.xlu0 %v2175, 64
    %v2434 = vpop.permute.xlu0 %2433
    %2435 = vrot.lane.b32.xlu0 %v2176, 64
    %v2436 = vpop.permute.xlu0 %2435
    %2437 = vrot.lane.b32.xlu0 %v2177, 64
    %v2438 = vpop.permute.xlu0 %2437
    %v2448 = vsel %vm579, %v2414, 0
    %2450 = vmatprep.subr.mxu0 0.0
    %2451 = vmatpush1.msra.mxu0 %v2424
    %2452 = vmatprep.subr.mxu0 0.0
    %2453 = vmatpush1.msra.mxu0 %v2426
    %2454 = vmatprep.subr.mxu0 0.0
    %2455 = vmatpush1.msra.mxu0 %v2428
    %2456 = vmatprep.subr.mxu0 0.0
    %2457 = vmatpush1.msra.mxu0 %v2430
    %2458 = vmatprep.subr.mxu0 0.0
    %2459 = vmatpush1.msra.mxu0 %v2432
    %2460 = vmatprep.subr.mxu0 0.0
    %2461 = vmatpush1.msra.mxu0 %v2434
    %2462 = vmatprep.subr.mxu0 0.0
    %2463 = vmatpush1.msra.mxu0 %v2436
    %2464 = vmatprep.subr.mxu0 0.0
    %2465 = vmatpush1.msra.mxu0 %v2438
    %2466 = vmatprep.subr.mxu0 0.0
    %2467 = vmatpush1.msra.mxu0 0.0
    %2468 = vmatprep.subr.mxu0 0.0
    %2469 = vmatpush1.msra.mxu0 0.0
    %2470 = vmatprep.subr.mxu0 0.0
    %2471 = vmatpush1.msra.mxu0 0.0
    %2472 = vmatprep.subr.mxu0 0.0
    %2473 = vmatpush1.msra.mxu0 0.0
    %2474 = vmatprep.subr.mxu0 0.0
    %2475 = vmatpush1.msra.mxu0 0.0
    %2476 = vmatprep.subr.mxu0 0.0
    %2477 = vmatpush1.msra.mxu0 0.0
    %2478 = vmatprep.subr.mxu0 0.0
    %2479 = vmatpush1.msra.mxu0 0.0
    %2480 = vmatprep.subr.mxu0 0.0
    %2481 = vmatpush1.msra.mxu0 0.0
    %2482 = vmatprep.subr.mxu0 0.0
    %2483 = vmatpush1.msra.mxu0 0.0
    %2484 = vmatprep.subr.mxu0 0.0
    %2485 = vmatpush1.msra.mxu0 0.0
    %2486 = vmatprep.subr.mxu0 0.0
    %2487 = vmatpush1.msra.mxu0 0.0
    %2488 = vmatprep.subr.mxu0 0.0
    %2489 = vmatpush1.msra.mxu0 0.0
    %2490 = vmatprep.subr.mxu0 0.0
    %2491 = vmatpush1.msra.mxu0 0.0
    %2492 = vmatprep.subr.mxu0 0.0
    %2493 = vmatpush1.msra.mxu0 0.0
    %2494 = vmatprep.subr.mxu0 0.0
    %2495 = vmatpush1.msra.mxu0 0.0
    %2496 = vmatprep.subr.mxu0 0.0
    %2497 = vmatpush1.msra.mxu0 0.0
    %2498 = vmatprep.subr.mxu0 0.0
    %2499 = vmatpush1.msra.mxu0 0.0
    %2500 = vmatprep.subr.mxu0 0.0
    %2501 = vmatpush1.msra.mxu0 0.0
    %2502 = vmatprep.subr.mxu0 0.0
    %2503 = vmatpush1.msra.mxu0 0.0
    %2504 = vmatprep.subr.mxu0 0.0
    %2505 = vmatpush1.msra.mxu0 0.0
    %2506 = vmatprep.subr.mxu0 0.0
    %2507 = vmatpush1.msra.mxu0 0.0
    %2508 = vmatprep.subr.mxu0 0.0
    %2509 = vmatpush1.msra.mxu0 0.0
    %2510 = vmatprep.subr.mxu0 0.0
    %2511 = vmatpush1.msra.mxu0 0.0
    %2512 = vmatprep.subr.mxu0 0.0
    %2513 = vmatpush1.msra.mxu0 0.0
    %2514 = vmatprep.mubr.f32.mxu0 0.0
    %2515 = vmatmul.mubr.f32.gmra.mrb[0].mxu0 %v2448
    %v2516 = vpop.f32.mrb[0].mxu0
    %v2517 = vadd.f32 0.0, %v2516
    %v2518 = vpop.f32.mrb[0].mxu0
    %2519 = vdwg.mxu0
    %v2520 = vmul.f32 %v2159, %v234
    %v2521 = vmul.f32 %v2159, %v236
    %v2522 = vmul.f32 %v2159, %v238
    %v2523 = vmul.f32 %v2159, %v240
    %v2524 = vmul.f32 %v2159, %v242
    %v2525 = vmul.f32 %v2159, %v244
    %v2526 = vmul.f32 %v2159, %v246
    %v2527 = vmul.f32 %v2159, %v248
    %v2528 = vmul.f32 %v2159, %v266
    %v2529 = vmul.f32 %v2159, %v268
    %v2530 = vmul.f32 %v2159, %v270
    %v2531 = vmul.f32 %v2159, %v272
    %v2532 = vmul.f32 %v2159, %v274
    %v2533 = vmul.f32 %v2159, %v276
    %v2534 = vmul.f32 %v2159, %v278
    %v2535 = vmul.f32 %v2159, %v280
    %2544 = vrot.lane.b32.xlu0 %v2520, 96
    %v2545 = vpop.permute.xlu0 %2544
    %2546 = vrot.lane.b32.xlu0 %v2521, 96
    %v2547 = vpop.permute.xlu0 %2546
    %2548 = vrot.lane.b32.xlu0 %v2522, 96
    %v2549 = vpop.permute.xlu0 %2548
    %2550 = vrot.lane.b32.xlu0 %v2523, 96
    %v2551 = vpop.permute.xlu0 %2550
    %2552 = vrot.lane.b32.xlu0 %v2524, 96
    %v2553 = vpop.permute.xlu0 %2552
    %2554 = vrot.lane.b32.xlu0 %v2525, 96
    %v2555 = vpop.permute.xlu0 %2554
    %2556 = vrot.lane.b32.xlu0 %v2526, 96
    %v2557 = vpop.permute.xlu0 %2556
    %2558 = vrot.lane.b32.xlu0 %v2527, 96
    %v2559 = vpop.permute.xlu0 %2558
    %v2561 = vsel %vm75, %v2159, 0
    %v2563 = vsel %vm75, %v2545, 0
    %v2565 = vsel %vm75, %v2547, 0
    %v2567 = vsel %vm75, %v2549, 0
    %v2569 = vsel %vm75, %v2551, 0
    %v2571 = vsel %vm75, %v2553, 0
    %v2573 = vsel %vm75, %v2555, 0
    %v2575 = vsel %vm75, %v2557, 0
    %v2577 = vsel %vm75, %v2559, 0
    %2579 = vmatprep.subr.mxu0 0.0
    %2580 = vmatpush1.xpose.msra.mxu0 %v2563
    %2581 = vmatprep.subr.mxu0 0.0
    %2582 = vmatpush1.xpose.msra.mxu0 %v2565
    %2583 = vmatprep.subr.mxu0 0.0
    %2584 = vmatpush1.xpose.msra.mxu0 %v2567
    %2585 = vmatprep.subr.mxu0 0.0
    %2586 = vmatpush1.xpose.msra.mxu0 %v2569
    %2587 = vmatprep.subr.mxu0 0.0
    %2588 = vmatpush1.xpose.msra.mxu0 %v2571
    %2589 = vmatprep.subr.mxu0 0.0
    %2590 = vmatpush1.xpose.msra.mxu0 %v2573
    %2591 = vmatprep.subr.mxu0 0.0
    %2592 = vmatpush1.xpose.msra.mxu0 %v2575
    %2593 = vmatprep.subr.mxu0 0.0
    %2594 = vmatpush1.xpose.msra.mxu0 %v2577
    %2595 = vmatprep.subr.mxu0 0.0
    %2596 = vmatpush1.xpose.msra.mxu0 0.0
    %2597 = vmatprep.subr.mxu0 0.0
    %2598 = vmatpush1.xpose.msra.mxu0 0.0
    %2599 = vmatprep.subr.mxu0 0.0
    %2600 = vmatpush1.xpose.msra.mxu0 0.0
    %2601 = vmatprep.subr.mxu0 0.0
    %2602 = vmatpush1.xpose.msra.mxu0 0.0
    %2603 = vmatprep.subr.mxu0 0.0
    %2604 = vmatpush1.xpose.msra.mxu0 0.0
    %2605 = vmatprep.subr.mxu0 0.0
    %2606 = vmatpush1.xpose.msra.mxu0 0.0
    %2607 = vmatprep.subr.mxu0 0.0
    %2608 = vmatpush1.xpose.msra.mxu0 0.0
    %2609 = vmatprep.subr.mxu0 0.0
    %2610 = vmatpush1.xpose.msra.mxu0 0.0
    %2611 = vmatprep.subr.mxu0 0.0
    %2612 = vmatpush1.xpose.msra.mxu0 0.0
    %2613 = vmatprep.subr.mxu0 0.0
    %2614 = vmatpush1.xpose.msra.mxu0 0.0
    %2615 = vmatprep.subr.mxu0 0.0
    %2616 = vmatpush1.xpose.msra.mxu0 0.0
    %2617 = vmatprep.subr.mxu0 0.0
    %2618 = vmatpush1.xpose.msra.mxu0 0.0
    %2619 = vmatprep.subr.mxu0 0.0
    %2620 = vmatpush1.xpose.msra.mxu0 0.0
    %2621 = vmatprep.subr.mxu0 0.0
    %2622 = vmatpush1.xpose.msra.mxu0 0.0
    %2623 = vmatprep.subr.mxu0 0.0
    %2624 = vmatpush1.xpose.msra.mxu0 0.0
    %2625 = vmatprep.subr.mxu0 0.0
    %2626 = vmatpush1.xpose.msra.mxu0 0.0
    %2627 = vmatprep.subr.mxu0 0.0
    %2628 = vmatpush1.xpose.msra.mxu0 0.0
    %2629 = vmatprep.subr.mxu0 0.0
    %2630 = vmatpush1.xpose.msra.mxu0 0.0
    %2631 = vmatprep.subr.mxu0 0.0
    %2632 = vmatpush1.xpose.msra.mxu0 0.0
    %2633 = vmatprep.subr.mxu0 0.0
    %2634 = vmatpush1.xpose.msra.mxu0 0.0
    %2635 = vmatprep.subr.mxu0 0.0
    %2636 = vmatpush1.xpose.msra.mxu0 0.0
    %2637 = vmatprep.subr.mxu0 0.0
    %2638 = vmatpush1.xpose.msra.mxu0 0.0
    %2639 = vmatprep.subr.mxu0 0.0
    %2640 = vmatpush1.xpose.msra.mxu0 0.0
    %2641 = vmatprep.subr.mxu0 0.0
    %2642 = vmatpush1.xpose.msra.mxu0 0.0
    %2643 = vmatprep.mubr.f32.mxu0 0.0
    %2644 = vmatmul.mubr.f32.gmra.mrb[0].mxu0 %v2561
    %v2645 = vpop.f32.mrb[0].mxu0
    %v2646 = vadd.f32 0.0, %v2645
    %v2647 = vpop.f32.mrb[0].mxu0
    %2648 = vdwg.mxu0
    %v2649 = vmul.f32 %v2646, 0.5
    %v2650 = vsel %vm411, %v2649, -inf
    %2651 = vmax.xlane.f32.xlu0 %v2650
    %v2652 = vpop.xlane.xlu0 %2651
    %v2653 = vsub.f32 %v2649, %v2652
    %v2654 = vmul.f32 %v2653, 1.442695
    %v2655 = vpow.pop %v2654
    %v2656 = vsel %vm411, %v2655, 0.0
    %2657 = vadd.xlane.f32.xlu0 %v2656
    %v2658 = vpop.xlane.xlu0 %2657
    %v2659 = vrcp.pop %v2658
    %v2660 = vmul.f32 %v2655, %v2659
    %v2661 = vsel %vm423, %v2649, -inf
    %2662 = vmax.xlane.f32.xlu0 %v2661
    %v2663 = vpop.xlane.xlu0 %2662
    %v2664 = vsub.f32 %v2649, %v2663
    %v2665 = vmul.f32 %v2664, 1.442695
    %v2666 = vpow.pop %v2665
    %2668 = vrot.lane.b32.xlu0 %v2666, 120
    %v2669 = vpop.permute.xlu0 %2668
    %v2671 = vsel %vm411, %v2669, 0.0
    %2672 = vadd.xlane.f32.xlu0 %v2671
    %v2673 = vpop.xlane.xlu0 %2672
    %v2674 = vrcp.pop %v2673
    %v2675 = vmul.f32 %v2666, %v2674
    %v2676 = vsel %vm439, %v2649, -inf
    %2677 = vmax.xlane.f32.xlu0 %v2676
    %v2678 = vpop.xlane.xlu0 %2677
    %v2679 = vsub.f32 %v2649, %v2678
    %v2680 = vmul.f32 %v2679, 1.442695
    %v2681 = vpow.pop %v2680
    %2683 = vrot.lane.b32.xlu0 %v2681, 112
    %v2684 = vpop.permute.xlu0 %2683
    %v2686 = vsel %vm411, %v2684, 0.0
    %2687 = vadd.xlane.f32.xlu0 %v2686
    %v2688 = vpop.xlane.xlu0 %2687
    %v2689 = vrcp.pop %v2688
    %v2690 = vmul.f32 %v2681, %v2689
    %v2691 = vsel %vm455, %v2649, -inf
    %2692 = vmax.xlane.f32.xlu0 %v2691
    %v2693 = vpop.xlane.xlu0 %2692
    %v2694 = vsub.f32 %v2649, %v2693
    %v2695 = vmul.f32 %v2694, 1.442695
    %v2696 = vpow.pop %v2695
    %2698 = vrot.lane.b32.xlu0 %v2696, 104
    %v2699 = vpop.permute.xlu0 %2698
    %v2701 = vsel %vm411, %v2699, 0.0
    %2702 = vadd.xlane.f32.xlu0 %v2701
    %v2703 = vpop.xlane.xlu0 %2702
    %v2704 = vrcp.pop %v2703
    %v2705 = vmul.f32 %v2696, %v2704
    %v2706 = vsel %vm471, %v2649, -inf
    %2707 = vmax.xlane.f32.xlu0 %v2706
    %v2708 = vpop.xlane.xlu0 %2707
    %v2709 = vsub.f32 %v2649, %v2708
    %v2710 = vmul.f32 %v2709, 1.442695
    %v2711 = vpow.pop %v2710
    %2713 = vrot.lane.b32.xlu0 %v2711, 96
    %v2714 = vpop.permute.xlu0 %2713
    %v2716 = vsel %vm411, %v2714, 0.0
    %2717 = vadd.xlane.f32.xlu0 %v2716
    %v2718 = vpop.xlane.xlu0 %2717
    %v2719 = vrcp.pop %v2718
    %v2720 = vmul.f32 %v2711, %v2719
    %v2721 = vsel %vm487, %v2649, -inf
    %2722 = vmax.xlane.f32.xlu0 %v2721
    %v2723 = vpop.xlane.xlu0 %2722
    %v2724 = vsub.f32 %v2649, %v2723
    %v2725 = vmul.f32 %v2724, 1.442695
    %v2726 = vpow.pop %v2725
    %2728 = vrot.lane.b32.xlu0 %v2726, 88
    %v2729 = vpop.permute.xlu0 %2728
    %v2731 = vsel %vm411, %v2729, 0.0
    %2732 = vadd.xlane.f32.xlu0 %v2731
    %v2733 = vpop.xlane.xlu0 %2732
    %v2734 = vrcp.pop %v2733
    %v2735 = vmul.f32 %v2726, %v2734
    %v2736 = vsel %vm503, %v2649, -inf
    %2737 = vmax.xlane.f32.xlu0 %v2736
    %v2738 = vpop.xlane.xlu0 %2737
    %v2739 = vsub.f32 %v2649, %v2738
    %v2740 = vmul.f32 %v2739, 1.442695
    %v2741 = vpow.pop %v2740
    %2743 = vrot.lane.b32.xlu0 %v2741, 80
    %v2744 = vpop.permute.xlu0 %2743
    %v2746 = vsel %vm411, %v2744, 0.0
    %2747 = vadd.xlane.f32.xlu0 %v2746
    %v2748 = vpop.xlane.xlu0 %2747
    %v2749 = vrcp.pop %v2748
    %v2750 = vmul.f32 %v2741, %v2749
    %v2751 = vsel %vm519, %v2649, -inf
    %2752 = vmax.xlane.f32.xlu0 %v2751
    %v2753 = vpop.xlane.xlu0 %2752
    %v2754 = vsub.f32 %v2649, %v2753
    %v2755 = vmul.f32 %v2754, 1.442695
    %v2756 = vpow.pop %v2755
    %2758 = vrot.lane.b32.xlu0 %v2756, 72
    %v2759 = vpop.permute.xlu0 %2758
    %v2761 = vsel %vm411, %v2759, 0.0
    %2762 = vadd.xlane.f32.xlu0 %v2761
    %v2763 = vpop.xlane.xlu0 %2762
    %v2764 = vrcp.pop %v2763
    %v2765 = vmul.f32 %v2756, %v2764
    %v2766 = vsel %vm411, %v2660, %v2675
    %v2767 = vsel %vm536, %v2766, %v2690
    %v2768 = vsel %vm538, %v2767, %v2705
    %v2769 = vsel %vm75, %v2768, %v2720
    %v2770 = vsel %vm541, %v2769, %v2735
    %v2771 = vsel %vm543, %v2770, %v2750
    %v2772 = vsel %vm545, %v2771, %v2765
    %2781 = vrot.lane.b32.xlu0 %v2528, 64
    %v2782 = vpop.permute.xlu0 %2781
    %2783 = vrot.lane.b32.xlu0 %v2529, 64
    %v2784 = vpop.permute.xlu0 %2783
    %2785 = vrot.lane.b32.xlu0 %v2530, 64
    %v2786 = vpop.permute.xlu0 %2785
    %2787 = vrot.lane.b32.xlu0 %v2531, 64
    %v2788 = vpop.permute.xlu0 %2787
    %2789 = vrot.lane.b32.xlu0 %v2532, 64
    %v2790 = vpop.permute.xlu0 %2789
    %2791 = vrot.lane.b32.xlu0 %v2533, 64
    %v2792 = vpop.permute.xlu0 %2791
    %2793 = vrot.lane.b32.xlu0 %v2534, 64
    %v2794 = vpop.permute.xlu0 %2793
    %2795 = vrot.lane.b32.xlu0 %v2535, 64
    %v2796 = vpop.permute.xlu0 %2795
    %v2806 = vsel %vm579, %v2772, 0
    %2808 = vmatprep.subr.mxu0 0.0
    %2809 = vmatpush1.msra.mxu0 %v2782
    %2810 = vmatprep.subr.mxu0 0.0
    %2811 = vmatpush1.msra.mxu0 %v2784
    %2812 = vmatprep.subr.mxu0 0.0
    %2813 = vmatpush1.msra.mxu0 %v2786
    %2814 = vmatprep.subr.mxu0 0.0
    %2815 = vmatpush1.msra.mxu0 %v2788
    %2816 = vmatprep.subr.mxu0 0.0
    %2817 = vmatpush1.msra.mxu0 %v2790
    %2818 = vmatprep.subr.mxu0 0.0
    %2819 = vmatpush1.msra.mxu0 %v2792
    %2820 = vmatprep.subr.mxu0 0.0
    %2821 = vmatpush1.msra.mxu0 %v2794
    %2822 = vmatprep.subr.mxu0 0.0
    %2823 = vmatpush1.msra.mxu0 %v2796
    %2824 = vmatprep.subr.mxu0 0.0
    %2825 = vmatpush1.msra.mxu0 0.0
    %2826 = vmatprep.subr.mxu0 0.0
    %2827 = vmatpush1.msra.mxu0 0.0
    %2828 = vmatprep.subr.mxu0 0.0
    %2829 = vmatpush1.msra.mxu0 0.0
    %2830 = vmatprep.subr.mxu0 0.0
    %2831 = vmatpush1.msra.mxu0 0.0
    %2832 = vmatprep.subr.mxu0 0.0
    %2833 = vmatpush1.msra.mxu0 0.0
    %2834 = vmatprep.subr.mxu0 0.0
    %2835 = vmatpush1.msra.mxu0 0.0
    %2836 = vmatprep.subr.mxu0 0.0
    %2837 = vmatpush1.msra.mxu0 0.0
    %2838 = vmatprep.subr.mxu0 0.0
    %2839 = vmatpush1.msra.mxu0 0.0
    %2840 = vmatprep.subr.mxu0 0.0
    %2841 = vmatpush1.msra.mxu0 0.0
    %2842 = vmatprep.subr.mxu0 0.0
    %2843 = vmatpush1.msra.mxu0 0.0
    %2844 = vmatprep.subr.mxu0 0.0
    %2845 = vmatpush1.msra.mxu0 0.0
    %2846 = vmatprep.subr.mxu0 0.0
    %2847 = vmatpush1.msra.mxu0 0.0
    %2848 = vmatprep.subr.mxu0 0.0
    %2849 = vmatpush1.msra.mxu0 0.0
    %2850 = vmatprep.subr.mxu0 0.0
    %2851 = vmatpush1.msra.mxu0 0.0
    %2852 = vmatprep.subr.mxu0 0.0
    %2853 = vmatpush1.msra.mxu0 0.0
    %2854 = vmatprep.subr.mxu0 0.0
    %2855 = vmatpush1.msra.mxu0 0.0
    %2856 = vmatprep.subr.mxu0 0.0
    %2857 = vmatpush1.msra.mxu0 0.0
    %2858 = vmatprep.subr.mxu0 0.0
    %2859 = vmatpush1.msra.mxu0 0.0
    %2860 = vmatprep.subr.mxu0 0.0
    %2861 = vmatpush1.msra.mxu0 0.0
    %2862 = vmatprep.subr.mxu0 0.0
    %2863 = vmatpush1.msra.mxu0 0.0
    %2864 = vmatprep.subr.mxu0 0.0
    %2865 = vmatpush1.msra.mxu0 0.0
    %2866 = vmatprep.subr.mxu0 0.0
    %2867 = vmatpush1.msra.mxu0 0.0
    %2868 = vmatprep.subr.mxu0 0.0
    %2869 = vmatpush1.msra.mxu0 0.0
    %2870 = vmatprep.subr.mxu0 0.0
    %2871 = vmatpush1.msra.mxu0 0.0
    %2872 = vmatprep.mubr.f32.mxu0 0.0
    %2873 = vmatmul.mubr.f32.gmra.mrb[0].mxu0 %v2806
    %v2874 = vpop.f32.mrb[0].mxu0
    %v2875 = vadd.f32 0.0, %v2874
    %v2876 = vpop.f32.mrb[0].mxu0
    %2877 = vdwg.mxu0
    %s2878 = scalar_lea.vmem %s7, 32
    %v2879 = vld [vmem:[%s2878] sm:$0xff]
    %v2880 = vld [vmem:[%s2878 + $0x8] sm:$0xff]
    %v2881 = vld [vmem:[%s2878 + $0x10] sm:$0xff]
    %v2882 = vld [vmem:[%s2878 + $0x18] sm:$0xff]
    %v2884 = vsel %vm75, %v2517, 0
    %v2887 = vsel %vm75, %v2875, 0
    %2889 = vmatprep.subr.mxu0 0.0
    %2890 = vmatpush1.msra.mxu0 %v2879
    %2891 = vmatprep.subr.mxu0 0.0
    %2892 = vmatpush1.msra.mxu0 %v2880
    %2893 = vmatprep.subr.mxu0 0.0
    %2894 = vmatpush1.msra.mxu0 %v2881
    %2895 = vmatprep.subr.mxu0 0.0
    %2896 = vmatpush1.msra.mxu0 %v2882
    %2897 = vmatprep.subr.mxu0 0.0
    %2898 = vmatpush1.msra.mxu0 0.0
    %2899 = vmatprep.subr.mxu0 0.0
    %2900 = vmatpush1.msra.mxu0 0.0
    %2901 = vmatprep.subr.mxu0 0.0
    %2902 = vmatpush1.msra.mxu0 0.0
    %2903 = vmatprep.subr.mxu0 0.0
    %2904 = vmatpush1.msra.mxu0 0.0
    %2905 = vmatprep.subr.mxu0 0.0
    %2906 = vmatpush1.msra.mxu0 0.0
    %2907 = vmatprep.subr.mxu0 0.0
    %2908 = vmatpush1.msra.mxu0 0.0
    %2909 = vmatprep.subr.mxu0 0.0
    %2910 = vmatpush1.msra.mxu0 0.0
    %2911 = vmatprep.subr.mxu0 0.0
    %2912 = vmatpush1.msra.mxu0 0.0
    %2913 = vmatprep.subr.mxu0 0.0
    %2914 = vmatpush1.msra.mxu0 0.0
    %2915 = vmatprep.subr.mxu0 0.0
    %2916 = vmatpush1.msra.mxu0 0.0
    %2917 = vmatprep.subr.mxu0 0.0
    %2918 = vmatpush1.msra.mxu0 0.0
    %2919 = vmatprep.subr.mxu0 0.0
    %2920 = vmatpush1.msra.mxu0 0.0
    %2921 = vmatprep.subr.mxu0 0.0
    %2922 = vmatpush1.msra.mxu0 0.0
    %2923 = vmatprep.subr.mxu0 0.0
    %2924 = vmatpush1.msra.mxu0 0.0
    %2925 = vmatprep.subr.mxu0 0.0
    %2926 = vmatpush1.msra.mxu0 0.0
    %2927 = vmatprep.subr.mxu0 0.0
    %2928 = vmatpush1.msra.mxu0 0.0
    %2929 = vmatprep.subr.mxu0 0.0
    %2930 = vmatpush1.msra.mxu0 0.0
    %2931 = vmatprep.subr.mxu0 0.0
    %2932 = vmatpush1.msra.mxu0 0.0
    %2933 = vmatprep.subr.mxu0 0.0
    %2934 = vmatpush1.msra.mxu0 0.0
    %2935 = vmatprep.subr.mxu0 0.0
    %2936 = vmatpush1.msra.mxu0 0.0
    %2937 = vmatprep.subr.mxu0 0.0
    %2938 = vmatpush1.msra.mxu0 0.0
    %2939 = vmatprep.subr.mxu0 0.0
    %2940 = vmatpush1.msra.mxu0 0.0
    %2941 = vmatprep.subr.mxu0 0.0
    %2942 = vmatpush1.msra.mxu0 0.0
    %2943 = vmatprep.subr.mxu0 0.0
    %2944 = vmatpush1.msra.mxu0 0.0
    %2945 = vmatprep.subr.mxu0 0.0
    %2946 = vmatpush1.msra.mxu0 0.0
    %2947 = vmatprep.subr.mxu0 0.0
    %2948 = vmatpush1.msra.mxu0 0.0
    %2949 = vmatprep.subr.mxu0 0.0
    %2950 = vmatpush1.msra.mxu0 0.0
    %2951 = vmatprep.subr.mxu0 0.0
    %2952 = vmatpush1.msra.mxu0 0.0
    %2953 = vmatprep.mubr.f32.mxu0 0.0
    %2954 = vmatmul.mubr.f32.gmra.mrb[0].mxu0 %v2884
    %v2955 = vpop.f32.mrb[0].mxu0
    %v2956 = vadd.f32 0.0, %v2955
    %v2957 = vpop.f32.mrb[0].mxu0
    %2958 = vmatprep.mubr.f32.mxu0 0.0
    %2959 = vmatmul.mubr.f32.gmra.mrb[0].mxu0 %v2887
    %v2960 = vpop.f32.mrb[0].mxu0
    %v2961 = vadd.f32 0.0, %v2960
    %v2962 = vpop.f32.mrb[0].mxu0
    %2963 = vdwg.mxu0
    %v2964 = vadd.f32 %v2006, %v2956
    %v2965 = vadd.f32 %v2007, %v2961
    %s2966 = scalar_lea.vmem %s8, 1
    %v2967 = vld [vmem:[%s2966] sm:$0x1]
    %v2969 = vlaneseq
    %v2970 = vshrl.u32 %v2969, 7
    %v2971 = vsub.s32 0, %v2970
    %v2972 = vrot.slane %v2967, %v2971
    %v2974 = vadd.f32 %v2964, %v2972
    %v2975 = vadd.f32 %v2965, %v2972
    %s2976 = scalar_lea.vmem %s9, 1
    %v2977 = vld [vmem:[%s2976] sm:$0x1]
    %s2978 = scalar_lea.vmem %s10, 1
    %v2979 = vld [vmem:[%s2978] sm:$0x1]
    %v2980 = vsel %vm75, %v2974, 0.0
    %2981 = vadd.xlane.f32.xlu0 %v2980
    %v2982 = vpop.xlane.xlu0 %2981
    %v2983 = vsel %vm75, %v2975, 0.0
    %2984 = vadd.xlane.f32.xlu0 %v2983
    %v2985 = vpop.xlane.xlu0 %2984
    %v2986 = vmul.f32 %v2982, %v82
    %v2987 = vmul.f32 %v2985, %v82
    %v2988 = vsub.f32 %v2974, %v2986
    %v2989 = vsub.f32 %v2975, %v2987
    %v2990 = vmul.f32 %v2988, %v2988
    %v2991 = vmul.f32 %v2989, %v2989
    %v2992 = vsel %vm75, %v2990, 0.0
    %2993 = vadd.xlane.f32.xlu0 %v2992
    %v2994 = vpop.xlane.xlu0 %2993
    %v2995 = vsel %vm75, %v2991, 0.0
    %2996 = vadd.xlane.f32.xlu0 %v2995
    %v2997 = vpop.xlane.xlu0 %2996
    %v2998 = vmul.f32 %v2994, 0.032258064
    %v2999 = vmul.f32 %v2997, 0.032258064
    %v3000 = vrsqrt.pop %v2998
    %v3001 = vmul.f32 %v2998, %v3000
    %vm3002 = vcmp.eq.f32.partialorder %v2998, inf
    %v3003 = vsel %vm3002, %v2998, %v3001
    %vm3004 = vcmp.eq.f32.partialorder %v2998, 0.0
    %v3005 = vand.u32 %v2998, 2147483648
    %v3006 = vsel %vm3004, %v3005, %v3003
    %v3007 = vrsqrt.pop %v2999
    %v3008 = vmul.f32 %v2999, %v3007
    %vm3009 = vcmp.eq.f32.partialorder %v2999, inf
    %v3010 = vsel %vm3009, %v2999, %v3008
    %vm3011 = vcmp.eq.f32.partialorder %v2999, 0.0
    %v3012 = vand.u32 %v2999, 2147483648
    %v3013 = vsel %vm3011, %v3012, %v3010
    %v3015 = vlaneseq
    %v3016 = vshrl.u32 %v3015, 7
    %v3017 = vsub.s32 0, %v3016
    %v3018 = vrot.slane %v2977, %v3017
    %v3020 = vmul.f32 %v3018, %v2988
    %v3021 = vmul.f32 %v3018, %v2989
    %v3022 = vadd.f32 %v3006, 1e-06
    %v3023 = vadd.f32 %v3013, 1e-06
    %v3024 = vrcp.pop %v3022
    %v3025 = vmul.f32 %v3020, %v3024
    %v3026 = vrcp.pop %v3023
    %v3027 = vmul.f32 %v3021, %v3026
    %v3029 = vlaneseq
    %v3030 = vshrl.u32 %v3029, 7
    %v3031 = vsub.s32 0, %v3030
    %v3032 = vrot.slane %v2979, %v3031
    %v3034 = vadd.f32 %v3025, %v3032
    %v3035 = vadd.f32 %v3027, %v3032
    %s3036 = scalar_lea.vmem %s11, 256
    %v3037 = vld [vmem:[%s3036] sm:$0xff]
    %v3038 = vld [vmem:[%s3036 + $0x8] sm:$0xff]
    %v3039 = vld [vmem:[%s3036 + $0x10] sm:$0xff]
    %v3040 = vld [vmem:[%s3036 + $0x18] sm:$0xff]
    %v3041 = vld [vmem:[%s3036 + $0x20] sm:$0xff]
    %v3042 = vld [vmem:[%s3036 + $0x28] sm:$0xff]
    %v3043 = vld [vmem:[%s3036 + $0x30] sm:$0xff]
    %v3044 = vld [vmem:[%s3036 + $0x38] sm:$0xff]
    %v3045 = vld [vmem:[%s3036 + $0x40] sm:$0xff]
    %v3046 = vld [vmem:[%s3036 + $0x48] sm:$0xff]
    %v3047 = vld [vmem:[%s3036 + $0x50] sm:$0xff]
    %v3048 = vld [vmem:[%s3036 + $0x58] sm:$0xff]
    %v3049 = vld [vmem:[%s3036 + $0x60] sm:$0xff]
    %v3050 = vld [vmem:[%s3036 + $0x68] sm:$0xff]
    %v3051 = vld [vmem:[%s3036 + $0x70] sm:$0xff]
    %v3052 = vld [vmem:[%s3036 + $0x78] sm:$0xff]
    %v3053 = vld [vmem:[%s3036 + $0x80] sm:$0xff]
    %v3054 = vld [vmem:[%s3036 + $0x88] sm:$0xff]
    %v3055 = vld [vmem:[%s3036 + $0x90] sm:$0xff]
    %v3056 = vld [vmem:[%s3036 + $0x98] sm:$0xff]
    %v3057 = vld [vmem:[%s3036 + $0xa0] sm:$0xff]
    %v3058 = vld [vmem:[%s3036 + $0xa8] sm:$0xff]
    %v3059 = vld [vmem:[%s3036 + $0xb0] sm:$0xff]
    %v3060 = vld [vmem:[%s3036 + $0xb8] sm:$0xff]
    %v3061 = vld [vmem:[%s3036 + $0xc0] sm:$0xff]
    %v3062 = vld [vmem:[%s3036 + $0xc8] sm:$0xff]
    %v3063 = vld [vmem:[%s3036 + $0xd0] sm:$0xff]
    %v3064 = vld [vmem:[%s3036 + $0xd8] sm:$0xff]
    %v3065 = vld [vmem:[%s3036 + $0xe0] sm:$0xff]
    %v3066 = vld [vmem:[%s3036 + $0xe8] sm:$0xff]
    %v3067 = vld [vmem:[%s3036 + $0xf0] sm:$0xff]
    %v3068 = vld [vmem:[%s3036 + $0xf8] sm:$0xff]
    %s3069 = scalar_lea.vmem %s12, 8
    %v3070 = vld [vmem:[%s3069] sm:$0xff]
    %v3072 = vlaneseq
    %v3073 = vshrl.u32 %v3072, 7
    %v3074 = vsub.s32 0, %v3073
    %v3075 = vrot.slane %v3070, %v3074
    %v3076 = vlaneseq
    %v3077 = vshrl.u32 %v3076, 7
    %v3078 = vsub.s32 1, %v3077
    %v3079 = vrot.slane %v3070, %v3078
    %v3080 = vlaneseq
    %v3081 = vshrl.u32 %v3080, 7
    %v3082 = vsub.s32 2, %v3081
    %v3083 = vrot.slane %v3070, %v3082
    %v3084 = vlaneseq
    %v3085 = vshrl.u32 %v3084, 7
    %v3086 = vsub.s32 3, %v3085
    %v3087 = vrot.slane %v3070, %v3086
    %v3088 = vlaneseq
    %v3089 = vshrl.u32 %v3088, 7
    %v3090 = vsub.s32 4, %v3089
    %v3091 = vrot.slane %v3070, %v3090
    %v3092 = vlaneseq
    %v3093 = vshrl.u32 %v3092, 7
    %v3094 = vsub.s32 5, %v3093
    %v3095 = vrot.slane %v3070, %v3094
    %v3096 = vlaneseq
    %v3097 = vshrl.u32 %v3096, 7
    %v3098 = vsub.s32 6, %v3097
    %v3099 = vrot.slane %v3070, %v3098
    %v3100 = vlaneseq
    %v3101 = vshrl.u32 %v3100, 7
    %v3102 = vsub.s32 7, %v3101
    %v3103 = vrot.slane %v3070, %v3102
    %v3113 = vsel %vm75, %v3034, 0
    %v3116 = vsel %vm75, %v3035, 0
    %3118 = vmatprep.subr.mxu0 %v3038
    %3119 = vmatpush1.msra.mxu0 %v3037
    %3120 = vmatprep.subr.mxu0 %v3046
    %3121 = vmatpush1.msra.mxu0 %v3045
    %3122 = vmatprep.subr.mxu0 %v3054
    %3123 = vmatpush1.msra.mxu0 %v3053
    %3124 = vmatprep.subr.mxu0 %v3062
    %3125 = vmatpush1.msra.mxu0 %v3061
    %3126 = vmatprep.subr.mxu0 0.0
    %3127 = vmatpush1.msra.mxu0 0.0
    %3128 = vmatprep.subr.mxu0 0.0
    %3129 = vmatpush1.msra.mxu0 0.0
    %3130 = vmatprep.subr.mxu0 0.0
    %3131 = vmatpush1.msra.mxu0 0.0
    %3132 = vmatprep.subr.mxu0 0.0
    %3133 = vmatpush1.msra.mxu0 0.0
    %3134 = vmatprep.subr.mxu0 0.0
    %3135 = vmatpush1.msra.mxu0 0.0
    %3136 = vmatprep.subr.mxu0 0.0
    %3137 = vmatpush1.msra.mxu0 0.0
    %3138 = vmatprep.subr.mxu0 0.0
    %3139 = vmatpush1.msra.mxu0 0.0
    %3140 = vmatprep.subr.mxu0 0.0
    %3141 = vmatpush1.msra.mxu0 0.0
    %3142 = vmatprep.subr.mxu0 0.0
    %3143 = vmatpush1.msra.mxu0 0.0
    %3144 = vmatprep.subr.mxu0 0.0
    %3145 = vmatpush1.msra.mxu0 0.0
    %3146 = vmatprep.subr.mxu0 0.0
    %3147 = vmatpush1.msra.mxu0 0.0
    %3148 = vmatprep.subr.mxu0 0.0
    %3149 = vmatpush1.msra.mxu0 0.0
    %3150 = vmatprep.subr.mxu0 0.0
    %3151 = vmatpush1.msra.mxu0 0.0
    %3152 = vmatprep.subr.mxu0 0.0
    %3153 = vmatpush1.msra.mxu0 0.0
    %3154 = vmatprep.subr.mxu0 0.0
    %3155 = vmatpush1.msra.mxu0 0.0
    %3156 = vmatprep.subr.mxu0 0.0
    %3157 = vmatpush1.msra.mxu0 0.0
    %3158 = vmatprep.subr.mxu0 0.0
    %3159 = vmatpush1.msra.mxu0 0.0
    %3160 = vmatprep.subr.mxu0 0.0
    %3161 = vmatpush1.msra.mxu0 0.0
    %3162 = vmatprep.subr.mxu0 0.0
    %3163 = vmatpush1.msra.mxu0 0.0
    %3164 = vmatprep.subr.mxu0 0.0
    %3165 = vmatpush1.msra.mxu0 0.0
    %3166 = vmatprep.subr.mxu0 0.0
    %3167 = vmatpush1.msra.mxu0 0.0
    %3168 = vmatprep.subr.mxu0 0.0
    %3169 = vmatpush1.msra.mxu0 0.0
    %3170 = vmatprep.subr.mxu0 0.0
    %3171 = vmatpush1.msra.mxu0 0.0
    %3172 = vmatprep.subr.mxu0 0.0
    %3173 = vmatpush1.msra.mxu0 0.0
    %3174 = vmatprep.subr.mxu0 0.0
    %3175 = vmatpush1.msra.mxu0 0.0
    %3176 = vmatprep.subr.mxu0 0.0
    %3177 = vmatpush1.msra.mxu0 0.0
    %3178 = vmatprep.subr.mxu0 0.0
    %3179 = vmatpush1.msra.mxu0 0.0
    %3180 = vmatprep.subr.mxu0 0.0
    %3181 = vmatpush1.msra.mxu0 0.0
    %3182 = vmatprep.mubr.f32.mxu0 0.0
    %3183 = vmatmul.mubr.f32.gmra.mrb[0].mxu0 %v3113
    %v3184 = vpop.f32.mrb[0].mxu0
    %v3185 = vadd.f32 %v3075, %v3184
    %v3186 = vpop.f32.mrb[0].mxu0
    %v3187 = vadd.f32 %v3079, %v3186
    %3188 = vmatprep.mubr.f32.mxu0 0.0
    %3189 = vmatmul.mubr.f32.gmra.mrb[0].mxu0 %v3116
    %v3190 = vpop.f32.mrb[0].mxu0
    %v3191 = vadd.f32 %v3075, %v3190
    %v3192 = vpop.f32.mrb[0].mxu0
    %v3193 = vadd.f32 %v3079, %v3192
    %3194 = vdwg.mxu0
    %3195 = vmatprep.subr.mxu0 %v3040
    %3196 = vmatpush1.msra.mxu0 %v3039
    %3197 = vmatprep.subr.mxu0 %v3048
    %3198 = vmatpush1.msra.mxu0 %v3047
    %3199 = vmatprep.subr.mxu0 %v3056
    %3200 = vmatpush1.msra.mxu0 %v3055
    %3201 = vmatprep.subr.mxu0 %v3064
    %3202 = vmatpush1.msra.mxu0 %v3063
    %3203 = vmatprep.subr.mxu0 0.0
    %3204 = vmatpush1.msra.mxu0 0.0
    %3205 = vmatprep.subr.mxu0 0.0
    %3206 = vmatpush1.msra.mxu0 0.0
    %3207 = vmatprep.subr.mxu0 0.0
    %3208 = vmatpush1.msra.mxu0 0.0
    %3209 = vmatprep.subr.mxu0 0.0
    %3210 = vmatpush1.msra.mxu0 0.0
    %3211 = vmatprep.subr.mxu0 0.0
    %3212 = vmatpush1.msra.mxu0 0.0
    %3213 = vmatprep.subr.mxu0 0.0
    %3214 = vmatpush1.msra.mxu0 0.0
    %3215 = vmatprep.subr.mxu0 0.0
    %3216 = vmatpush1.msra.mxu0 0.0
    %3217 = vmatprep.subr.mxu0 0.0
    %3218 = vmatpush1.msra.mxu0 0.0
    %3219 = vmatprep.subr.mxu0 0.0
    %3220 = vmatpush1.msra.mxu0 0.0
    %3221 = vmatprep.subr.mxu0 0.0
    %3222 = vmatpush1.msra.mxu0 0.0
    %3223 = vmatprep.subr.mxu0 0.0
    %3224 = vmatpush1.msra.mxu0 0.0
    %3225 = vmatprep.subr.mxu0 0.0
    %3226 = vmatpush1.msra.mxu0 0.0
    %3227 = vmatprep.subr.mxu0 0.0
    %3228 = vmatpush1.msra.mxu0 0.0
    %3229 = vmatprep.subr.mxu0 0.0
    %3230 = vmatpush1.msra.mxu0 0.0
    %3231 = vmatprep.subr.mxu0 0.0
    %3232 = vmatpush1.msra.mxu0 0.0
    %3233 = vmatprep.subr.mxu0 0.0
    %3234 = vmatpush1.msra.mxu0 0.0
    %3235 = vmatprep.subr.mxu0 0.0
    %3236 = vmatpush1.msra.mxu0 0.0
    %3237 = vmatprep.subr.mxu0 0.0
    %3238 = vmatpush1.msra.mxu0 0.0
    %3239 = vmatprep.subr.mxu0 0.0
    %3240 = vmatpush1.msra.mxu0 0.0
    %3241 = vmatprep.subr.mxu0 0.0
    %3242 = vmatpush1.msra.mxu0 0.0
    %3243 = vmatprep.subr.mxu0 0.0
    %3244 = vmatpush1.msra.mxu0 0.0
    %3245 = vmatprep.subr.mxu0 0.0
    %3246 = vmatpush1.msra.mxu0 0.0
    %3247 = vmatprep.subr.mxu0 0.0
    %3248 = vmatpush1.msra.mxu0 0.0
    %3249 = vmatprep.subr.mxu0 0.0
    %3250 = vmatpush1.msra.mxu0 0.0
    %3251 = vmatprep.subr.mxu0 0.0
    %3252 = vmatpush1.msra.mxu0 0.0
    %3253 = vmatprep.subr.mxu0 0.0
    %3254 = vmatpush1.msra.mxu0 0.0
    %3255 = vmatprep.subr.mxu0 0.0
    %3256 = vmatpush1.msra.mxu0 0.0
    %3257 = vmatprep.subr.mxu0 0.0
    %3258 = vmatpush1.msra.mxu0 0.0
    %3259 = vmatprep.mubr.f32.mxu0 0.0
    %3260 = vmatmul.mubr.f32.gmra.mrb[0].mxu0 %v3113
    %v3261 = vpop.f32.mrb[0].mxu0
    %v3262 = vadd.f32 %v3083, %v3261
    %v3263 = vpop.f32.mrb[0].mxu0
    %v3264 = vadd.f32 %v3087, %v3263
    %3265 = vmatprep.mubr.f32.mxu0 0.0
    %3266 = vmatmul.mubr.f32.gmra.mrb[0].mxu0 %v3116
    %v3267 = vpop.f32.mrb[0].mxu0
    %v3268 = vadd.f32 %v3083, %v3267
    %v3269 = vpop.f32.mrb[0].mxu0
    %v3270 = vadd.f32 %v3087, %v3269
    %3271 = vdwg.mxu0
    %3272 = vmatprep.subr.mxu0 %v3042
    %3273 = vmatpush1.msra.mxu0 %v3041
    %3274 = vmatprep.subr.mxu0 %v3050
    %3275 = vmatpush1.msra.mxu0 %v3049
    %3276 = vmatprep.subr.mxu0 %v3058
    %3277 = vmatpush1.msra.mxu0 %v3057
    %3278 = vmatprep.subr.mxu0 %v3066
    %3279 = vmatpush1.msra.mxu0 %v3065
    %3280 = vmatprep.subr.mxu0 0.0
    %3281 = vmatpush1.msra.mxu0 0.0
    %3282 = vmatprep.subr.mxu0 0.0
    %3283 = vmatpush1.msra.mxu0 0.0
    %3284 = vmatprep.subr.mxu0 0.0
    %3285 = vmatpush1.msra.mxu0 0.0
    %3286 = vmatprep.subr.mxu0 0.0
    %3287 = vmatpush1.msra.mxu0 0.0
    %3288 = vmatprep.subr.mxu0 0.0
    %3289 = vmatpush1.msra.mxu0 0.0
    %3290 = vmatprep.subr.mxu0 0.0
    %3291 = vmatpush1.msra.mxu0 0.0
    %3292 = vmatprep.subr.mxu0 0.0
    %3293 = vmatpush1.msra.mxu0 0.0
    %3294 = vmatprep.subr.mxu0 0.0
    %3295 = vmatpush1.msra.mxu0 0.0
    %3296 = vmatprep.subr.mxu0 0.0
    %3297 = vmatpush1.msra.mxu0 0.0
    %3298 = vmatprep.subr.mxu0 0.0
    %3299 = vmatpush1.msra.mxu0 0.0
    %3300 = vmatprep.subr.mxu0 0.0
    %3301 = vmatpush1.msra.mxu0 0.0
    %3302 = vmatprep.subr.mxu0 0.0
    %3303 = vmatpush1.msra.mxu0 0.0
    %3304 = vmatprep.subr.mxu0 0.0
    %3305 = vmatpush1.msra.mxu0 0.0
    %3306 = vmatprep.subr.mxu0 0.0
    %3307 = vmatpush1.msra.mxu0 0.0
    %3308 = vmatprep.subr.mxu0 0.0
    %3309 = vmatpush1.msra.mxu0 0.0
    %3310 = vmatprep.subr.mxu0 0.0
    %3311 = vmatpush1.msra.mxu0 0.0
    %3312 = vmatprep.subr.mxu0 0.0
    %3313 = vmatpush1.msra.mxu0 0.0
    %3314 = vmatprep.subr.mxu0 0.0
    %3315 = vmatpush1.msra.mxu0 0.0
    %3316 = vmatprep.subr.mxu0 0.0
    %3317 = vmatpush1.msra.mxu0 0.0
    %3318 = vmatprep.subr.mxu0 0.0
    %3319 = vmatpush1.msra.mxu0 0.0
    %3320 = vmatprep.subr.mxu0 0.0
    %3321 = vmatpush1.msra.mxu0 0.0
    %3322 = vmatprep.subr.mxu0 0.0
    %3323 = vmatpush1.msra.mxu0 0.0
    %3324 = vmatprep.subr.mxu0 0.0
    %3325 = vmatpush1.msra.mxu0 0.0
    %3326 = vmatprep.subr.mxu0 0.0
    %3327 = vmatpush1.msra.mxu0 0.0
    %3328 = vmatprep.subr.mxu0 0.0
    %3329 = vmatpush1.msra.mxu0 0.0
    %3330 = vmatprep.subr.mxu0 0.0
    %3331 = vmatpush1.msra.mxu0 0.0
    %3332 = vmatprep.subr.mxu0 0.0
    %3333 = vmatpush1.msra.mxu0 0.0
    %3334 = vmatprep.subr.mxu0 0.0
    %3335 = vmatpush1.msra.mxu0 0.0
    %3336 = vmatprep.mubr.f32.mxu0 0.0
    %3337 = vmatmul.mubr.f32.gmra.mrb[0].mxu0 %v3113
    %v3338 = vpop.f32.mrb[0].mxu0
    %v3339 = vadd.f32 %v3091, %v3338
    %v3340 = vpop.f32.mrb[0].mxu0
    %v3341 = vadd.f32 %v3095, %v3340
    %3342 = vmatprep.mubr.f32.mxu0 0.0
    %3343 = vmatmul.mubr.f32.gmra.mrb[0].mxu0 %v3116
    %v3344 = vpop.f32.mrb[0].mxu0
    %v3345 = vadd.f32 %v3091, %v3344
    %v3346 = vpop.f32.mrb[0].mxu0
    %v3347 = vadd.f32 %v3095, %v3346
    %3348 = vdwg.mxu0
    %3349 = vmatprep.subr.mxu0 %v3044
    %3350 = vmatpush1.msra.mxu0 %v3043
    %3351 = vmatprep.subr.mxu0 %v3052
    %3352 = vmatpush1.msra.mxu0 %v3051
    %3353 = vmatprep.subr.mxu0 %v3060
    %3354 = vmatpush1.msra.mxu0 %v3059
    %3355 = vmatprep.subr.mxu0 %v3068
    %3356 = vmatpush1.msra.mxu0 %v3067
    %3357 = vmatprep.subr.mxu0 0.0
    %3358 = vmatpush1.msra.mxu0 0.0
    %3359 = vmatprep.subr.mxu0 0.0
    %3360 = vmatpush1.msra.mxu0 0.0
    %3361 = vmatprep.subr.mxu0 0.0
    %3362 = vmatpush1.msra.mxu0 0.0
    %3363 = vmatprep.subr.mxu0 0.0
    %3364 = vmatpush1.msra.mxu0 0.0
    %3365 = vmatprep.subr.mxu0 0.0
    %3366 = vmatpush1.msra.mxu0 0.0
    %3367 = vmatprep.subr.mxu0 0.0
    %3368 = vmatpush1.msra.mxu0 0.0
    %3369 = vmatprep.subr.mxu0 0.0
    %3370 = vmatpush1.msra.mxu0 0.0
    %3371 = vmatprep.subr.mxu0 0.0
    %3372 = vmatpush1.msra.mxu0 0.0
    %3373 = vmatprep.subr.mxu0 0.0
    %3374 = vmatpush1.msra.mxu0 0.0
    %3375 = vmatprep.subr.mxu0 0.0
    %3376 = vmatpush1.msra.mxu0 0.0
    %3377 = vmatprep.subr.mxu0 0.0
    %3378 = vmatpush1.msra.mxu0 0.0
    %3379 = vmatprep.subr.mxu0 0.0
    %3380 = vmatpush1.msra.mxu0 0.0
    %3381 = vmatprep.subr.mxu0 0.0
    %3382 = vmatpush1.msra.mxu0 0.0
    %3383 = vmatprep.subr.mxu0 0.0
    %3384 = vmatpush1.msra.mxu0 0.0
    %3385 = vmatprep.subr.mxu0 0.0
    %3386 = vmatpush1.msra.mxu0 0.0
    %3387 = vmatprep.subr.mxu0 0.0
    %3388 = vmatpush1.msra.mxu0 0.0
    %3389 = vmatprep.subr.mxu0 0.0
    %3390 = vmatpush1.msra.mxu0 0.0
    %3391 = vmatprep.subr.mxu0 0.0
    %3392 = vmatpush1.msra.mxu0 0.0
    %3393 = vmatprep.subr.mxu0 0.0
    %3394 = vmatpush1.msra.mxu0 0.0
    %3395 = vmatprep.subr.mxu0 0.0
    %3396 = vmatpush1.msra.mxu0 0.0
    %3397 = vmatprep.subr.mxu0 0.0
    %3398 = vmatpush1.msra.mxu0 0.0
    %3399 = vmatprep.subr.mxu0 0.0
    %3400 = vmatpush1.msra.mxu0 0.0
    %3401 = vmatprep.subr.mxu0 0.0
    %3402 = vmatpush1.msra.mxu0 0.0
    %3403 = vmatprep.subr.mxu0 0.0
    %3404 = vmatpush1.msra.mxu0 0.0
    %3405 = vmatprep.subr.mxu0 0.0
    %3406 = vmatpush1.msra.mxu0 0.0
    %3407 = vmatprep.subr.mxu0 0.0
    %3408 = vmatpush1.msra.mxu0 0.0
    %3409 = vmatprep.subr.mxu0 0.0
    %3410 = vmatpush1.msra.mxu0 0.0
    %3411 = vmatprep.subr.mxu0 0.0
    %3412 = vmatpush1.msra.mxu0 0.0
    %3413 = vmatprep.mubr.f32.mxu0 0.0
    %3414 = vmatmul.mubr.f32.gmra.mrb[0].mxu0 %v3113
    %v3415 = vpop.f32.mrb[0].mxu0
    %v3416 = vadd.f32 %v3099, %v3415
    %v3417 = vpop.f32.mrb[0].mxu0
    %v3418 = vadd.f32 %v3103, %v3417
    %3419 = vmatprep.mubr.f32.mxu0 0.0
    %3420 = vmatmul.mubr.f32.gmra.mrb[0].mxu0 %v3116
    %v3421 = vpop.f32.mrb[0].mxu0
    %v3422 = vadd.f32 %v3099, %v3421
    %v3423 = vpop.f32.mrb[0].mxu0
    %v3424 = vadd.f32 %v3103, %v3423
    %3425 = vdwg.mxu0
    %v3426 = vmax.f32 %v3185, 0.0
    %v3427 = vmax.f32 %v3187, 0.0
    %v3428 = vmax.f32 %v3262, 0.0
    %v3429 = vmax.f32 %v3264, 0.0
    %v3430 = vmax.f32 %v3339, 0.0
    %v3431 = vmax.f32 %v3341, 0.0
    %v3432 = vmax.f32 %v3416, 0.0
    %v3433 = vmax.f32 %v3418, 0.0
    %v3434 = vmax.f32 %v3191, 0.0
    %v3435 = vmax.f32 %v3193, 0.0
    %v3436 = vmax.f32 %v3268, 0.0
    %v3437 = vmax.f32 %v3270, 0.0
    %v3438 = vmax.f32 %v3345, 0.0
    %v3439 = vmax.f32 %v3347, 0.0
    %v3440 = vmax.f32 %v3422, 0.0
    %v3441 = vmax.f32 %v3424, 0.0
    %s3442 = scalar_lea.vmem %s13, 1024
    %v3443 = vld [vmem:[%s3442] sm:$0xff]
    %v3444 = vld [vmem:[%s3442 + $0x8] sm:$0xff]
    %v3445 = vld [vmem:[%s3442 + $0x10] sm:$0xff]
    %v3446 = vld [vmem:[%s3442 + $0x18] sm:$0xff]
    %v3447 = vld [vmem:[%s3442 + $0x20] sm:$0xff]
    %v3448 = vld [vmem:[%s3442 + $0x28] sm:$0xff]
    %v3449 = vld [vmem:[%s3442 + $0x30] sm:$0xff]
    %v3450 = vld [vmem:[%s3442 + $0x38] sm:$0xff]
    %v3451 = vld [vmem:[%s3442 + $0x40] sm:$0xff]
    %v3452 = vld [vmem:[%s3442 + $0x48] sm:$0xff]
    %v3453 = vld [vmem:[%s3442 + $0x50] sm:$0xff]
    %v3454 = vld [vmem:[%s3442 + $0x58] sm:$0xff]
    %v3455 = vld [vmem:[%s3442 + $0x60] sm:$0xff]
    %v3456 = vld [vmem:[%s3442 + $0x68] sm:$0xff]
    %v3457 = vld [vmem:[%s3442 + $0x70] sm:$0xff]
    %v3458 = vld [vmem:[%s3442 + $0x78] sm:$0xff]
    %v3459 = vld [vmem:[%s3442 + $0x80] sm:$0xff]
    %v3460 = vld [vmem:[%s3442 + $0x88] sm:$0xff]
    %v3461 = vld [vmem:[%s3442 + $0x90] sm:$0xff]
    %v3462 = vld [vmem:[%s3442 + $0x98] sm:$0xff]
    %v3463 = vld [vmem:[%s3442 + $0xa0] sm:$0xff]
    %v3464 = vld [vmem:[%s3442 + $0xa8] sm:$0xff]
    %v3465 = vld [vmem:[%s3442 + $0xb0] sm:$0xff]
    %v3466 = vld [vmem:[%s3442 + $0xb8] sm:$0xff]
    %v3467 = vld [vmem:[%s3442 + $0xc0] sm:$0xff]
    %v3468 = vld [vmem:[%s3442 + $0xc8] sm:$0xff]
    %v3469 = vld [vmem:[%s3442 + $0xd0] sm:$0xff]
    %v3470 = vld [vmem:[%s3442 + $0xd8] sm:$0xff]
    %v3471 = vld [vmem:[%s3442 + $0xe0] sm:$0xff]
    %v3472 = vld [vmem:[%s3442 + $0xe8] sm:$0xff]
    %v3473 = vld [vmem:[%s3442 + $0xf0] sm:$0xff]
    %v3474 = vld [vmem:[%s3442 + $0xf8] sm:$0xff]
    %v3475 = vld [vmem:[%s3442 + $0x100] sm:$0xff]
    %v3476 = vld [vmem:[%s3442 + $0x108] sm:$0xff]
    %v3477 = vld [vmem:[%s3442 + $0x110] sm:$0xff]
    %v3478 = vld [vmem:[%s3442 + $0x118] sm:$0xff]
    %v3479 = vld [vmem:[%s3442 + $0x120] sm:$0xff]
    %v3480 = vld [vmem:[%s3442 + $0x128] sm:$0xff]
    %v3481 = vld [vmem:[%s3442 + $0x130] sm:$0xff]
    %v3482 = vld [vmem:[%s3442 + $0x138] sm:$0xff]
    %v3483 = vld [vmem:[%s3442 + $0x140] sm:$0xff]
    %v3484 = vld [vmem:[%s3442 + $0x148] sm:$0xff]
    %v3485 = vld [vmem:[%s3442 + $0x150] sm:$0xff]
    %v3486 = vld [vmem:[%s3442 + $0x158] sm:$0xff]
    %v3487 = vld [vmem:[%s3442 + $0x160] sm:$0xff]
    %v3488 = vld [vmem:[%s3442 + $0x168] sm:$0xff]
    %v3489 = vld [vmem:[%s3442 + $0x170] sm:$0xff]
    %v3490 = vld [vmem:[%s3442 + $0x178] sm:$0xff]
    %v3491 = vld [vmem:[%s3442 + $0x180] sm:$0xff]
    %v3492 = vld [vmem:[%s3442 + $0x188] sm:$0xff]
    %v3493 = vld [vmem:[%s3442 + $0x190] sm:$0xff]
    %v3494 = vld [vmem:[%s3442 + $0x198] sm:$0xff]
    %v3495 = vld [vmem:[%s3442 + $0x1a0] sm:$0xff]
    %v3496 = vld [vmem:[%s3442 + $0x1a8] sm:$0xff]
    %v3497 = vld [vmem:[%s3442 + $0x1b0] sm:$0xff]
    %v3498 = vld [vmem:[%s3442 + $0x1b8] sm:$0xff]
    %v3499 = vld [vmem:[%s3442 + $0x1c0] sm:$0xff]
    %v3500 = vld [vmem:[%s3442 + $0x1c8] sm:$0xff]
    %v3501 = vld [vmem:[%s3442 + $0x1d0] sm:$0xff]
    %v3502 = vld [vmem:[%s3442 + $0x1d8] sm:$0xff]
    %v3503 = vld [vmem:[%s3442 + $0x1e0] sm:$0xff]
    %v3504 = vld [vmem:[%s3442 + $0x1e8] sm:$0xff]
    %v3505 = vld [vmem:[%s3442 + $0x1f0] sm:$0xff]
    %v3506 = vld [vmem:[%s3442 + $0x1f8] sm:$0xff]
    %v3507 = vld [vmem:[%s3442 + $0x200] sm:$0xff]
    %v3508 = vld [vmem:[%s3442 + $0x208] sm:$0xff]
    %v3509 = vld [vmem:[%s3442 + $0x210] sm:$0xff]
    %v3510 = vld [vmem:[%s3442 + $0x218] sm:$0xff]
    %v3511 = vld [vmem:[%s3442 + $0x220] sm:$0xff]
    %v3512 = vld [vmem:[%s3442 + $0x228] sm:$0xff]
    %v3513 = vld [vmem:[%s3442 + $0x230] sm:$0xff]
    %v3514 = vld [vmem:[%s3442 + $0x238] sm:$0xff]
    %v3515 = vld [vmem:[%s3442 + $0x240] sm:$0xff]
    %v3516 = vld [vmem:[%s3442 + $0x248] sm:$0xff]
    %v3517 = vld [vmem:[%s3442 + $0x250] sm:$0xff]
    %v3518 = vld [vmem:[%s3442 + $0x258] sm:$0xff]
    %v3519 = vld [vmem:[%s3442 + $0x260] sm:$0xff]
    %v3520 = vld [vmem:[%s3442 + $0x268] sm:$0xff]
    %v3521 = vld [vmem:[%s3442 + $0x270] sm:$0xff]
    %v3522 = vld [vmem:[%s3442 + $0x278] sm:$0xff]
    %v3523 = vld [vmem:[%s3442 + $0x280] sm:$0xff]
    %v3524 = vld [vmem:[%s3442 + $0x288] sm:$0xff]
    %v3525 = vld [vmem:[%s3442 + $0x290] sm:$0xff]
    %v3526 = vld [vmem:[%s3442 + $0x298] sm:$0xff]
    %v3527 = vld [vmem:[%s3442 + $0x2a0] sm:$0xff]
    %v3528 = vld [vmem:[%s3442 + $0x2a8] sm:$0xff]
    %v3529 = vld [vmem:[%s3442 + $0x2b0] sm:$0xff]
    %v3530 = vld [vmem:[%s3442 + $0x2b8] sm:$0xff]
    %v3531 = vld [vmem:[%s3442 + $0x2c0] sm:$0xff]
    %v3532 = vld [vmem:[%s3442 + $0x2c8] sm:$0xff]
    %v3533 = vld [vmem:[%s3442 + $0x2d0] sm:$0xff]
    %v3534 = vld [vmem:[%s3442 + $0x2d8] sm:$0xff]
    %v3535 = vld [vmem:[%s3442 + $0x2e0] sm:$0xff]
    %v3536 = vld [vmem:[%s3442 + $0x2e8] sm:$0xff]
    %v3537 = vld [vmem:[%s3442 + $0x2f0] sm:$0xff]
    %v3538 = vld [vmem:[%s3442 + $0x2f8] sm:$0xff]
    %v3539 = vld [vmem:[%s3442 + $0x300] sm:$0xff]
    %v3540 = vld [vmem:[%s3442 + $0x308] sm:$0xff]
    %v3541 = vld [vmem:[%s3442 + $0x310] sm:$0xff]
    %v3542 = vld [vmem:[%s3442 + $0x318] sm:$0xff]
    %v3543 = vld [vmem:[%s3442 + $0x320] sm:$0xff]
    %v3544 = vld [vmem:[%s3442 + $0x328] sm:$0xff]
    %v3545 = vld [vmem:[%s3442 + $0x330] sm:$0xff]
    %v3546 = vld [vmem:[%s3442 + $0x338] sm:$0xff]
    %v3547 = vld [vmem:[%s3442 + $0x340] sm:$0xff]
    %v3548 = vld [vmem:[%s3442 + $0x348] sm:$0xff]
    %v3549 = vld [vmem:[%s3442 + $0x350] sm:$0xff]
    %v3550 = vld [vmem:[%s3442 + $0x358] sm:$0xff]
    %v3551 = vld [vmem:[%s3442 + $0x360] sm:$0xff]
    %v3552 = vld [vmem:[%s3442 + $0x368] sm:$0xff]
    %v3553 = vld [vmem:[%s3442 + $0x370] sm:$0xff]
    %v3554 = vld [vmem:[%s3442 + $0x378] sm:$0xff]
    %v3555 = vld [vmem:[%s3442 + $0x380] sm:$0xff]
    %v3556 = vld [vmem:[%s3442 + $0x388] sm:$0xff]
    %v3557 = vld [vmem:[%s3442 + $0x390] sm:$0xff]
    %v3558 = vld [vmem:[%s3442 + $0x398] sm:$0xff]
    %v3559 = vld [vmem:[%s3442 + $0x3a0] sm:$0xff]
    %v3560 = vld [vmem:[%s3442 + $0x3a8] sm:$0xff]
    %v3561 = vld [vmem:[%s3442 + $0x3b0] sm:$0xff]
    %v3562 = vld [vmem:[%s3442 + $0x3b8] sm:$0xff]
    %v3563 = vld [vmem:[%s3442 + $0x3c0] sm:$0xff]
    %v3564 = vld [vmem:[%s3442 + $0x3c8] sm:$0xff]
    %v3565 = vld [vmem:[%s3442 + $0x3d0] sm:$0xff]
    %v3566 = vld [vmem:[%s3442 + $0x3d8] sm:$0xff]
    %v3567 = vld [vmem:[%s3442 + $0x3e0] sm:$0xff]
    %v3568 = vld [vmem:[%s3442 + $0x3e8] sm:$0xff]
    %v3569 = vld [vmem:[%s3442 + $0x3f0] sm:$0xff]
    %v3570 = vld [vmem:[%s3442 + $0x3f8] sm:$0xff]
    %3571 = vmatprep.subr.mxu0 0.0
    %3572 = vmatpush1.msra.mxu0 %v3443
    %3573 = vmatprep.subr.mxu0 0.0
    %3574 = vmatpush1.msra.mxu0 %v3444
    %3575 = vmatprep.subr.mxu0 0.0
    %3576 = vmatpush1.msra.mxu0 %v3445
    %3577 = vmatprep.subr.mxu0 0.0
    %3578 = vmatpush1.msra.mxu0 %v3446
    %3579 = vmatprep.subr.mxu0 0.0
    %3580 = vmatpush1.msra.mxu0 %v3447
    %3581 = vmatprep.subr.mxu0 0.0
    %3582 = vmatpush1.msra.mxu0 %v3448
    %3583 = vmatprep.subr.mxu0 0.0
    %3584 = vmatpush1.msra.mxu0 %v3449
    %3585 = vmatprep.subr.mxu0 0.0
    %3586 = vmatpush1.msra.mxu0 %v3450
    %3587 = vmatprep.subr.mxu0 0.0
    %3588 = vmatpush1.msra.mxu0 %v3451
    %3589 = vmatprep.subr.mxu0 0.0
    %3590 = vmatpush1.msra.mxu0 %v3452
    %3591 = vmatprep.subr.mxu0 0.0
    %3592 = vmatpush1.msra.mxu0 %v3453
    %3593 = vmatprep.subr.mxu0 0.0
    %3594 = vmatpush1.msra.mxu0 %v3454
    %3595 = vmatprep.subr.mxu0 0.0
    %3596 = vmatpush1.msra.mxu0 %v3455
    %3597 = vmatprep.subr.mxu0 0.0
    %3598 = vmatpush1.msra.mxu0 %v3456
    %3599 = vmatprep.subr.mxu0 0.0
    %3600 = vmatpush1.msra.mxu0 %v3457
    %3601 = vmatprep.subr.mxu0 0.0
    %3602 = vmatpush1.msra.mxu0 %v3458
    %3603 = vmatprep.subr.mxu0 0.0
    %3604 = vmatpush1.msra.mxu0 %v3459
    %3605 = vmatprep.subr.mxu0 0.0
    %3606 = vmatpush1.msra.mxu0 %v3460
    %3607 = vmatprep.subr.mxu0 0.0
    %3608 = vmatpush1.msra.mxu0 %v3461
    %3609 = vmatprep.subr.mxu0 0.0
    %3610 = vmatpush1.msra.mxu0 %v3462
    %3611 = vmatprep.subr.mxu0 0.0
    %3612 = vmatpush1.msra.mxu0 %v3463
    %3613 = vmatprep.subr.mxu0 0.0
    %3614 = vmatpush1.msra.mxu0 %v3464
    %3615 = vmatprep.subr.mxu0 0.0
    %3616 = vmatpush1.msra.mxu0 %v3465
    %3617 = vmatprep.subr.mxu0 0.0
    %3618 = vmatpush1.msra.mxu0 %v3466
    %3619 = vmatprep.subr.mxu0 0.0
    %3620 = vmatpush1.msra.mxu0 %v3467
    %3621 = vmatprep.subr.mxu0 0.0
    %3622 = vmatpush1.msra.mxu0 %v3468
    %3623 = vmatprep.subr.mxu0 0.0
    %3624 = vmatpush1.msra.mxu0 %v3469
    %3625 = vmatprep.subr.mxu0 0.0
    %3626 = vmatpush1.msra.mxu0 %v3470
    %3627 = vmatprep.subr.mxu0 0.0
    %3628 = vmatpush1.msra.mxu0 %v3471
    %3629 = vmatprep.subr.mxu0 0.0
    %3630 = vmatpush1.msra.mxu0 %v3472
    %3631 = vmatprep.subr.mxu0 0.0
    %3632 = vmatpush1.msra.mxu0 %v3473
    %3633 = vmatprep.subr.mxu0 0.0
    %3634 = vmatpush1.msra.mxu0 %v3474
    %3635 = vmatprep.mubr.f32.mxu0 %v3427
    %3636 = vmatmul.mubr.f32.gmra.mrb[0].mxu0 %v3426
    %v3637 = vpop.f32.mrb[0].mxu0
    %v3638 = vadd.f32 0.0, %v3637
    %v3639 = vpop.f32.mrb[0].mxu0
    %3640 = vmatprep.mubr.f32.mxu0 %v3435
    %3641 = vmatmul.mubr.f32.gmra.mrb[0].mxu0 %v3434
    %v3642 = vpop.f32.mrb[0].mxu0
    %v3643 = vadd.f32 0.0, %v3642
    %v3644 = vpop.f32.mrb[0].mxu0
    %3645 = vdwg.mxu0
    %3646 = vmatprep.subr.mxu0 0.0
    %3647 = vmatpush1.msra.mxu0 %v3475
    %3648 = vmatprep.subr.mxu0 0.0
    %3649 = vmatpush1.msra.mxu0 %v3476
    %3650 = vmatprep.subr.mxu0 0.0
    %3651 = vmatpush1.msra.mxu0 %v3477
    %3652 = vmatprep.subr.mxu0 0.0
    %3653 = vmatpush1.msra.mxu0 %v3478
    %3654 = vmatprep.subr.mxu0 0.0
    %3655 = vmatpush1.msra.mxu0 %v3479
    %3656 = vmatprep.subr.mxu0 0.0
    %3657 = vmatpush1.msra.mxu0 %v3480
    %3658 = vmatprep.subr.mxu0 0.0
    %3659 = vmatpush1.msra.mxu0 %v3481
    %3660 = vmatprep.subr.mxu0 0.0
    %3661 = vmatpush1.msra.mxu0 %v3482
    %3662 = vmatprep.subr.mxu0 0.0
    %3663 = vmatpush1.msra.mxu0 %v3483
    %3664 = vmatprep.subr.mxu0 0.0
    %3665 = vmatpush1.msra.mxu0 %v3484
    %3666 = vmatprep.subr.mxu0 0.0
    %3667 = vmatpush1.msra.mxu0 %v3485
    %3668 = vmatprep.subr.mxu0 0.0
    %3669 = vmatpush1.msra.mxu0 %v3486
    %3670 = vmatprep.subr.mxu0 0.0
    %3671 = vmatpush1.msra.mxu0 %v3487
    %3672 = vmatprep.subr.mxu0 0.0
    %3673 = vmatpush1.msra.mxu0 %v3488
    %3674 = vmatprep.subr.mxu0 0.0
    %3675 = vmatpush1.msra.mxu0 %v3489
    %3676 = vmatprep.subr.mxu0 0.0
    %3677 = vmatpush1.msra.mxu0 %v3490
    %3678 = vmatprep.subr.mxu0 0.0
    %3679 = vmatpush1.msra.mxu0 %v3491
    %3680 = vmatprep.subr.mxu0 0.0
    %3681 = vmatpush1.msra.mxu0 %v3492
    %3682 = vmatprep.subr.mxu0 0.0
    %3683 = vmatpush1.msra.mxu0 %v3493
    %3684 = vmatprep.subr.mxu0 0.0
    %3685 = vmatpush1.msra.mxu0 %v3494
    %3686 = vmatprep.subr.mxu0 0.0
    %3687 = vmatpush1.msra.mxu0 %v3495
    %3688 = vmatprep.subr.mxu0 0.0
    %3689 = vmatpush1.msra.mxu0 %v3496
    %3690 = vmatprep.subr.mxu0 0.0
    %3691 = vmatpush1.msra.mxu0 %v3497
    %3692 = vmatprep.subr.mxu0 0.0
    %3693 = vmatpush1.msra.mxu0 %v3498
    %3694 = vmatprep.subr.mxu0 0.0
    %3695 = vmatpush1.msra.mxu0 %v3499
    %3696 = vmatprep.subr.mxu0 0.0
    %3697 = vmatpush1.msra.mxu0 %v3500
    %3698 = vmatprep.subr.mxu0 0.0
    %3699 = vmatpush1.msra.mxu0 %v3501
    %3700 = vmatprep.subr.mxu0 0.0
    %3701 = vmatpush1.msra.mxu0 %v3502
    %3702 = vmatprep.subr.mxu0 0.0
    %3703 = vmatpush1.msra.mxu0 %v3503
    %3704 = vmatprep.subr.mxu0 0.0
    %3705 = vmatpush1.msra.mxu0 %v3504
    %3706 = vmatprep.subr.mxu0 0.0
    %3707 = vmatpush1.msra.mxu0 %v3505
    %3708 = vmatprep.subr.mxu0 0.0
    %3709 = vmatpush1.msra.mxu0 %v3506
    %3710 = vmatprep.mubr.f32.mxu0 %v3429
    %3711 = vmatmul.mubr.f32.gmra.mrb[0].mxu0 %v3428
    %v3712 = vpop.f32.mrb[0].mxu0
    %v3713 = vadd.f32 %v3638, %v3712
    %v3714 = vpop.f32.mrb[0].mxu0
    %3715 = vmatprep.mubr.f32.mxu0 %v3437
    %3716 = vmatmul.mubr.f32.gmra.mrb[0].mxu0 %v3436
    %v3717 = vpop.f32.mrb[0].mxu0
    %v3718 = vadd.f32 %v3643, %v3717
    %v3719 = vpop.f32.mrb[0].mxu0
    %3720 = vdwg.mxu0
    %3721 = vmatprep.subr.mxu0 0.0
    %3722 = vmatpush1.msra.mxu0 %v3507
    %3723 = vmatprep.subr.mxu0 0.0
    %3724 = vmatpush1.msra.mxu0 %v3508
    %3725 = vmatprep.subr.mxu0 0.0
    %3726 = vmatpush1.msra.mxu0 %v3509
    %3727 = vmatprep.subr.mxu0 0.0
    %3728 = vmatpush1.msra.mxu0 %v3510
    %3729 = vmatprep.subr.mxu0 0.0
    %3730 = vmatpush1.msra.mxu0 %v3511
    %3731 = vmatprep.subr.mxu0 0.0
    %3732 = vmatpush1.msra.mxu0 %v3512
    %3733 = vmatprep.subr.mxu0 0.0
    %3734 = vmatpush1.msra.mxu0 %v3513
    %3735 = vmatprep.subr.mxu0 0.0
    %3736 = vmatpush1.msra.mxu0 %v3514
    %3737 = vmatprep.subr.mxu0 0.0
    %3738 = vmatpush1.msra.mxu0 %v3515
    %3739 = vmatprep.subr.mxu0 0.0
    %3740 = vmatpush1.msra.mxu0 %v3516
    %3741 = vmatprep.subr.mxu0 0.0
    %3742 = vmatpush1.msra.mxu0 %v3517
    %3743 = vmatprep.subr.mxu0 0.0
    %3744 = vmatpush1.msra.mxu0 %v3518
    %3745 = vmatprep.subr.mxu0 0.0
    %3746 = vmatpush1.msra.mxu0 %v3519
    %3747 = vmatprep.subr.mxu0 0.0
    %3748 = vmatpush1.msra.mxu0 %v3520
    %3749 = vmatprep.subr.mxu0 0.0
    %3750 = vmatpush1.msra.mxu0 %v3521
    %3751 = vmatprep.subr.mxu0 0.0
    %3752 = vmatpush1.msra.mxu0 %v3522
    %3753 = vmatprep.subr.mxu0 0.0
    %3754 = vmatpush1.msra.mxu0 %v3523
    %3755 = vmatprep.subr.mxu0 0.0
    %3756 = vmatpush1.msra.mxu0 %v3524
    %3757 = vmatprep.subr.mxu0 0.0
    %3758 = vmatpush1.msra.mxu0 %v3525
    %3759 = vmatprep.subr.mxu0 0.0
    %3760 = vmatpush1.msra.mxu0 %v3526
    %3761 = vmatprep.subr.mxu0 0.0
    %3762 = vmatpush1.msra.mxu0 %v3527
    %3763 = vmatprep.subr.mxu0 0.0
    %3764 = vmatpush1.msra.mxu0 %v3528
    %3765 = vmatprep.subr.mxu0 0.0
    %3766 = vmatpush1.msra.mxu0 %v3529
    %3767 = vmatprep.subr.mxu0 0.0
    %3768 = vmatpush1.msra.mxu0 %v3530
    %3769 = vmatprep.subr.mxu0 0.0
    %3770 = vmatpush1.msra.mxu0 %v3531
    %3771 = vmatprep.subr.mxu0 0.0
    %3772 = vmatpush1.msra.mxu0 %v3532
    %3773 = vmatprep.subr.mxu0 0.0
    %3774 = vmatpush1.msra.mxu0 %v3533
    %3775 = vmatprep.subr.mxu0 0.0
    %3776 = vmatpush1.msra.mxu0 %v3534
    %3777 = vmatprep.subr.mxu0 0.0
    %3778 = vmatpush1.msra.mxu0 %v3535
    %3779 = vmatprep.subr.mxu0 0.0
    %3780 = vmatpush1.msra.mxu0 %v3536
    %3781 = vmatprep.subr.mxu0 0.0
    %3782 = vmatpush1.msra.mxu0 %v3537
    %3783 = vmatprep.subr.mxu0 0.0
    %3784 = vmatpush1.msra.mxu0 %v3538
    %3785 = vmatprep.mubr.f32.mxu0 %v3431
    %3786 = vmatmul.mubr.f32.gmra.mrb[0].mxu0 %v3430
    %v3787 = vpop.f32.mrb[0].mxu0
    %v3788 = vadd.f32 %v3713, %v3787
    %v3789 = vpop.f32.mrb[0].mxu0
    %3790 = vmatprep.mubr.f32.mxu0 %v3439
    %3791 = vmatmul.mubr.f32.gmra.mrb[0].mxu0 %v3438
    %v3792 = vpop.f32.mrb[0].mxu0
    %v3793 = vadd.f32 %v3718, %v3792
    %v3794 = vpop.f32.mrb[0].mxu0
    %3795 = vdwg.mxu0
    %3796 = vmatprep.subr.mxu0 0.0
    %3797 = vmatpush1.msra.mxu0 %v3539
    %3798 = vmatprep.subr.mxu0 0.0
    %3799 = vmatpush1.msra.mxu0 %v3540
    %3800 = vmatprep.subr.mxu0 0.0
    %3801 = vmatpush1.msra.mxu0 %v3541
    %3802 = vmatprep.subr.mxu0 0.0
    %3803 = vmatpush1.msra.mxu0 %v3542
    %3804 = vmatprep.subr.mxu0 0.0
    %3805 = vmatpush1.msra.mxu0 %v3543
    %3806 = vmatprep.subr.mxu0 0.0
    %3807 = vmatpush1.msra.mxu0 %v3544
    %3808 = vmatprep.subr.mxu0 0.0
    %3809 = vmatpush1.msra.mxu0 %v3545
    %3810 = vmatprep.subr.mxu0 0.0
    %3811 = vmatpush1.msra.mxu0 %v3546
    %3812 = vmatprep.subr.mxu0 0.0
    %3813 = vmatpush1.msra.mxu0 %v3547
    %3814 = vmatprep.subr.mxu0 0.0
    %3815 = vmatpush1.msra.mxu0 %v3548
    %3816 = vmatprep.subr.mxu0 0.0
    %3817 = vmatpush1.msra.mxu0 %v3549
    %3818 = vmatprep.subr.mxu0 0.0
    %3819 = vmatpush1.msra.mxu0 %v3550
    %3820 = vmatprep.subr.mxu0 0.0
    %3821 = vmatpush1.msra.mxu0 %v3551
    %3822 = vmatprep.subr.mxu0 0.0
    %3823 = vmatpush1.msra.mxu0 %v3552
    %3824 = vmatprep.subr.mxu0 0.0
    %3825 = vmatpush1.msra.mxu0 %v3553
    %3826 = vmatprep.subr.mxu0 0.0
    %3827 = vmatpush1.msra.mxu0 %v3554
    %3828 = vmatprep.subr.mxu0 0.0
    %3829 = vmatpush1.msra.mxu0 %v3555
    %3830 = vmatprep.subr.mxu0 0.0
    %3831 = vmatpush1.msra.mxu0 %v3556
    %3832 = vmatprep.subr.mxu0 0.0
    %3833 = vmatpush1.msra.mxu0 %v3557
    %3834 = vmatprep.subr.mxu0 0.0
    %3835 = vmatpush1.msra.mxu0 %v3558
    %3836 = vmatprep.subr.mxu0 0.0
    %3837 = vmatpush1.msra.mxu0 %v3559
    %3838 = vmatprep.subr.mxu0 0.0
    %3839 = vmatpush1.msra.mxu0 %v3560
    %3840 = vmatprep.subr.mxu0 0.0
    %3841 = vmatpush1.msra.mxu0 %v3561
    %3842 = vmatprep.subr.mxu0 0.0
    %3843 = vmatpush1.msra.mxu0 %v3562
    %3844 = vmatprep.subr.mxu0 0.0
    %3845 = vmatpush1.msra.mxu0 %v3563
    %3846 = vmatprep.subr.mxu0 0.0
    %3847 = vmatpush1.msra.mxu0 %v3564
    %3848 = vmatprep.subr.mxu0 0.0
    %3849 = vmatpush1.msra.mxu0 %v3565
    %3850 = vmatprep.subr.mxu0 0.0
    %3851 = vmatpush1.msra.mxu0 %v3566
    %3852 = vmatprep.subr.mxu0 0.0
    %3853 = vmatpush1.msra.mxu0 %v3567
    %3854 = vmatprep.subr.mxu0 0.0
    %3855 = vmatpush1.msra.mxu0 %v3568
    %3856 = vmatprep.subr.mxu0 0.0
    %3857 = vmatpush1.msra.mxu0 %v3569
    %3858 = vmatprep.subr.mxu0 0.0
    %3859 = vmatpush1.msra.mxu0 %v3570
    %3860 = vmatprep.mubr.f32.mxu0 %v3433
    %3861 = vmatmul.mubr.f32.gmra.mrb[0].mxu0 %v3432
    %v3862 = vpop.f32.mrb[0].mxu0
    %v3863 = vadd.f32 %v3788, %v3862
    %v3864 = vpop.f32.mrb[0].mxu0
    %3865 = vmatprep.mubr.f32.mxu0 %v3441
    %3866 = vmatmul.mubr.f32.gmra.mrb[0].mxu0 %v3440
    %v3867 = vpop.f32.mrb[0].mxu0
    %v3868 = vadd.f32 %v3793, %v3867
    %v3869 = vpop.f32.mrb[0].mxu0
    %3870 = vdwg.mxu0
    %v3871 = vadd.f32 %v2974, %v3863
    %v3872 = vadd.f32 %v2975, %v3868
    %s3873 = scalar_lea.vmem %s14, 1
    %v3874 = vld [vmem:[%s3873] sm:$0x1]
    %v3876 = vlaneseq
    %v3877 = vshrl.u32 %v3876, 7
    %v3878 = vsub.s32 0, %v3877
    %v3879 = vrot.slane %v3874, %v3878
    %v3881 = vadd.f32 %v3871, %v3879
    %v3882 = vadd.f32 %v3872, %v3879
    %v3883 = vld [vmem:[%s15] sm:$0x1]
    %v3884 = vld [vmem:[%s16] sm:$0x1]
    %v3885 = vsel %vm75, %v3881, 0.0
    %3886 = vadd.xlane.f32.xlu0 %v3885
    %v3887 = vpop.xlane.xlu0 %3886
    %v3888 = vsel %vm75, %v3882, 0.0
    %3889 = vadd.xlane.f32.xlu0 %v3888
    %v3890 = vpop.xlane.xlu0 %3889
    %v3891 = vmul.f32 %v3887, %v82
    %v3892 = vmul.f32 %v3890, %v82
    %v3893 = vsub.f32 %v3881, %v3891
    %v3894 = vsub.f32 %v3882, %v3892
    %v3895 = vmul.f32 %v3893, %v3893
    %v3896 = vmul.f32 %v3894, %v3894
    %v3897 = vsel %vm75, %v3895, 0.0
    %3898 = vadd.xlane.f32.xlu0 %v3897
    %v3899 = vpop.xlane.xlu0 %3898
    %v3900 = vsel %vm75, %v3896, 0.0
    %3901 = vadd.xlane.f32.xlu0 %v3900
    %v3902 = vpop.xlane.xlu0 %3901
    %v3903 = vmul.f32 %v3899, 0.032258064
    %v3904 = vmul.f32 %v3902, 0.032258064
    %v3905 = vrsqrt.pop %v3903
    %v3906 = vmul.f32 %v3903, %v3905
    %vm3907 = vcmp.eq.f32.partialorder %v3903, inf
    %v3908 = vsel %vm3907, %v3903, %v3906
    %vm3909 = vcmp.eq.f32.partialorder %v3903, 0.0
    %v3910 = vand.u32 %v3903, 2147483648
    %v3911 = vsel %vm3909, %v3910, %v3908
    %v3912 = vrsqrt.pop %v3904
    %v3913 = vmul.f32 %v3904, %v3912
    %vm3914 = vcmp.eq.f32.partialorder %v3904, inf
    %v3915 = vsel %vm3914, %v3904, %v3913
    %vm3916 = vcmp.eq.f32.partialorder %v3904, 0.0
    %v3917 = vand.u32 %v3904, 2147483648
    %v3918 = vsel %vm3916, %v3917, %v3915
    %v3920 = vlaneseq
    %v3921 = vshrl.u32 %v3920, 7
    %v3922 = vsub.s32 0, %v3921
    %v3923 = vrot.slane %v3883, %v3922
    %v3925 = vmul.f32 %v3923, %v3893
    %v3926 = vmul.f32 %v3923, %v3894
    %v3927 = vadd.f32 %v3911, 1e-06
    %v3928 = vadd.f32 %v3918, 1e-06
    %v3929 = vrcp.pop %v3927
    %v3930 = vmul.f32 %v3925, %v3929
    %v3931 = vrcp.pop %v3928
    %v3932 = vmul.f32 %v3926, %v3931
    %v3934 = vlaneseq
    %v3935 = vshrl.u32 %v3934, 7
    %v3936 = vsub.s32 0, %v3935
    %v3937 = vrot.slane %v3884, %v3936
    %v3939 = vadd.f32 %v3930, %v3937
    %v3940 = vadd.f32 %v3932, %v3937
    %3941 = vst.msk [vmem:[#allocation2] sm:$0xff] %vm75, %v3939
    %3942 = vst.msk [vmem:[#allocation2 + $0x8] sm:$0xff] %vm75, %v3940
    // Predicated region
    $region70: #{tpu_custom_call.1} parent=1 // pred_check
      _
    $region71: #{tpu_custom_call.1} parent=1 // pred_check_branch
      %3944 = sbr.rel (0) target = $region73
    $region72: #{tpu_custom_call.1} parent=1 // pred_region
      %s3946 = ssub.s32 256, 256
      %3947 = vsyncadd [#allocation3], %s3946
      %s3948 = sshll.u32 [#allocation2], 4
      %s3949 = int_to_ptr.vmem [resolvable:$true] %s3948
      %3954 = dma.vmem_to_hbm [thread:$0]  %s3949, 256, %s17, [#allocation3], 128, 128, 8
    $region73: #{tpu_custom_call.1} parent=1 // pred_fallthru
      _
    // Predicated region
    $region74: #{tpu_custom_call.1} parent=1 // pred_check
      _
    $region75: #{tpu_custom_call.1} parent=1 // pred_check_branch
      %3956 = sbr.rel (0) target = $region77
    $region76: #{tpu_custom_call.1} parent=1 // pred_region
      %3957 = dma.done [#allocation3], 256
    $region77: #{tpu_custom_call.1} parent=1 // pred_fallthru
      _
    %3958 = vsyncpa [#allocation3], 1

</llo_original>
